<compile_context>
chip_gen: v6e
topology: v6e:2x2x1
jax: 0.10.0
libtpu: 0.0.40
codegen_flags: <defaults>
</compile_context>

<pallas_src>
import functools

import jax
import jax.numpy as jnp
from jax import lax
from jax.experimental import pallas as pl
from jax.experimental.pallas import tpu as pltpu


# ----------------------------------------------------------------------------
# Hardware-aware helpers
# ----------------------------------------------------------------------------
@functools.lru_cache(maxsize=None)
def _vmem_limit_bytes():
    """Generation-aware scoped-VMEM limit (~75% of physical capacity)."""
    default = 48 * 1024 * 1024  # safe on v5e/v6e (128 MiB) and v7x (64 MiB)
    try:
        cap = getattr(pltpu.get_tpu_info(), "vmem_capacity_bytes", None)
        if cap:
            return int(cap) * 3 // 4
    except Exception:
        pass
    return default


@functools.lru_cache(maxsize=None)
def _is_dual_tensorcore():
    """True on chips with two TensorCores per chip (v7x)."""
    try:
        return "v7" in jax.devices()[0].device_kind.lower()
    except Exception:
        return False


def _beta_k_split(num_topics):
    """Topic-row split for the beta kernels (uses both v7x TensorCores)."""
    return 2 if (_is_dual_tensorcore() and num_topics % 16 == 0) else 1


def _round_up(n, q):
    return ((n + q - 1) // q) * q


def _cdiv(a, b):
    return (a + b - 1) // b


def _tile_and_pad(n, target, quantum):
    """Pick a tile size (multiple of `quantum`) near `target`.

    Prefers an exact divisor of n (no padding, no host copies).  Otherwise
    returns a balanced cdiv tiling and the zero-padded extent it needs.
    """
    n = int(n)
    n_q = _round_up(n, quantum)
    tgt = max(quantum, min(_round_up(int(target), quantum), n_q))
    t = tgt
    while t >= max(quantum, tgt // 2):
        if n % t == 0:
            return t, n
        t -= quantum
    num = _cdiv(n_q, tgt)
    tile = _round_up(_cdiv(n_q, num), quantum)
    return tile, num * tile


def _pad2d(x, rows, cols):
    r, c = x.shape
    if (r, c) == (rows, cols):
        return x
    return jnp.pad(x, ((0, rows - r), (0, cols - c)))


# ----------------------------------------------------------------------------
# Kernels
# ----------------------------------------------------------------------------
def _encoder_kernel(bows_ref, w1_ref, b1_ref, w2_ref, b2_ref, wh_ref, bh_ref,
                    theta_ref, kl_ref, acc_ref, *, num_topics):
    """q_theta MLP (first layer streamed over V) -> fused mu/logsigma heads ->
    per-sample KL and softmax(theta)."""
    v = pl.program_id(1)
    nv = pl.num_programs(1)

    @pl.when(v == 0)
    def _():
        acc_ref[...] = jnp.zeros_like(acc_ref)

    # Streamed contraction over the (padded) vocabulary axis; bf16 MXU, f32 acc.
    acc_ref[...] += jnp.dot(bows_ref[...].astype(jnp.bfloat16), w1_ref[...],
                            preferred_element_type=jnp.float32)

    @pl.when(v == nv - 1)
    def _():
        h1 = jnp.maximum(acc_ref[...] + b1_ref[...], 0.0)          # theta_act = ReLU
        h2 = jnp.dot(h1.astype(jnp.bfloat16), w2_ref[...],
                     preferred_element_type=jnp.float32) + b2_ref[...]
        h2 = jnp.maximum(h2, 0.0)
        # enc_drop dropout: identity in eval mode (deterministic forward).
        # Fused mu / logsigma heads: one (tb,H)x(H,2K) matmul, then split.
        heads = jnp.dot(h2.astype(jnp.bfloat16), wh_ref[...],
                        preferred_element_type=jnp.float32) + bh_ref[...]
        mu = heads[:, :num_topics]
        # reference: logsigma_theta = 2 * logsigma_q_theta(q_theta)
        ls = 2.0 * heads[:, num_topics:]
        # kl per sample: -0.5 * sum(1 + logsigma - mu^2 - exp(logsigma))
        kl_ref[...] = -0.5 * jnp.sum(1.0 + ls - mu * mu - jnp.exp(ls),
                                     axis=-1, keepdims=True)        # (tb, 1)
        # reparameterize (eval) -> mu ; theta = softmax(mu, dim=-1) (exact)
        m = jnp.max(mu, axis=-1, keepdims=True)
        e = jnp.exp(mu - m)
        theta_ref[...] = e / jnp.sum(e, axis=-1, keepdims=True)     # (tb, K)


def _beta_stats_kernel(emb_ref, aw_ref, m_ref, s_ref, *, v_actual, v_blk):
    """Pass 1: per-topic running max / sum-exp of the topic-word logits over V.

    aw is in PyTorch (out,in) layout (K, E), so logits_kv = aw @ emb_tile.T
    (contract the embedding axis); stats accumulate directly in the
    VMEM-resident output blocks (constant index maps over the V axis).
    """
    v = pl.program_id(1)

    @pl.when(v == 0)
    def _():
        m_ref[...] = jnp.full_like(m_ref, -1e30)
        s_ref[...] = jnp.zeros_like(s_ref)

    logits = lax.dot_general(aw_ref[...], emb_ref[...],
                             dimension_numbers=(((1,), (1,)), ((), ())),
                             preferred_element_type=jnp.float32)     # (Kb, tv)
    if v_actual % v_blk != 0:  # mask padded vocabulary columns (static check)
        col = v * v_blk + lax.broadcasted_iota(jnp.int32, logits.shape, 1)
        logits = jnp.where(col < v_actual, logits, -1e30)

    tile_max = jnp.max(logits, axis=-1, keepdims=True)               # (Kb, 1)
    m_prev = m_ref[...]
    m_new = jnp.maximum(m_prev, tile_max)
    s_ref[...] = (s_ref[...] * jnp.exp(m_prev - m_new)
                  + jnp.sum(jnp.exp(logits - m_new), axis=-1, keepdims=True))
    m_ref[...] = m_new


def _beta_norm_kernel(emb_ref, aw_ref, m_ref, s_ref, beta_ref, *, v_actual, v_blk):
    """Pass 2: pre-normalized bf16 beta tile in lane-dense (K, V) layout."""
    v = pl.program_id(1)

    logits = lax.dot_general(aw_ref[...], emb_ref[...],
                             dimension_numbers=(((1,), (1,)), ((), ())),
                             preferred_element_type=jnp.float32)     # (Kb, tv)
    lse = m_ref[...] + jnp.log(s_ref[...])                           # (Kb, 1)
    beta = jnp.exp(logits - lse)
    if v_actual % v_blk != 0:
        col = v * v_blk + lax.broadcasted_iota(jnp.int32, beta.shape, 1)
        beta = jnp.where(col < v_actual, beta, 0.0)
    beta_ref[...] = beta.astype(beta_ref.dtype)


def _decode_nll_kernel(theta_ref, beta_ref, raw_ref, loss_ref):
    """preds = theta @ beta (beta already normalized, bf16); NLL accumulated
    across V tiles directly in the VMEM-resident loss block."""
    v = pl.program_id(1)

    @pl.when(v == 0)
    def _():
        loss_ref[...] = jnp.zeros_like(loss_ref)

    preds = jnp.dot(theta_ref[...], beta_ref[...].astype(jnp.float32),
                    preferred_element_type=jnp.float32)              # (tb, tv)
    # reference NLL: -(log(preds) * raw).sum(-1); the floor only guards padded
    # columns (raw == 0 there) and f32 underflow -- reference would give
    # -inf/NaN for raw > 0 and preds == 0.
    loss_ref[...] = loss_ref[...] - jnp.sum(
        raw_ref[...].astype(jnp.float32) * jnp.log(jnp.maximum(preds, 1e-30)),
        axis=-1, keepdims=True)


# ----------------------------------------------------------------------------
# pallas_call wrappers
# ----------------------------------------------------------------------------
def encode(bows, w1, b1, w2, b2, wmu, bmu, wls, bls, *, v_tile=2048, b_tile=512):
    """Returns (theta, kl) with the padded batch extent (caller slices to B)."""
    B, V = bows.shape
    H1 = w1.shape[1]
    H = w2.shape[1]
    K = wmu.shape[1]

    tb, B_pad = _tile_and_pad(B, b_tile, 8)
    tv, V_pad = _tile_and_pad(V, v_tile, 128)
    nb, nv = B_pad // tb, V_pad // tv

    # Zero-pad activations / first-layer weight only when needed.  (For best
    # throughput, feed pre-aligned, pre-cast bf16 data / params so no host
    # copies happen inside the step.)
    bows = _pad2d(bows, B_pad, V_pad)
    w1 = _pad2d(w1, V_pad, H1)
    # Fused mu/logsigma heads: one (H, 2K) weight, one matmul in the kernel.
    w_heads = jnp.concatenate([wmu, wls], axis=1)
    b_heads = jnp.concatenate([bmu, bls], axis=1)

    flops = 2 * B_pad * V_pad * H1 + 2 * B_pad * H1 * H + 2 * B_pad * H * 2 * K
    bytes_acc = (B_pad * V_pad * bows.dtype.itemsize
                 + nb * V_pad * H1 * w1.dtype.itemsize
                 + H1 * H * w2.dtype.itemsize
                 + H * 2 * K * w_heads.dtype.itemsize
                 + B_pad * (K + 1) * 4)

    grid_spec = pltpu.PrefetchScalarGridSpec(
        num_scalar_prefetch=0,
        grid=(nb, nv),
        in_specs=[
            pl.BlockSpec((tb, tv), lambda b, v: (b, v)),     # bows (streamed)
            pl.BlockSpec((tv, H1), lambda b, v: (v, 0)),     # w1   (streamed)
            pl.BlockSpec((1, H1), lambda b, v: (0, 0)),      # b1
            pl.BlockSpec((H1, H), lambda b, v: (0, 0)),      # w2
            pl.BlockSpec((1, H), lambda b, v: (0, 0)),       # b2
            pl.BlockSpec((H, 2 * K), lambda b, v: (0, 0)),   # fused heads W
            pl.BlockSpec((1, 2 * K), lambda b, v: (0, 0)),   # fused heads b
        ],
        out_specs=(
            pl.BlockSpec((tb, K), lambda b, v: (b, 0)),      # theta
            pl.BlockSpec((tb, 1), lambda b, v: (b, 0)),      # kl per sample
        ),
        scratch_shapes=[pltpu.VMEM((tb, H1), jnp.float32)],
    )
    theta, kl = pl.pallas_call(
        functools.partial(_encoder_kernel, num_topics=K),
        out_shape=(jax.ShapeDtypeStruct((B_pad, K), jnp.float32),
                   jax.ShapeDtypeStruct((B_pad, 1), jnp.float32)),
        grid_spec=grid_spec,
        compiler_params=pltpu.CompilerParams(
            dimension_semantics=("parallel", "arbitrary"),
            vmem_limit_bytes=_vmem_limit_bytes()),
        cost_estimate=pl.CostEstimate(flops=int(flops),
                                      transcendentals=int(2 * B_pad * K),
                                      bytes_accessed=int(bytes_acc)),
    )(bows, w1, b1, w2, b2, w_heads, b_heads)
    return theta, kl


def beta_softmax(emb, alpha_w, *, v_tile=2048):
    """Pre-normalized topic-word matrix beta in bf16, lane-dense (K, V_pad)."""
    V, E = emb.shape
    K = alpha_w.shape[0]
    tv, V_pad = _tile_and_pad(V, v_tile, 128)
    nv = V_pad // tv
    nk = _beta_k_split(K)           # 2 on v7x (both TensorCores), else 1
    kb = K // nk

    emb = _pad2d(emb, V_pad, E)
    vmem = _vmem_limit_bytes()

    # Pass 1: per-topic running max / sum-exp over the (real) vocabulary.
    m, s = pl.pallas_call(
        functools.partial(_beta_stats_kernel, v_actual=V, v_blk=tv),
        out_shape=(jax.ShapeDtypeStruct((K, 1), jnp.float32),
                   jax.ShapeDtypeStruct((K, 1), jnp.float32)),
        grid_spec=pltpu.PrefetchScalarGridSpec(
            num_scalar_prefetch=0,
            grid=(nk, nv),
            in_specs=[pl.BlockSpec((tv, E), lambda k, v: (v, 0)),
                      pl.BlockSpec((kb, E), lambda k, v: (k, 0))],
            out_specs=(pl.BlockSpec((kb, 1), lambda k, v: (k, 0)),
                       pl.BlockSpec((kb, 1), lambda k, v: (k, 0)))),
        compiler_params=pltpu.CompilerParams(
            dimension_semantics=("parallel", "arbitrary"),
            vmem_limit_bytes=vmem),
    )(emb, alpha_w)

    # Pass 2: recompute the (cheap) logits tile and emit normalized bf16 beta.
    beta = pl.pallas_call(
        functools.partial(_beta_norm_kernel, v_actual=V, v_blk=tv),
        out_shape=jax.ShapeDtypeStruct((K, V_pad), jnp.bfloat16),
        grid_spec=pltpu.PrefetchScalarGridSpec(
            num_scalar_prefetch=0,
            grid=(nk, nv),
            in_specs=[pl.BlockSpec((tv, E), lambda k, v: (v, 0)),
                      pl.BlockSpec((kb, E), lambda k, v: (k, 0)),
                      pl.BlockSpec((kb, 1), lambda k, v: (k, 0)),
                      pl.BlockSpec((kb, 1), lambda k, v: (k, 0))],
            out_specs=pl.BlockSpec((kb, tv), lambda k, v: (k, v))),
        compiler_params=pltpu.CompilerParams(
            dimension_semantics=("parallel", "parallel"),
            vmem_limit_bytes=vmem),
    )(emb, alpha_w, m, s)
    return beta


def decode_nll(theta, beta, raw, *, v_tile=2048, b_tile=512):
    """Fused theta @ beta + NLL; per-sample loss (B_pad, 1)."""
    B_t, K = theta.shape
    B, V = raw.shape

    tb, B_pad = _tile_and_pad(B_t, b_tile, 8)
    tv, V_pad = _tile_and_pad(V, v_tile, 128)
    assert beta.shape[1] == V_pad, "beta must be built with the same v_tile"
    nb, nv = B_pad // tb, V_pad // tv

    theta = _pad2d(theta, B_pad, K)
    raw = _pad2d(raw, B_pad, V_pad)

    flops = 2 * B_pad * K * V_pad
    bytes_acc = (nb * K * V_pad * beta.dtype.itemsize
                 + B_pad * V_pad * raw.dtype.itemsize
                 + nv * B_pad * K * 4 + B_pad * 4)

    grid_spec = pltpu.PrefetchScalarGridSpec(
        num_scalar_prefetch=0,
        grid=(nb, nv),
        in_specs=[
            pl.BlockSpec((tb, K), lambda b, v: (b, 0)),      # theta
            pl.BlockSpec((K, tv), lambda b, v: (0, v)),      # beta (bf16, streamed)
            pl.BlockSpec((tb, tv), lambda b, v: (b, v)),     # raw counts
        ],
        out_specs=pl.BlockSpec((tb, 1), lambda b, v: (b, 0)),
    )
    loss = pl.pallas_call(
        _decode_nll_kernel,
        out_shape=jax.ShapeDtypeStruct((B_pad, 1), jnp.float32),
        grid_spec=grid_spec,
        compiler_params=pltpu.CompilerParams(
            dimension_semantics=("parallel", "arbitrary"),
            vmem_limit_bytes=_vmem_limit_bytes()),
        cost_estimate=pl.CostEstimate(flops=int(flops),
                                      transcendentals=int(B_pad * V_pad),
                                      bytes_accessed=int(bytes_acc)),
    )(theta, beta, raw)
    return loss


# ----------------------------------------------------------------------------
# GNN_ETM forward (eval mode, use_gnn=False)
# ----------------------------------------------------------------------------
def gnn_etm_forward(params, Gene, Gene_normalized, Peak, Peak_normalized,
                    aggregate=True, *, v_tile=2048, b_tile=512):
    p = params
    B = Gene.shape[0]

    # get_theta (per-sample KL; batch means taken here as in the reference)
    theta_d, kl_d = encode(Gene_normalized,
                           p["qg_w1"], p["qg_b1"], p["qg_w2"], p["qg_b2"],
                           p["mu_w"], p["mu_b"], p["ls_w"], p["ls_b"],
                           v_tile=v_tile, b_tile=b_tile)
    theta_j, kl_j = encode(Peak_normalized,
                           p["qp_w1"], p["qp_b1"], p["qp_w2"], p["qp_b2"],
                           p["mu_w"], p["mu_b"], p["ls_w"], p["ls_b"],
                           v_tile=v_tile, b_tile=b_tile)
    kld_theta = jnp.mean(kl_d[:B, 0]) + jnp.mean(kl_j[:B, 0])

    # get_beta (use_gnn=False branch): pre-normalized bf16 beta in (K, V)
    beta_gene = beta_softmax(p["rho"], p["alphas_w"], v_tile=v_tile)
    beta_peak = beta_softmax(p["eta"], p["alphas_star_w"], v_tile=v_tile)

    # decode + NLL reconstruction loss
    recon_gene = decode_nll(theta_d, beta_gene, Gene, v_tile=v_tile, b_tile=b_tile)
    recon_peak = decode_nll(theta_j, beta_peak, Peak, v_tile=v_tile, b_tile=b_tile)
    recon_loss = recon_gene[:B, 0] + recon_peak[:B, 0]
    if aggregate:
        recon_loss = jnp.mean(recon_loss)
    return recon_loss, kld_theta


# TODO(synk): the optional use_gnn=True branch calls an external gnn_model
# (self.conv.get_embedding()); it is not part of this eval forward and is omitted.


# ----------------------------------------------------------------------------
# Deterministic parameter construction (shapes follow GNN_ETM.__init__)
# ----------------------------------------------------------------------------
def make_params(key, num_topics, num_gene, num_peak,
                t_hidden, t_hidden_peak, rho_size, eta_size,
                weight_dtype=jnp.bfloat16):
    keys = jax.random.split(key, 16)
    w = lambda k, shp: (0.05 * jax.random.normal(k, shp)).astype(weight_dtype)
    b = lambda k, shp: (0.05 * jax.random.normal(k, shp)).astype(jnp.float32)
    return {
        # rho / eta embeddings (streamed -> bf16)
        "rho": w(keys[0], (num_gene, rho_size)),
        "eta": w(keys[1], (num_peak, eta_size)),
        # alphas (no bias), kept in PyTorch nn.Linear (out, in) layout
        "alphas_w":      w(keys[2], (num_topics, rho_size)),
        "alphas_star_w": w(keys[3], (num_topics, eta_size)),
        # q_theta_gene: Linear(num_gene, t_hidden) -> act -> Linear(t_hidden, t_hidden) -> act
        "qg_w1": w(keys[4], (num_gene, t_hidden)),
        "qg_b1": b(keys[5], (1, t_hidden)),
        "qg_w2": w(keys[6], (t_hidden, t_hidden)),
        "qg_b2": b(keys[7], (1, t_hidden)),
        # q_theta_peak: Linear(num_peak, t_hidden_peak) -> act -> Linear(t_hidden_peak, t_hidden) -> act
        "qp_w1": w(keys[8], (num_peak, t_hidden_peak)),
        "qp_b1": b(keys[9], (1, t_hidden_peak)),
        "qp_w2": w(keys[10], (t_hidden_peak, t_hidden)),
        "qp_b2": b(keys[11], (1, t_hidden)),
        # mu / logsigma heads (shared across the two modalities, as in the module)
        "mu_w": w(keys[12], (t_hidden, num_topics)),
        "mu_b": b(keys[13], (1, num_topics)),
        "ls_w": w(keys[14], (t_hidden, num_topics)),
        "ls_b": b(keys[15], (1, num_topics)),
    }


if __name__ == "__main__":
    # Small shapes consistent with the module (scaled down from 512).
    B            = 8      # batch
    NUM_TOPICS   = 16
    NUM_GENE     = 200    # deliberately NOT a multiple of 128 -> pad+mask path
    NUM_PEAK     = 384    # multiple of 128 -> exact-divisor path
    T_HIDDEN     = 128    # t_hidden_size
    T_HIDDEN_PK  = 256    # t_hidden_size_peak = 2 * t_hidden_size
    RHO_SIZE     = 128
    ETA_SIZE     = 128

    key = jax.random.PRNGKey(0)
    k_par, k_g, k_p = jax.random.split(key, 3)
    params = make_params(k_par, NUM_TOPICS, NUM_GENE, NUM_PEAK,
                         T_HIDDEN, T_HIDDEN_PK, RHO_SIZE, ETA_SIZE)

    # Synthetic "bag of words" count matrices (non-negative) + row-normalized.
    Gene = jax.random.uniform(k_g, (B, NUM_GENE), dtype=jnp.float32) * 5.0
    Peak = jax.random.uniform(k_p, (B, NUM_PEAK), dtype=jnp.float32) * 5.0
    Gene_normalized = Gene / jnp.sum(Gene, axis=-1, keepdims=True)
    Peak_normalized = Peak / jnp.sum(Peak, axis=-1, keepdims=True)

    # Data-pipeline cast: feed the dominant (B, V) HBM streams to the kernels
    # in bf16 (halves DMA bytes).  Note: bf16 counts lose precision above 256;
    # pass f32 here if exact parity with the f32 reference is required.
    Gene_bf, Peak_bf = Gene.astype(jnp.bfloat16), Peak.astype(jnp.bfloat16)
    Gene_n_bf = Gene_normalized.astype(jnp.bfloat16)
    Peak_n_bf = Peak_normalized.astype(jnp.bfloat16)

    # Small v_tile so the demo exercises the streamed-reduction / multi-tile
    # path; production should use the defaults (v_tile=2048, b_tile=512).
    fwd = jax.jit(lambda p, g, gn, pk, pkn:
                  gnn_etm_forward(p, g, gn, pk, pkn, aggregate=True,
                                  v_tile=128, b_tile=512))
    recon_loss, kld_theta = fwd(params, Gene_bf, Gene_n_bf, Peak_bf, Peak_n_bf)
    jax.block_until_ready((recon_loss, kld_theta))

    assert recon_loss.shape == () and kld_theta.shape == ()
    assert bool(jnp.isfinite(recon_loss)) and bool(jnp.isfinite(kld_theta))
    print("KERNEL_OK")
</pallas_src>

<mosaic_0001>
module attributes {stable_mosaic.version = 11 : i64} {
  func.func @_beta_norm_kernel(%arg0: i32, %arg1: i32, %arg2: memref<128x128xbf16, #tpu.memory_space<vmem>>, %arg3: memref<16x128xbf16, #tpu.memory_space<vmem>>, %arg4: memref<16x1xf32, #tpu.memory_space<vmem>>, %arg5: memref<16x1xf32, #tpu.memory_space<vmem>>, %arg6: memref<16x128xbf16, #tpu.memory_space<vmem>>) attributes {dimension_semantics = [#tpu.dimension_semantics<parallel>, #tpu.dimension_semantics<parallel>], iteration_bounds = array<i64: 1, 2>, scalar_prefetch = 0 : i64, scratch_operands = 0 : i64, tpu.core_type = #tpu.core_type<tc>, window_params = [{transform_indices = @transform_0, window_bounds = array<i64: 128, 128>}, {transform_indices = @transform_1, window_bounds = array<i64: 16, 128>}, {transform_indices = @transform_2, window_bounds = array<i64: 16, 1>}, {transform_indices = @transform_3, window_bounds = array<i64: 16, 1>}, {transform_indices = @transform_4, window_bounds = array<i64: 16, 128>}]} {
    %c0 = arith.constant 0 : index
    %c0_0 = arith.constant 0 : index
    %0 = vector.load %arg3[%c0, %c0_0] : memref<16x128xbf16, #tpu.memory_space<vmem>>, vector<16x128xbf16>
    %c0_1 = arith.constant 0 : index
    %c0_2 = arith.constant 0 : index
    %1 = vector.load %arg2[%c0_1, %c0_2] : memref<128x128xbf16, #tpu.memory_space<vmem>>, vector<128x128xbf16>
    %cst = arith.constant dense<0.000000e+00> : vector<16x128xf32>
    %2 = tpu.matmul %0, %1, %cst {dimension_numbers = #tpu.dot_dimension_numbers<[1], [1], [0], [0], [0, 0, 1, 0], [], []>} : vector<16x128xbf16>, vector<128x128xbf16>, vector<16x128xf32> -> vector<16x128xf32>
    %c0_3 = arith.constant 0 : index
    %c0_4 = arith.constant 0 : index
    %3 = vector.load %arg4[%c0_3, %c0_4] : memref<16x1xf32, #tpu.memory_space<vmem>>, vector<16x1xf32>
    %c0_5 = arith.constant 0 : index
    %c0_6 = arith.constant 0 : index
    %4 = vector.load %arg5[%c0_5, %c0_6] : memref<16x1xf32, #tpu.memory_space<vmem>>, vector<16x1xf32>
    %5 = math.log %4 : vector<16x1xf32>
    %6 = arith.addf %3, %5 : vector<16x1xf32>
    %7 = vector.broadcast %6 : vector<16x1xf32> to vector<16x128xf32>
    %8 = arith.subf %2, %7 : vector<16x128xf32>
    %9 = math.exp %8 : vector<16x128xf32>
    %c128_i32 = arith.constant 128 : i32
    %10 = arith.muli %arg1, %c128_i32 : i32
    %11 = tpu.iota {dimensions = array<i32: 1>} : vector<16x128xi32>
    %12 = vector.broadcast %10 : i32 to vector<16x128xi32>
    %13 = arith.addi %12, %11 : vector<16x128xi32>
    %c200_i32 = arith.constant 200 : i32
    %14 = vector.broadcast %c200_i32 : i32 to vector<16x128xi32>
    %15 = arith.cmpi slt, %13, %14 : vector<16x128xi32>
    %cst_7 = arith.constant 0.000000e+00 : f32
    %16 = vector.broadcast %cst_7 : f32 to vector<16x128xf32>
    %17 = arith.select %15, %9, %16 : vector<16x128xi1>, vector<16x128xf32>
    %18 = arith.truncf %17 : vector<16x128xf32> to vector<16x128xbf16>
    %c0_8 = arith.constant 0 : index
    %c0_9 = arith.constant 0 : index
    %19 = vector.load %arg6[%c0_8, %c0_9] : memref<16x128xbf16, #tpu.memory_space<vmem>>, vector<16x128xbf16>
    tpu.vector_store %arg6[%c0_8, %c0_9], %18 {strides = array<i32>} : memref<16x128xbf16, #tpu.memory_space<vmem>>, vector<16x128xbf16>,
    return
  }
  func.func @transform_0(%arg0: i32, %arg1: i32) -> (i32, i32) {
    %c0_i32 = arith.constant 0 : i32
    %c0_i32_0 = arith.constant 0 : i32
    return %arg1, %c0_i32 : i32, i32
  }
  func.func @transform_1(%arg0: i32, %arg1: i32) -> (i32, i32) {
    %c0_i32 = arith.constant 0 : i32
    %c0_i32_0 = arith.constant 0 : i32
    return %arg0, %c0_i32 : i32, i32
  }
  func.func @transform_2(%arg0: i32, %arg1: i32) -> (i32, i32) {
    %c0_i32 = arith.constant 0 : i32
    %c0_i32_0 = arith.constant 0 : i32
    return %arg0, %c0_i32 : i32, i32
  }
  func.func @transform_3(%arg0: i32, %arg1: i32) -> (i32, i32) {
    %c0_i32 = arith.constant 0 : i32
    %c0_i32_0 = arith.constant 0 : i32
    return %arg0, %c0_i32 : i32, i32
  }
  func.func @transform_4(%arg0: i32, %arg1: i32) -> (i32, i32) {
    %c0_i32 = arith.constant 0 : i32
    return %arg0, %arg1 : i32, i32
  }
}

module attributes {stable_mosaic.version = 11 : i64} {
  func.func @_beta_stats_kernel(%arg0: i32, %arg1: i32, %arg2: memref<128x128xbf16, #tpu.memory_space<vmem>>, %arg3: memref<16x128xbf16, #tpu.memory_space<vmem>>, %arg4: memref<16x1xf32, #tpu.memory_space<vmem>>, %arg5: memref<16x1xf32, #tpu.memory_space<vmem>>) attributes {dimension_semantics = [#tpu.dimension_semantics<parallel>, #tpu.dimension_semantics<arbitrary>], iteration_bounds = array<i64: 1, 2>, scalar_prefetch = 0 : i64, scratch_operands = 0 : i64, tpu.core_type = #tpu.core_type<tc>, window_params = [{transform_indices = @transform_0, window_bounds = array<i64: 128, 128>}, {transform_indices = @transform_1, window_bounds = array<i64: 16, 128>}, {transform_indices = @transform_2, window_bounds = array<i64: 16, 1>}, {transform_indices = @transform_3, window_bounds = array<i64: 16, 1>}]} {
    %c0_i32 = arith.constant 0 : i32
    %0 = arith.cmpi eq, %arg1, %c0_i32 : i32
    %1 = arith.extui %0 : i1 to i32
    %c0_i32_0 = arith.constant 0 : i32
    %2 = arith.cmpi ne, %1, %c0_i32_0 : i32
    scf.if %2 {
      %cst_15 = arith.constant -1.000000e+30 : f32
      %30 = vector.broadcast %cst_15 : f32 to vector<16x1xf32>
      %c0_16 = arith.constant 0 : index
      %c0_17 = arith.constant 0 : index
      %31 = vector.load %arg4[%c0_16, %c0_17] : memref<16x1xf32, #tpu.memory_space<vmem>>, vector<16x1xf32>
      tpu.vector_store %arg4[%c0_16, %c0_17], %30 {strides = array<i32>} : memref<16x1xf32, #tpu.memory_space<vmem>>, vector<16x1xf32>,
      %cst_18 = arith.constant 0.000000e+00 : f32
      %32 = vector.broadcast %cst_18 : f32 to vector<16x1xf32>
      %c0_19 = arith.constant 0 : index
      %c0_20 = arith.constant 0 : index
      %33 = vector.load %arg5[%c0_19, %c0_20] : memref<16x1xf32, #tpu.memory_space<vmem>>, vector<16x1xf32>
      tpu.vector_store %arg5[%c0_19, %c0_20], %32 {strides = array<i32>} : memref<16x1xf32, #tpu.memory_space<vmem>>, vector<16x1xf32>,
    } else {
    }
    %c0 = arith.constant 0 : index
    %c0_1 = arith.constant 0 : index
    %3 = vector.load %arg3[%c0, %c0_1] : memref<16x128xbf16, #tpu.memory_space<vmem>>, vector<16x128xbf16>
    %c0_2 = arith.constant 0 : index
    %c0_3 = arith.constant 0 : index
    %4 = vector.load %arg2[%c0_2, %c0_3] : memref<128x128xbf16, #tpu.memory_space<vmem>>, vector<128x128xbf16>
    %cst = arith.constant dense<0.000000e+00> : vector<16x128xf32>
    %5 = tpu.matmul %3, %4, %cst {dimension_numbers = #tpu.dot_dimension_numbers<[1], [1], [0], [0], [0, 0, 1, 0], [], []>} : vector<16x128xbf16>, vector<128x128xbf16>, vector<16x128xf32> -> vector<16x128xf32>
    %c128_i32 = arith.constant 128 : i32
    %6 = arith.muli %arg1, %c128_i32 : i32
    %7 = tpu.iota {dimensions = array<i32: 1>} : vector<16x128xi32>
    %8 = vector.broadcast %6 : i32 to vector<16x128xi32>
    %9 = arith.addi %8, %7 : vector<16x128xi32>
    %c200_i32 = arith.constant 200 : i32
    %10 = vector.broadcast %c200_i32 : i32 to vector<16x128xi32>
    %11 = arith.cmpi slt, %9, %10 : vector<16x128xi32>
    %cst_4 = arith.constant -1.000000e+30 : f32
    %12 = vector.broadcast %cst_4 : f32 to vector<16x128xf32>
    %13 = arith.select %11, %5, %12 : vector<16x128xi1>, vector<16x128xf32>
    %cst_5 = arith.constant dense<0xFF800000> : vector<16xf32>
    %14 = vector.multi_reduction <maximumf>, %13, %cst_5 [1] : vector<16x128xf32> to vector<16xf32>
    %15 = vector.shape_cast %14 : vector<16xf32> to vector<16x1xf32>
    %c0_6 = arith.constant 0 : index
    %c0_7 = arith.constant 0 : index
    %16 = vector.load %arg4[%c0_6, %c0_7] : memref<16x1xf32, #tpu.memory_space<vmem>>, vector<16x1xf32>
    %17 = arith.maximumf %16, %15 : vector<16x1xf32>
    %c0_8 = arith.constant 0 : index
    %c0_9 = arith.constant 0 : index
    %18 = vector.load %arg5[%c0_8, %c0_9] : memref<16x1xf32, #tpu.memory_space<vmem>>, vector<16x1xf32>
    %19 = arith.subf %16, %17 : vector<16x1xf32>
    %20 = math.exp %19 : vector<16x1xf32>
    %21 = arith.mulf %18, %20 : vector<16x1xf32>
    %22 = vector.broadcast %17 : vector<16x1xf32> to vector<16x128xf32>
    %23 = arith.subf %13, %22 : vector<16x128xf32>
    %24 = math.exp %23 : vector<16x128xf32>
    %cst_10 = arith.constant dense<0.000000e+00> : vector<16xf32>
    %25 = vector.multi_reduction <add>, %24, %cst_10 [1] : vector<16x128xf32> to vector<16xf32>
    %26 = vector.shape_cast %25 : vector<16xf32> to vector<16x1xf32>
    %27 = arith.addf %21, %26 : vector<16x1xf32>
    %c0_11 = arith.constant 0 : index
    %c0_12 = arith.constant 0 : index
    %28 = vector.load %arg5[%c0_11, %c0_12] : memref<16x1xf32, #tpu.memory_space<vmem>>, vector<16x1xf32>
    tpu.vector_store %arg5[%c0_11, %c0_12], %27 {strides = array<i32>} : memref<16x1xf32, #tpu.memory_space<vmem>>, vector<16x1xf32>,
    %c0_13 = arith.constant 0 : index
    %c0_14 = arith.constant 0 : index
    %29 = vector.load %arg4[%c0_13, %c0_14] : memref<16x1xf32, #tpu.memory_space<vmem>>, vector<16x1xf32>
    tpu.vector_store %arg4[%c0_13, %c0_14], %17 {strides = array<i32>} : memref<16x1xf32, #tpu.memory_space<vmem>>, vector<16x1xf32>,
    return
  }
  func.func @transform_0(%arg0: i32, %arg1: i32) -> (i32, i32) {
    %c0_i32 = arith.constant 0 : i32
    %c0_i32_0 = arith.constant 0 : i32
    return %arg1, %c0_i32 : i32, i32
  }
  func.func @transform_1(%arg0: i32, %arg1: i32) -> (i32, i32) {
    %c0_i32 = arith.constant 0 : i32
    %c0_i32_0 = arith.constant 0 : i32
    return %arg0, %c0_i32 : i32, i32
  }
  func.func @transform_2(%arg0: i32, %arg1: i32) -> (i32, i32) {
    %c0_i32 = arith.constant 0 : i32
    %c0_i32_0 = arith.constant 0 : i32
    return %arg0, %c0_i32 : i32, i32
  }
  func.func @transform_3(%arg0: i32, %arg1: i32) -> (i32, i32) {
    %c0_i32 = arith.constant 0 : i32
    %c0_i32_0 = arith.constant 0 : i32
    return %arg0, %c0_i32 : i32, i32
  }
}

module attributes {stable_mosaic.version = 11 : i64} {
  func.func @_decode_nll_kernel(%arg0: i32, %arg1: i32, %arg2: memref<8x16xf32, #tpu.memory_space<vmem>>, %arg3: memref<16x128xbf16, #tpu.memory_space<vmem>>, %arg4: memref<8x128xbf16, #tpu.memory_space<vmem>>, %arg5: memref<8x1xf32, #tpu.memory_space<vmem>>) attributes {dimension_semantics = [#tpu.dimension_semantics<parallel>, #tpu.dimension_semantics<arbitrary>], iteration_bounds = array<i64: 1, 2>, scalar_prefetch = 0 : i64, scratch_operands = 0 : i64, tpu.core_type = #tpu.core_type<tc>, window_params = [{transform_indices = @transform_0, window_bounds = array<i64: 8, 16>}, {transform_indices = @transform_1, window_bounds = array<i64: 16, 128>}, {transform_indices = @transform_2, window_bounds = array<i64: 8, 128>}, {transform_indices = @transform_3, window_bounds = array<i64: 8, 1>}]} {
    %c0_i32 = arith.constant 0 : i32
    %0 = arith.cmpi eq, %arg1, %c0_i32 : i32
    %1 = arith.extui %0 : i1 to i32
    %c0_i32_0 = arith.constant 0 : i32
    %2 = arith.cmpi ne, %1, %c0_i32_0 : i32
    scf.if %2 {
      %cst_12 = arith.constant 0.000000e+00 : f32
      %18 = vector.broadcast %cst_12 : f32 to vector<8x1xf32>
      %c0_13 = arith.constant 0 : index
      %c0_14 = arith.constant 0 : index
      %19 = vector.load %arg5[%c0_13, %c0_14] : memref<8x1xf32, #tpu.memory_space<vmem>>, vector<8x1xf32>
      tpu.vector_store %arg5[%c0_13, %c0_14], %18 {strides = array<i32>} : memref<8x1xf32, #tpu.memory_space<vmem>>, vector<8x1xf32>,
    } else {
    }
    %c0 = arith.constant 0 : index
    %c0_1 = arith.constant 0 : index
    %3 = vector.load %arg2[%c0, %c0_1] : memref<8x16xf32, #tpu.memory_space<vmem>>, vector<8x16xf32>
    %c0_2 = arith.constant 0 : index
    %c0_3 = arith.constant 0 : index
    %4 = vector.load %arg3[%c0_2, %c0_3] : memref<16x128xbf16, #tpu.memory_space<vmem>>, vector<16x128xbf16>
    %5 = arith.extf %4 : vector<16x128xbf16> to vector<16x128xf32>
    %cst = arith.constant dense<0.000000e+00> : vector<8x128xf32>
    %6 = tpu.matmul %3, %5, %cst {dimension_numbers = #tpu.dot_dimension_numbers<[1], [0], [0], [1], [0, 0, 1, 1], [], []>} : vector<8x16xf32>, vector<16x128xf32>, vector<8x128xf32> -> vector<8x128xf32>
    %c0_4 = arith.constant 0 : index
    %c0_5 = arith.constant 0 : index
    %7 = vector.load %arg5[%c0_4, %c0_5] : memref<8x1xf32, #tpu.memory_space<vmem>>, vector<8x1xf32>
    %c0_6 = arith.constant 0 : index
    %c0_7 = arith.constant 0 : index
    %8 = vector.load %arg4[%c0_6, %c0_7] : memref<8x128xbf16, #tpu.memory_space<vmem>>, vector<8x128xbf16>
    %9 = arith.extf %8 : vector<8x128xbf16> to vector<8x128xf32>
    %cst_8 = arith.constant 1.000000e-30 : f32
    %10 = vector.broadcast %cst_8 : f32 to vector<8x128xf32>
    %11 = arith.maximumf %6, %10 : vector<8x128xf32>
    %12 = math.log %11 : vector<8x128xf32>
    %13 = arith.mulf %9, %12 : vector<8x128xf32>
    %cst_9 = arith.constant dense<0.000000e+00> : vector<8xf32>
    %14 = vector.multi_reduction <add>, %13, %cst_9 [1] : vector<8x128xf32> to vector<8xf32>
    %15 = vector.shape_cast %14 : vector<8xf32> to vector<8x1xf32>
    %16 = arith.subf %7, %15 : vector<8x1xf32>
    %c0_10 = arith.constant 0 : index
    %c0_11 = arith.constant 0 : index
    %17 = vector.load %arg5[%c0_10, %c0_11] : memref<8x1xf32, #tpu.memory_space<vmem>>, vector<8x1xf32>
    tpu.vector_store %arg5[%c0_10, %c0_11], %16 {strides = array<i32>} : memref<8x1xf32, #tpu.memory_space<vmem>>, vector<8x1xf32>,
    return
  }
  func.func @transform_0(%arg0: i32, %arg1: i32) -> (i32, i32) {
    %c0_i32 = arith.constant 0 : i32
    %c0_i32_0 = arith.constant 0 : i32
    return %arg0, %c0_i32 : i32, i32
  }
  func.func @transform_1(%arg0: i32, %arg1: i32) -> (i32, i32) {
    %c0_i32 = arith.constant 0 : i32
    %c0_i32_0 = arith.constant 0 : i32
    return %c0_i32, %arg1 : i32, i32
  }
  func.func @transform_2(%arg0: i32, %arg1: i32) -> (i32, i32) {
    %c0_i32 = arith.constant 0 : i32
    return %arg0, %arg1 : i32, i32
  }
  func.func @transform_3(%arg0: i32, %arg1: i32) -> (i32, i32) {
    %c0_i32 = arith.constant 0 : i32
    %c0_i32_0 = arith.constant 0 : i32
    return %arg0, %c0_i32 : i32, i32
  }
}

module attributes {stable_mosaic.version = 11 : i64} {
  func.func @_encoder_kernel(%arg0: i32, %arg1: i32, %arg2: memref<8x128xbf16, #tpu.memory_space<vmem>>, %arg3: memref<128x128xbf16, #tpu.memory_space<vmem>>, %arg4: memref<1x128xf32, #tpu.memory_space<vmem>>, %arg5: memref<128x128xbf16, #tpu.memory_space<vmem>>, %arg6: memref<1x128xf32, #tpu.memory_space<vmem>>, %arg7: memref<128x32xbf16, #tpu.memory_space<vmem>>, %arg8: memref<1x32xf32, #tpu.memory_space<vmem>>, %arg9: memref<8x16xf32, #tpu.memory_space<vmem>>, %arg10: memref<8x1xf32, #tpu.memory_space<vmem>>, %arg11: memref<8x128xf32, #tpu.memory_space<vmem>>) attributes {dimension_semantics = [#tpu.dimension_semantics<parallel>, #tpu.dimension_semantics<arbitrary>], iteration_bounds = array<i64: 1, 2>, scalar_prefetch = 0 : i64, scratch_operands = 1 : i64, tpu.core_type = #tpu.core_type<tc>, window_params = [{transform_indices = @transform_0, window_bounds = array<i64: 8, 128>}, {transform_indices = @transform_1, window_bounds = array<i64: 128, 128>}, {pipeline_mode = #tpu.pipeline_mode<synchronous>, transform_indices = @transform_2, window_bounds = array<i64: 1, 128>}, {pipeline_mode = #tpu.pipeline_mode<synchronous>, transform_indices = @transform_3, window_bounds = array<i64: 128, 128>}, {pipeline_mode = #tpu.pipeline_mode<synchronous>, transform_indices = @transform_4, window_bounds = array<i64: 1, 128>}, {pipeline_mode = #tpu.pipeline_mode<synchronous>, transform_indices = @transform_5, window_bounds = array<i64: 128, 32>}, {pipeline_mode = #tpu.pipeline_mode<synchronous>, transform_indices = @transform_6, window_bounds = array<i64: 1, 32>}, {transform_indices = @transform_7, window_bounds = array<i64: 8, 16>}, {transform_indices = @transform_8, window_bounds = array<i64: 8, 1>}]} {
    %c0_i32 = arith.constant 0 : i32
    %0 = arith.cmpi eq, %arg1, %c0_i32 : i32
    %1 = arith.extui %0 : i1 to i32
    %c0_i32_0 = arith.constant 0 : i32
    %2 = arith.cmpi ne, %1, %c0_i32_0 : i32
    scf.if %2 {
      %cst_9 = arith.constant 0.000000e+00 : f32
      %12 = vector.broadcast %cst_9 : f32 to vector<8x128xf32>
      %c0_10 = arith.constant 0 : index
      %c0_11 = arith.constant 0 : index
      %13 = vector.load %arg11[%c0_10, %c0_11] : memref<8x128xf32, #tpu.memory_space<vmem>>, vector<8x128xf32>
      tpu.vector_store %arg11[%c0_10, %c0_11], %12 {strides = array<i32>} : memref<8x128xf32, #tpu.memory_space<vmem>>, vector<8x128xf32>,
    } else {
    }
    %c0 = arith.constant 0 : index
    %c0_1 = arith.constant 0 : index
    %3 = vector.load %arg11[%c0, %c0_1] : memref<8x128xf32, #tpu.memory_space<vmem>>, vector<8x128xf32>
    %c0_2 = arith.constant 0 : index
    %c0_3 = arith.constant 0 : index
    %4 = vector.load %arg2[%c0_2, %c0_3] : memref<8x128xbf16, #tpu.memory_space<vmem>>, vector<8x128xbf16>
    %c0_4 = arith.constant 0 : index
    %c0_5 = arith.constant 0 : index
    %5 = vector.load %arg3[%c0_4, %c0_5] : memref<128x128xbf16, #tpu.memory_space<vmem>>, vector<128x128xbf16>
    %cst = arith.constant dense<0.000000e+00> : vector<8x128xf32>
    %6 = tpu.matmul %4, %5, %cst {dimension_numbers = #tpu.dot_dimension_numbers<[1], [0], [0], [1], [0, 0, 1, 1], [], []>} : vector<8x128xbf16>, vector<128x128xbf16>, vector<8x128xf32> -> vector<8x128xf32>
    %7 = arith.addf %3, %6 : vector<8x128xf32>
    %c0_6 = arith.constant 0 : index
    %c0_7 = arith.constant 0 : index
    %8 = vector.load %arg11[%c0_6, %c0_7] : memref<8x128xf32, #tpu.memory_space<vmem>>, vector<8x128xf32>
    tpu.vector_store %arg11[%c0_6, %c0_7], %7 {strides = array<i32>} : memref<8x128xf32, #tpu.memory_space<vmem>>, vector<8x128xf32>,
    %c1_i32 = arith.constant 1 : i32
    %9 = arith.cmpi eq, %arg1, %c1_i32 : i32
    %10 = arith.extui %9 : i1 to i32
    %c0_i32_8 = arith.constant 0 : i32
    %11 = arith.cmpi ne, %10, %c0_i32_8 : i32
    scf.if %11 {
      %c0_9 = arith.constant 0 : index
      %c0_10 = arith.constant 0 : index
      %12 = vector.load %arg11[%c0_9, %c0_10] : memref<8x128xf32, #tpu.memory_space<vmem>>, vector<8x128xf32>
      %c0_11 = arith.constant 0 : index
      %c0_12 = arith.constant 0 : index
      %13 = vector.load %arg4[%c0_11, %c0_12] : memref<1x128xf32, #tpu.memory_space<vmem>>, vector<1x128xf32>
      %14 = vector.broadcast %13 : vector<1x128xf32> to vector<8x128xf32>
      %15 = arith.addf %12, %14 : vector<8x128xf32>
      %cst_13 = arith.constant 0.000000e+00 : f32
      %16 = vector.broadcast %cst_13 : f32 to vector<8x128xf32>
      %17 = arith.maximumf %15, %16 : vector<8x128xf32>
      %18 = arith.truncf %17 : vector<8x128xf32> to vector<8x128xbf16>
      %c0_14 = arith.constant 0 : index
      %c0_15 = arith.constant 0 : index
      %19 = vector.load %arg5[%c0_14, %c0_15] : memref<128x128xbf16, #tpu.memory_space<vmem>>, vector<128x128xbf16>
      %cst_16 = arith.constant dense<0.000000e+00> : vector<8x128xf32>
      %20 = tpu.matmul %18, %19, %cst_16 {dimension_numbers = #tpu.dot_dimension_numbers<[1], [0], [0], [1], [0, 0, 1, 1], [], []>} : vector<8x128xbf16>, vector<128x128xbf16>, vector<8x128xf32> -> vector<8x128xf32>
      %c0_17 = arith.constant 0 : index
      %c0_18 = arith.constant 0 : index
      %21 = vector.load %arg6[%c0_17, %c0_18] : memref<1x128xf32, #tpu.memory_space<vmem>>, vector<1x128xf32>
      %22 = vector.broadcast %21 : vector<1x128xf32> to vector<8x128xf32>
      %23 = arith.addf %20, %22 : vector<8x128xf32>
      %cst_19 = arith.constant 0.000000e+00 : f32
      %24 = vector.broadcast %cst_19 : f32 to vector<8x128xf32>
      %25 = arith.maximumf %23, %24 : vector<8x128xf32>
      %26 = arith.truncf %25 : vector<8x128xf32> to vector<8x128xbf16>
      %c0_20 = arith.constant 0 : index
      %c0_21 = arith.constant 0 : index
      %27 = vector.load %arg7[%c0_20, %c0_21] : memref<128x32xbf16, #tpu.memory_space<vmem>>, vector<128x32xbf16>
      %cst_22 = arith.constant dense<0.000000e+00> : vector<8x32xf32>
      %28 = tpu.matmul %26, %27, %cst_22 {dimension_numbers = #tpu.dot_dimension_numbers<[1], [0], [0], [1], [0, 0, 1, 1], [], []>} : vector<8x128xbf16>, vector<128x32xbf16>, vector<8x32xf32> -> vector<8x32xf32>
      %c0_23 = arith.constant 0 : index
      %c0_24 = arith.constant 0 : index
      %29 = vector.load %arg8[%c0_23, %c0_24] : memref<1x32xf32, #tpu.memory_space<vmem>>, vector<1x32xf32>
      %30 = vector.broadcast %29 : vector<1x32xf32> to vector<8x32xf32>
      %31 = arith.addf %28, %30 : vector<8x32xf32>
      %32 = vector.extract_strided_slice %31 {offsets = [0, 0], sizes = [8, 16], strides = [1, 1]} : vector<8x32xf32> to vector<8x16xf32>
      %33 = vector.extract_strided_slice %31 {offsets = [0, 16], sizes = [8, 16], strides = [1, 1]} : vector<8x32xf32> to vector<8x16xf32>
      %cst_25 = arith.constant 2.000000e+00 : f32
      %34 = vector.broadcast %cst_25 : f32 to vector<8x16xf32>
      %35 = arith.mulf %34, %33 : vector<8x16xf32>
      %cst_26 = arith.constant 1.000000e+00 : f32
      %36 = vector.broadcast %cst_26 : f32 to vector<8x16xf32>
      %37 = arith.addf %36, %35 : vector<8x16xf32>
      %38 = arith.mulf %32, %32 : vector<8x16xf32>
      %39 = arith.subf %37, %38 : vector<8x16xf32>
      %40 = math.exp %35 : vector<8x16xf32>
      %41 = arith.subf %39, %40 : vector<8x16xf32>
      %cst_27 = arith.constant dense<0.000000e+00> : vector<8xf32>
      %42 = vector.multi_reduction <add>, %41, %cst_27 [1] : vector<8x16xf32> to vector<8xf32>
      %43 = vector.shape_cast %42 : vector<8xf32> to vector<8x1xf32>
      %cst_28 = arith.constant -5.000000e-01 : f32
      %44 = vector.broadcast %cst_28 : f32 to vector<8x1xf32>
      %45 = arith.mulf %44, %43 : vector<8x1xf32>
      %c0_29 = arith.constant 0 : index
      %c0_30 = arith.constant 0 : index
      %46 = vector.load %arg10[%c0_29, %c0_30] : memref<8x1xf32, #tpu.memory_space<vmem>>, vector<8x1xf32>
      tpu.vector_store %arg10[%c0_29, %c0_30], %45 {strides = array<i32>} : memref<8x1xf32, #tpu.memory_space<vmem>>, vector<8x1xf32>,
      %cst_31 = arith.constant dense<0xFF800000> : vector<8xf32>
      %47 = vector.multi_reduction <maximumf>, %32, %cst_31 [1] : vector<8x16xf32> to vector<8xf32>
      %48 = vector.shape_cast %47 : vector<8xf32> to vector<8x1xf32>
      %49 = vector.broadcast %48 : vector<8x1xf32> to vector<8x16xf32>
      %50 = arith.subf %32, %49 : vector<8x16xf32>
      %51 = math.exp %50 : vector<8x16xf32>
      %cst_32 = arith.constant dense<0.000000e+00> : vector<8xf32>
      %52 = vector.multi_reduction <add>, %51, %cst_32 [1] : vector<8x16xf32> to vector<8xf32>
      %53 = vector.shape_cast %52 : vector<8xf32> to vector<8x1xf32>
      %54 = vector.broadcast %53 : vector<8x1xf32> to vector<8x16xf32>
      %55 = arith.divf %51, %54 : vector<8x16xf32>
      %c0_33 = arith.constant 0 : index
      %c0_34 = arith.constant 0 : index
      %56 = vector.load %arg9[%c0_33, %c0_34] : memref<8x16xf32, #tpu.memory_space<vmem>>, vector<8x16xf32>
      tpu.vector_store %arg9[%c0_33, %c0_34], %55 {strides = array<i32>} : memref<8x16xf32, #tpu.memory_space<vmem>>, vector<8x16xf32>,
    } else {
    }
    return
  }
  func.func @transform_0(%arg0: i32, %arg1: i32) -> (i32, i32) {
    %c0_i32 = arith.constant 0 : i32
    return %arg0, %arg1 : i32, i32
  }
  func.func @transform_1(%arg0: i32, %arg1: i32) -> (i32, i32) {
    %c0_i32 = arith.constant 0 : i32
    %c0_i32_0 = arith.constant 0 : i32
    return %arg1, %c0_i32 : i32, i32
  }
  func.func @transform_2(%arg0: i32, %arg1: i32) -> (i32, i32) {
    %c0_i32 = arith.constant 0 : i32
    %c0_i32_0 = arith.constant 0 : i32
    %c0_i32_1 = arith.constant 0 : i32
    return %c0_i32, %c0_i32_0 : i32, i32
  }
  func.func @transform_3(%arg0: i32, %arg1: i32) -> (i32, i32) {
    %c0_i32 = arith.constant 0 : i32
    %c0_i32_0 = arith.constant 0 : i32
    %c0_i32_1 = arith.constant 0 : i32
    return %c0_i32, %c0_i32_0 : i32, i32
  }
  func.func @transform_4(%arg0: i32, %arg1: i32) -> (i32, i32) {
    %c0_i32 = arith.constant 0 : i32
    %c0_i32_0 = arith.constant 0 : i32
    %c0_i32_1 = arith.constant 0 : i32
    return %c0_i32, %c0_i32_0 : i32, i32
  }
  func.func @transform_5(%arg0: i32, %arg1: i32) -> (i32, i32) {
    %c0_i32 = arith.constant 0 : i32
    %c0_i32_0 = arith.constant 0 : i32
    %c0_i32_1 = arith.constant 0 : i32
    return %c0_i32, %c0_i32_0 : i32, i32
  }
  func.func @transform_6(%arg0: i32, %arg1: i32) -> (i32, i32) {
    %c0_i32 = arith.constant 0 : i32
    %c0_i32_0 = arith.constant 0 : i32
    %c0_i32_1 = arith.constant 0 : i32
    return %c0_i32, %c0_i32_0 : i32, i32
  }
  func.func @transform_7(%arg0: i32, %arg1: i32) -> (i32, i32) {
    %c0_i32 = arith.constant 0 : i32
    %c0_i32_0 = arith.constant 0 : i32
    return %arg0, %c0_i32 : i32, i32
  }
  func.func @transform_8(%arg0: i32, %arg1: i32) -> (i32, i32) {
    %c0_i32 = arith.constant 0 : i32
    %c0_i32_0 = arith.constant 0 : i32
    return %arg0, %c0_i32 : i32, i32
  }
}

module attributes {stable_mosaic.version = 11 : i64} {
  func.func @_encoder_kernel(%arg0: i32, %arg1: i32, %arg2: memref<8x128xbf16, #tpu.memory_space<vmem>>, %arg3: memref<128x256xbf16, #tpu.memory_space<vmem>>, %arg4: memref<1x256xf32, #tpu.memory_space<vmem>>, %arg5: memref<256x128xbf16, #tpu.memory_space<vmem>>, %arg6: memref<1x128xf32, #tpu.memory_space<vmem>>, %arg7: memref<128x32xbf16, #tpu.memory_space<vmem>>, %arg8: memref<1x32xf32, #tpu.memory_space<vmem>>, %arg9: memref<8x16xf32, #tpu.memory_space<vmem>>, %arg10: memref<8x1xf32, #tpu.memory_space<vmem>>, %arg11: memref<8x256xf32, #tpu.memory_space<vmem>>) attributes {dimension_semantics = [#tpu.dimension_semantics<parallel>, #tpu.dimension_semantics<arbitrary>], iteration_bounds = array<i64: 1, 3>, scalar_prefetch = 0 : i64, scratch_operands = 1 : i64, tpu.core_type = #tpu.core_type<tc>, window_params = [{transform_indices = @transform_0, window_bounds = array<i64: 8, 128>}, {transform_indices = @transform_1, window_bounds = array<i64: 128, 256>}, {pipeline_mode = #tpu.pipeline_mode<synchronous>, transform_indices = @transform_2, window_bounds = array<i64: 1, 256>}, {pipeline_mode = #tpu.pipeline_mode<synchronous>, transform_indices = @transform_3, window_bounds = array<i64: 256, 128>}, {pipeline_mode = #tpu.pipeline_mode<synchronous>, transform_indices = @transform_4, window_bounds = array<i64: 1, 128>}, {pipeline_mode = #tpu.pipeline_mode<synchronous>, transform_indices = @transform_5, window_bounds = array<i64: 128, 32>}, {pipeline_mode = #tpu.pipeline_mode<synchronous>, transform_indices = @transform_6, window_bounds = array<i64: 1, 32>}, {transform_indices = @transform_7, window_bounds = array<i64: 8, 16>}, {transform_indices = @transform_8, window_bounds = array<i64: 8, 1>}]} {
    %c0_i32 = arith.constant 0 : i32
    %0 = arith.cmpi eq, %arg1, %c0_i32 : i32
    %1 = arith.extui %0 : i1 to i32
    %c0_i32_0 = arith.constant 0 : i32
    %2 = arith.cmpi ne, %1, %c0_i32_0 : i32
    scf.if %2 {
      %cst_9 = arith.constant 0.000000e+00 : f32
      %12 = vector.broadcast %cst_9 : f32 to vector<8x256xf32>
      %c0_10 = arith.constant 0 : index
      %c0_11 = arith.constant 0 : index
      %13 = vector.load %arg11[%c0_10, %c0_11] : memref<8x256xf32, #tpu.memory_space<vmem>>, vector<8x256xf32>
      tpu.vector_store %arg11[%c0_10, %c0_11], %12 {strides = array<i32>} : memref<8x256xf32, #tpu.memory_space<vmem>>, vector<8x256xf32>,
    } else {
    }
    %c0 = arith.constant 0 : index
    %c0_1 = arith.constant 0 : index
    %3 = vector.load %arg11[%c0, %c0_1] : memref<8x256xf32, #tpu.memory_space<vmem>>, vector<8x256xf32>
    %c0_2 = arith.constant 0 : index
    %c0_3 = arith.constant 0 : index
    %4 = vector.load %arg2[%c0_2, %c0_3] : memref<8x128xbf16, #tpu.memory_space<vmem>>, vector<8x128xbf16>
    %c0_4 = arith.constant 0 : index
    %c0_5 = arith.constant 0 : index
    %5 = vector.load %arg3[%c0_4, %c0_5] : memref<128x256xbf16, #tpu.memory_space<vmem>>, vector<128x256xbf16>
    %cst = arith.constant dense<0.000000e+00> : vector<8x256xf32>
    %6 = tpu.matmul %4, %5, %cst {dimension_numbers = #tpu.dot_dimension_numbers<[1], [0], [0], [1], [0, 0, 1, 1], [], []>} : vector<8x128xbf16>, vector<128x256xbf16>, vector<8x256xf32> -> vector<8x256xf32>
    %7 = arith.addf %3, %6 : vector<8x256xf32>
    %c0_6 = arith.constant 0 : index
    %c0_7 = arith.constant 0 : index
    %8 = vector.load %arg11[%c0_6, %c0_7] : memref<8x256xf32, #tpu.memory_space<vmem>>, vector<8x256xf32>
    tpu.vector_store %arg11[%c0_6, %c0_7], %7 {strides = array<i32>} : memref<8x256xf32, #tpu.memory_space<vmem>>, vector<8x256xf32>,
    %c2_i32 = arith.constant 2 : i32
    %9 = arith.cmpi eq, %arg1, %c2_i32 : i32
    %10 = arith.extui %9 : i1 to i32
    %c0_i32_8 = arith.constant 0 : i32
    %11 = arith.cmpi ne, %10, %c0_i32_8 : i32
    scf.if %11 {
      %c0_9 = arith.constant 0 : index
      %c0_10 = arith.constant 0 : index
      %12 = vector.load %arg11[%c0_9, %c0_10] : memref<8x256xf32, #tpu.memory_space<vmem>>, vector<8x256xf32>
      %c0_11 = arith.constant 0 : index
      %c0_12 = arith.constant 0 : index
      %13 = vector.load %arg4[%c0_11, %c0_12] : memref<1x256xf32, #tpu.memory_space<vmem>>, vector<1x256xf32>
      %14 = vector.broadcast %13 : vector<1x256xf32> to vector<8x256xf32>
      %15 = arith.addf %12, %14 : vector<8x256xf32>
      %cst_13 = arith.constant 0.000000e+00 : f32
      %16 = vector.broadcast %cst_13 : f32 to vector<8x256xf32>
      %17 = arith.maximumf %15, %16 : vector<8x256xf32>
      %18 = arith.truncf %17 : vector<8x256xf32> to vector<8x256xbf16>
      %c0_14 = arith.constant 0 : index
      %c0_15 = arith.constant 0 : index
      %19 = vector.load %arg5[%c0_14, %c0_15] : memref<256x128xbf16, #tpu.memory_space<vmem>>, vector<256x128xbf16>
      %cst_16 = arith.constant dense<0.000000e+00> : vector<8x128xf32>
      %20 = tpu.matmul %18, %19, %cst_16 {dimension_numbers = #tpu.dot_dimension_numbers<[1], [0], [0], [1], [0, 0, 1, 1], [], []>} : vector<8x256xbf16>, vector<256x128xbf16>, vector<8x128xf32> -> vector<8x128xf32>
      %c0_17 = arith.constant 0 : index
      %c0_18 = arith.constant 0 : index
      %21 = vector.load %arg6[%c0_17, %c0_18] : memref<1x128xf32, #tpu.memory_space<vmem>>, vector<1x128xf32>
      %22 = vector.broadcast %21 : vector<1x128xf32> to vector<8x128xf32>
      %23 = arith.addf %20, %22 : vector<8x128xf32>
      %cst_19 = arith.constant 0.000000e+00 : f32
      %24 = vector.broadcast %cst_19 : f32 to vector<8x128xf32>
      %25 = arith.maximumf %23, %24 : vector<8x128xf32>
      %26 = arith.truncf %25 : vector<8x128xf32> to vector<8x128xbf16>
      %c0_20 = arith.constant 0 : index
      %c0_21 = arith.constant 0 : index
      %27 = vector.load %arg7[%c0_20, %c0_21] : memref<128x32xbf16, #tpu.memory_space<vmem>>, vector<128x32xbf16>
      %cst_22 = arith.constant dense<0.000000e+00> : vector<8x32xf32>
      %28 = tpu.matmul %26, %27, %cst_22 {dimension_numbers = #tpu.dot_dimension_numbers<[1], [0], [0], [1], [0, 0, 1, 1], [], []>} : vector<8x128xbf16>, vector<128x32xbf16>, vector<8x32xf32> -> vector<8x32xf32>
      %c0_23 = arith.constant 0 : index
      %c0_24 = arith.constant 0 : index
      %29 = vector.load %arg8[%c0_23, %c0_24] : memref<1x32xf32, #tpu.memory_space<vmem>>, vector<1x32xf32>
      %30 = vector.broadcast %29 : vector<1x32xf32> to vector<8x32xf32>
      %31 = arith.addf %28, %30 : vector<8x32xf32>
      %32 = vector.extract_strided_slice %31 {offsets = [0, 0], sizes = [8, 16], strides = [1, 1]} : vector<8x32xf32> to vector<8x16xf32>
      %33 = vector.extract_strided_slice %31 {offsets = [0, 16], sizes = [8, 16], strides = [1, 1]} : vector<8x32xf32> to vector<8x16xf32>
      %cst_25 = arith.constant 2.000000e+00 : f32
      %34 = vector.broadcast %cst_25 : f32 to vector<8x16xf32>
      %35 = arith.mulf %34, %33 : vector<8x16xf32>
      %cst_26 = arith.constant 1.000000e+00 : f32
      %36 = vector.broadcast %cst_26 : f32 to vector<8x16xf32>
      %37 = arith.addf %36, %35 : vector<8x16xf32>
      %38 = arith.mulf %32, %32 : vector<8x16xf32>
      %39 = arith.subf %37, %38 : vector<8x16xf32>
      %40 = math.exp %35 : vector<8x16xf32>
      %41 = arith.subf %39, %40 : vector<8x16xf32>
      %cst_27 = arith.constant dense<0.000000e+00> : vector<8xf32>
      %42 = vector.multi_reduction <add>, %41, %cst_27 [1] : vector<8x16xf32> to vector<8xf32>
      %43 = vector.shape_cast %42 : vector<8xf32> to vector<8x1xf32>
      %cst_28 = arith.constant -5.000000e-01 : f32
      %44 = vector.broadcast %cst_28 : f32 to vector<8x1xf32>
      %45 = arith.mulf %44, %43 : vector<8x1xf32>
      %c0_29 = arith.constant 0 : index
      %c0_30 = arith.constant 0 : index
      %46 = vector.load %arg10[%c0_29, %c0_30] : memref<8x1xf32, #tpu.memory_space<vmem>>, vector<8x1xf32>
      tpu.vector_store %arg10[%c0_29, %c0_30], %45 {strides = array<i32>} : memref<8x1xf32, #tpu.memory_space<vmem>>, vector<8x1xf32>,
      %cst_31 = arith.constant dense<0xFF800000> : vector<8xf32>
      %47 = vector.multi_reduction <maximumf>, %32, %cst_31 [1] : vector<8x16xf32> to vector<8xf32>
      %48 = vector.shape_cast %47 : vector<8xf32> to vector<8x1xf32>
      %49 = vector.broadcast %48 : vector<8x1xf32> to vector<8x16xf32>
      %50 = arith.subf %32, %49 : vector<8x16xf32>
      %51 = math.exp %50 : vector<8x16xf32>
      %cst_32 = arith.constant dense<0.000000e+00> : vector<8xf32>
      %52 = vector.multi_reduction <add>, %51, %cst_32 [1] : vector<8x16xf32> to vector<8xf32>
      %53 = vector.shape_cast %52 : vector<8xf32> to vector<8x1xf32>
      %54 = vector.broadcast %53 : vector<8x1xf32> to vector<8x16xf32>
      %55 = arith.divf %51, %54 : vector<8x16xf32>
      %c0_33 = arith.constant 0 : index
      %c0_34 = arith.constant 0 : index
      %56 = vector.load %arg9[%c0_33, %c0_34] : memref<8x16xf32, #tpu.memory_space<vmem>>, vector<8x16xf32>
      tpu.vector_store %arg9[%c0_33, %c0_34], %55 {strides = array<i32>} : memref<8x16xf32, #tpu.memory_space<vmem>>, vector<8x16xf32>,
    } else {
    }
    return
  }
  func.func @transform_0(%arg0: i32, %arg1: i32) -> (i32, i32) {
    %c0_i32 = arith.constant 0 : i32
    return %arg0, %arg1 : i32, i32
  }
  func.func @transform_1(%arg0: i32, %arg1: i32) -> (i32, i32) {
    %c0_i32 = arith.constant 0 : i32
    %c0_i32_0 = arith.constant 0 : i32
    return %arg1, %c0_i32 : i32, i32
  }
  func.func @transform_2(%arg0: i32, %arg1: i32) -> (i32, i32) {
    %c0_i32 = arith.constant 0 : i32
    %c0_i32_0 = arith.constant 0 : i32
    %c0_i32_1 = arith.constant 0 : i32
    return %c0_i32, %c0_i32_0 : i32, i32
  }
  func.func @transform_3(%arg0: i32, %arg1: i32) -> (i32, i32) {
    %c0_i32 = arith.constant 0 : i32
    %c0_i32_0 = arith.constant 0 : i32
    %c0_i32_1 = arith.constant 0 : i32
    return %c0_i32, %c0_i32_0 : i32, i32
  }
  func.func @transform_4(%arg0: i32, %arg1: i32) -> (i32, i32) {
    %c0_i32 = arith.constant 0 : i32
    %c0_i32_0 = arith.constant 0 : i32
    %c0_i32_1 = arith.constant 0 : i32
    return %c0_i32, %c0_i32_0 : i32, i32
  }
  func.func @transform_5(%arg0: i32, %arg1: i32) -> (i32, i32) {
    %c0_i32 = arith.constant 0 : i32
    %c0_i32_0 = arith.constant 0 : i32
    %c0_i32_1 = arith.constant 0 : i32
    return %c0_i32, %c0_i32_0 : i32, i32
  }
  func.func @transform_6(%arg0: i32, %arg1: i32) -> (i32, i32) {
    %c0_i32 = arith.constant 0 : i32
    %c0_i32_0 = arith.constant 0 : i32
    %c0_i32_1 = arith.constant 0 : i32
    return %c0_i32, %c0_i32_0 : i32, i32
  }
  func.func @transform_7(%arg0: i32, %arg1: i32) -> (i32, i32) {
    %c0_i32 = arith.constant 0 : i32
    %c0_i32_0 = arith.constant 0 : i32
    return %arg0, %c0_i32 : i32, i32
  }
  func.func @transform_8(%arg0: i32, %arg1: i32) -> (i32, i32) {
    %c0_i32 = arith.constant 0 : i32
    %c0_i32_0 = arith.constant 0 : i32
    return %arg0, %c0_i32 : i32, i32
  }
}

module attributes {stable_mosaic.version = 11 : i64} {
  func.func @_beta_stats_kernel(%arg0: i32, %arg1: i32, %arg2: memref<128x128xbf16, #tpu.memory_space<vmem>>, %arg3: memref<16x128xbf16, #tpu.memory_space<vmem>>, %arg4: memref<16x1xf32, #tpu.memory_space<vmem>>, %arg5: memref<16x1xf32, #tpu.memory_space<vmem>>) attributes {dimension_semantics = [#tpu.dimension_semantics<parallel>, #tpu.dimension_semantics<arbitrary>], iteration_bounds = array<i64: 1, 3>, scalar_prefetch = 0 : i64, scratch_operands = 0 : i64, tpu.core_type = #tpu.core_type<tc>, window_params = [{transform_indices = @transform_0, window_bounds = array<i64: 128, 128>}, {transform_indices = @transform_1, window_bounds = array<i64: 16, 128>}, {transform_indices = @transform_2, window_bounds = array<i64: 16, 1>}, {transform_indices = @transform_3, window_bounds = array<i64: 16, 1>}]} {
    %c0_i32 = arith.constant 0 : i32
    %0 = arith.cmpi eq, %arg1, %c0_i32 : i32
    %1 = arith.extui %0 : i1 to i32
    %c0_i32_0 = arith.constant 0 : i32
    %2 = arith.cmpi ne, %1, %c0_i32_0 : i32
    scf.if %2 {
      %cst_14 = arith.constant -1.000000e+30 : f32
      %22 = vector.broadcast %cst_14 : f32 to vector<16x1xf32>
      %c0_15 = arith.constant 0 : index
      %c0_16 = arith.constant 0 : index
      %23 = vector.load %arg4[%c0_15, %c0_16] : memref<16x1xf32, #tpu.memory_space<vmem>>, vector<16x1xf32>
      tpu.vector_store %arg4[%c0_15, %c0_16], %22 {strides = array<i32>} : memref<16x1xf32, #tpu.memory_space<vmem>>, vector<16x1xf32>,
      %cst_17 = arith.constant 0.000000e+00 : f32
      %24 = vector.broadcast %cst_17 : f32 to vector<16x1xf32>
      %c0_18 = arith.constant 0 : index
      %c0_19 = arith.constant 0 : index
      %25 = vector.load %arg5[%c0_18, %c0_19] : memref<16x1xf32, #tpu.memory_space<vmem>>, vector<16x1xf32>
      tpu.vector_store %arg5[%c0_18, %c0_19], %24 {strides = array<i32>} : memref<16x1xf32, #tpu.memory_space<vmem>>, vector<16x1xf32>,
    } else {
    }
    %c0 = arith.constant 0 : index
    %c0_1 = arith.constant 0 : index
    %3 = vector.load %arg3[%c0, %c0_1] : memref<16x128xbf16, #tpu.memory_space<vmem>>, vector<16x128xbf16>
    %c0_2 = arith.constant 0 : index
    %c0_3 = arith.constant 0 : index
    %4 = vector.load %arg2[%c0_2, %c0_3] : memref<128x128xbf16, #tpu.memory_space<vmem>>, vector<128x128xbf16>
    %cst = arith.constant dense<0.000000e+00> : vector<16x128xf32>
    %5 = tpu.matmul %3, %4, %cst {dimension_numbers = #tpu.dot_dimension_numbers<[1], [1], [0], [0], [0, 0, 1, 0], [], []>} : vector<16x128xbf16>, vector<128x128xbf16>, vector<16x128xf32> -> vector<16x128xf32>
    %cst_4 = arith.constant dense<0xFF800000> : vector<16xf32>
    %6 = vector.multi_reduction <maximumf>, %5, %cst_4 [1] : vector<16x128xf32> to vector<16xf32>
    %7 = vector.shape_cast %6 : vector<16xf32> to vector<16x1xf32>
    %c0_5 = arith.constant 0 : index
    %c0_6 = arith.constant 0 : index
    %8 = vector.load %arg4[%c0_5, %c0_6] : memref<16x1xf32, #tpu.memory_space<vmem>>, vector<16x1xf32>
    %9 = arith.maximumf %8, %7 : vector<16x1xf32>
    %c0_7 = arith.constant 0 : index
    %c0_8 = arith.constant 0 : index
    %10 = vector.load %arg5[%c0_7, %c0_8] : memref<16x1xf32, #tpu.memory_space<vmem>>, vector<16x1xf32>
    %11 = arith.subf %8, %9 : vector<16x1xf32>
    %12 = math.exp %11 : vector<16x1xf32>
    %13 = arith.mulf %10, %12 : vector<16x1xf32>
    %14 = vector.broadcast %9 : vector<16x1xf32> to vector<16x128xf32>
    %15 = arith.subf %5, %14 : vector<16x128xf32>
    %16 = math.exp %15 : vector<16x128xf32>
    %cst_9 = arith.constant dense<0.000000e+00> : vector<16xf32>
    %17 = vector.multi_reduction <add>, %16, %cst_9 [1] : vector<16x128xf32> to vector<16xf32>
    %18 = vector.shape_cast %17 : vector<16xf32> to vector<16x1xf32>
    %19 = arith.addf %13, %18 : vector<16x1xf32>
    %c0_10 = arith.constant 0 : index
    %c0_11 = arith.constant 0 : index
    %20 = vector.load %arg5[%c0_10, %c0_11] : memref<16x1xf32, #tpu.memory_space<vmem>>, vector<16x1xf32>
    tpu.vector_store %arg5[%c0_10, %c0_11], %19 {strides = array<i32>} : memref<16x1xf32, #tpu.memory_space<vmem>>, vector<16x1xf32>,
    %c0_12 = arith.constant 0 : index
    %c0_13 = arith.constant 0 : index
    %21 = vector.load %arg4[%c0_12, %c0_13] : memref<16x1xf32, #tpu.memory_space<vmem>>, vector<16x1xf32>
    tpu.vector_store %arg4[%c0_12, %c0_13], %9 {strides = array<i32>} : memref<16x1xf32, #tpu.memory_space<vmem>>, vector<16x1xf32>,
    return
  }
  func.func @transform_0(%arg0: i32, %arg1: i32) -> (i32, i32) {
    %c0_i32 = arith.constant 0 : i32
    %c0_i32_0 = arith.constant 0 : i32
    return %arg1, %c0_i32 : i32, i32
  }
  func.func @transform_1(%arg0: i32, %arg1: i32) -> (i32, i32) {
    %c0_i32 = arith.constant 0 : i32
    %c0_i32_0 = arith.constant 0 : i32
    return %arg0, %c0_i32 : i32, i32
  }
  func.func @transform_2(%arg0: i32, %arg1: i32) -> (i32, i32) {
    %c0_i32 = arith.constant 0 : i32
    %c0_i32_0 = arith.constant 0 : i32
    return %arg0, %c0_i32 : i32, i32
  }
  func.func @transform_3(%arg0: i32, %arg1: i32) -> (i32, i32) {
    %c0_i32 = arith.constant 0 : i32
    %c0_i32_0 = arith.constant 0 : i32
    return %arg0, %c0_i32 : i32, i32
  }
}

module attributes {stable_mosaic.version = 11 : i64} {
  func.func @_beta_norm_kernel(%arg0: i32, %arg1: i32, %arg2: memref<128x128xbf16, #tpu.memory_space<vmem>>, %arg3: memref<16x128xbf16, #tpu.memory_space<vmem>>, %arg4: memref<16x1xf32, #tpu.memory_space<vmem>>, %arg5: memref<16x1xf32, #tpu.memory_space<vmem>>, %arg6: memref<16x128xbf16, #tpu.memory_space<vmem>>) attributes {dimension_semantics = [#tpu.dimension_semantics<parallel>, #tpu.dimension_semantics<parallel>], iteration_bounds = array<i64: 1, 3>, scalar_prefetch = 0 : i64, scratch_operands = 0 : i64, tpu.core_type = #tpu.core_type<tc>, window_params = [{transform_indices = @transform_0, window_bounds = array<i64: 128, 128>}, {transform_indices = @transform_1, window_bounds = array<i64: 16, 128>}, {transform_indices = @transform_2, window_bounds = array<i64: 16, 1>}, {transform_indices = @transform_3, window_bounds = array<i64: 16, 1>}, {transform_indices = @transform_4, window_bounds = array<i64: 16, 128>}]} {
    %c0 = arith.constant 0 : index
    %c0_0 = arith.constant 0 : index
    %0 = vector.load %arg3[%c0, %c0_0] : memref<16x128xbf16, #tpu.memory_space<vmem>>, vector<16x128xbf16>
    %c0_1 = arith.constant 0 : index
    %c0_2 = arith.constant 0 : index
    %1 = vector.load %arg2[%c0_1, %c0_2] : memref<128x128xbf16, #tpu.memory_space<vmem>>, vector<128x128xbf16>
    %cst = arith.constant dense<0.000000e+00> : vector<16x128xf32>
    %2 = tpu.matmul %0, %1, %cst {dimension_numbers = #tpu.dot_dimension_numbers<[1], [1], [0], [0], [0, 0, 1, 0], [], []>} : vector<16x128xbf16>, vector<128x128xbf16>, vector<16x128xf32> -> vector<16x128xf32>
    %c0_3 = arith.constant 0 : index
    %c0_4 = arith.constant 0 : index
    %3 = vector.load %arg4[%c0_3, %c0_4] : memref<16x1xf32, #tpu.memory_space<vmem>>, vector<16x1xf32>
    %c0_5 = arith.constant 0 : index
    %c0_6 = arith.constant 0 : index
    %4 = vector.load %arg5[%c0_5, %c0_6] : memref<16x1xf32, #tpu.memory_space<vmem>>, vector<16x1xf32>
    %5 = math.log %4 : vector<16x1xf32>
    %6 = arith.addf %3, %5 : vector<16x1xf32>
    %7 = vector.broadcast %6 : vector<16x1xf32> to vector<16x128xf32>
    %8 = arith.subf %2, %7 : vector<16x128xf32>
    %9 = math.exp %8 : vector<16x128xf32>
    %10 = arith.truncf %9 : vector<16x128xf32> to vector<16x128xbf16>
    %c0_7 = arith.constant 0 : index
    %c0_8 = arith.constant 0 : index
    %11 = vector.load %arg6[%c0_7, %c0_8] : memref<16x128xbf16, #tpu.memory_space<vmem>>, vector<16x128xbf16>
    tpu.vector_store %arg6[%c0_7, %c0_8], %10 {strides = array<i32>} : memref<16x128xbf16, #tpu.memory_space<vmem>>, vector<16x128xbf16>,
    return
  }
  func.func @transform_0(%arg0: i32, %arg1: i32) -> (i32, i32) {
    %c0_i32 = arith.constant 0 : i32
    %c0_i32_0 = arith.constant 0 : i32
    return %arg1, %c0_i32 : i32, i32
  }
  func.func @transform_1(%arg0: i32, %arg1: i32) -> (i32, i32) {
    %c0_i32 = arith.constant 0 : i32
    %c0_i32_0 = arith.constant 0 : i32
    return %arg0, %c0_i32 : i32, i32
  }
  func.func @transform_2(%arg0: i32, %arg1: i32) -> (i32, i32) {
    %c0_i32 = arith.constant 0 : i32
    %c0_i32_0 = arith.constant 0 : i32
    return %arg0, %c0_i32 : i32, i32
  }
  func.func @transform_3(%arg0: i32, %arg1: i32) -> (i32, i32) {
    %c0_i32 = arith.constant 0 : i32
    %c0_i32_0 = arith.constant 0 : i32
    return %arg0, %c0_i32 : i32, i32
  }
  func.func @transform_4(%arg0: i32, %arg1: i32) -> (i32, i32) {
    %c0_i32 = arith.constant 0 : i32
    return %arg0, %arg1 : i32, i32
  }
}

module attributes {stable_mosaic.version = 11 : i64} {
  func.func @_decode_nll_kernel(%arg0: i32, %arg1: i32, %arg2: memref<8x16xf32, #tpu.memory_space<vmem>>, %arg3: memref<16x128xbf16, #tpu.memory_space<vmem>>, %arg4: memref<8x128xbf16, #tpu.memory_space<vmem>>, %arg5: memref<8x1xf32, #tpu.memory_space<vmem>>) attributes {dimension_semantics = [#tpu.dimension_semantics<parallel>, #tpu.dimension_semantics<arbitrary>], iteration_bounds = array<i64: 1, 3>, scalar_prefetch = 0 : i64, scratch_operands = 0 : i64, tpu.core_type = #tpu.core_type<tc>, window_params = [{transform_indices = @transform_0, window_bounds = array<i64: 8, 16>}, {transform_indices = @transform_1, window_bounds = array<i64: 16, 128>}, {transform_indices = @transform_2, window_bounds = array<i64: 8, 128>}, {transform_indices = @transform_3, window_bounds = array<i64: 8, 1>}]} {
    %c0_i32 = arith.constant 0 : i32
    %0 = arith.cmpi eq, %arg1, %c0_i32 : i32
    %1 = arith.extui %0 : i1 to i32
    %c0_i32_0 = arith.constant 0 : i32
    %2 = arith.cmpi ne, %1, %c0_i32_0 : i32
    scf.if %2 {
      %cst_12 = arith.constant 0.000000e+00 : f32
      %18 = vector.broadcast %cst_12 : f32 to vector<8x1xf32>
      %c0_13 = arith.constant 0 : index
      %c0_14 = arith.constant 0 : index
      %19 = vector.load %arg5[%c0_13, %c0_14] : memref<8x1xf32, #tpu.memory_space<vmem>>, vector<8x1xf32>
      tpu.vector_store %arg5[%c0_13, %c0_14], %18 {strides = array<i32>} : memref<8x1xf32, #tpu.memory_space<vmem>>, vector<8x1xf32>,
    } else {
    }
    %c0 = arith.constant 0 : index
    %c0_1 = arith.constant 0 : index
    %3 = vector.load %arg2[%c0, %c0_1] : memref<8x16xf32, #tpu.memory_space<vmem>>, vector<8x16xf32>
    %c0_2 = arith.constant 0 : index
    %c0_3 = arith.constant 0 : index
    %4 = vector.load %arg3[%c0_2, %c0_3] : memref<16x128xbf16, #tpu.memory_space<vmem>>, vector<16x128xbf16>
    %5 = arith.extf %4 : vector<16x128xbf16> to vector<16x128xf32>
    %cst = arith.constant dense<0.000000e+00> : vector<8x128xf32>
    %6 = tpu.matmul %3, %5, %cst {dimension_numbers = #tpu.dot_dimension_numbers<[1], [0], [0], [1], [0, 0, 1, 1], [], []>} : vector<8x16xf32>, vector<16x128xf32>, vector<8x128xf32> -> vector<8x128xf32>
    %c0_4 = arith.constant 0 : index
    %c0_5 = arith.constant 0 : index
    %7 = vector.load %arg5[%c0_4, %c0_5] : memref<8x1xf32, #tpu.memory_space<vmem>>, vector<8x1xf32>
    %c0_6 = arith.constant 0 : index
    %c0_7 = arith.constant 0 : index
    %8 = vector.load %arg4[%c0_6, %c0_7] : memref<8x128xbf16, #tpu.memory_space<vmem>>, vector<8x128xbf16>
    %9 = arith.extf %8 : vector<8x128xbf16> to vector<8x128xf32>
    %cst_8 = arith.constant 1.000000e-30 : f32
    %10 = vector.broadcast %cst_8 : f32 to vector<8x128xf32>
    %11 = arith.maximumf %6, %10 : vector<8x128xf32>
    %12 = math.log %11 : vector<8x128xf32>
    %13 = arith.mulf %9, %12 : vector<8x128xf32>
    %cst_9 = arith.constant dense<0.000000e+00> : vector<8xf32>
    %14 = vector.multi_reduction <add>, %13, %cst_9 [1] : vector<8x128xf32> to vector<8xf32>
    %15 = vector.shape_cast %14 : vector<8xf32> to vector<8x1xf32>
    %16 = arith.subf %7, %15 : vector<8x1xf32>
    %c0_10 = arith.constant 0 : index
    %c0_11 = arith.constant 0 : index
    %17 = vector.load %arg5[%c0_10, %c0_11] : memref<8x1xf32, #tpu.memory_space<vmem>>, vector<8x1xf32>
    tpu.vector_store %arg5[%c0_10, %c0_11], %16 {strides = array<i32>} : memref<8x1xf32, #tpu.memory_space<vmem>>, vector<8x1xf32>,
    return
  }
  func.func @transform_0(%arg0: i32, %arg1: i32) -> (i32, i32) {
    %c0_i32 = arith.constant 0 : i32
    %c0_i32_0 = arith.constant 0 : i32
    return %arg0, %c0_i32 : i32, i32
  }
  func.func @transform_1(%arg0: i32, %arg1: i32) -> (i32, i32) {
    %c0_i32 = arith.constant 0 : i32
    %c0_i32_0 = arith.constant 0 : i32
    return %c0_i32, %arg1 : i32, i32
  }
  func.func @transform_2(%arg0: i32, %arg1: i32) -> (i32, i32) {
    %c0_i32 = arith.constant 0 : i32
    return %arg0, %arg1 : i32, i32
  }
  func.func @transform_3(%arg0: i32, %arg1: i32) -> (i32, i32) {
    %c0_i32 = arith.constant 0 : i32
    %c0_i32_0 = arith.constant 0 : i32
    return %arg0, %c0_i32 : i32, i32
  }
}

</mosaic_0001>

<llo_original>
// kernel: _lambda_.11
$region0: #{_lambda_.11}
  #allocation0 [shape = 'u32[]', space=smem, size = 0x4, offset = 0x4, fixed_abs, tag = 'smem constant byte address 0x4 - core index']
  #allocation1 [shape = 'u32[144,128]{1,0:T(1,128)}', space=vmem, size = 0x12000, scoped, tag = 'internal scratch']
  %s0 = inlined_call_operand.vmem [shape: bf16[256,128], index: 0, kind: input, shape index: {}]
  %s1 = inlined_call_operand.vmem [shape: bf16[16,128], index: 1, kind: input, shape index: {}]
  %s2 = inlined_call_operand.vmem [shape: f32[16,1], index: 2, kind: input, shape index: {}]
  %s3 = inlined_call_operand.vmem [shape: f32[16,1], index: 3, kind: input, shape index: {}]
  %s4 = inlined_call_operand.vmem [shape: bf16[16,256], index: 4, kind: output, shape index: {}]
  %s5 = sld [smem:[#allocation0]]
  $region86: #{_lambda_.11} parent=0
    _
  %s7 = ssub.s32 1, %s5
  %s8 = scalar_select 0, %s7, %s5
  $region1: #{_lambda_.11} parent=0
    #allocation2 [shape = 'u8[8192]{0}', space=vmem, size = 0x2000, scoped, tag = 'output window, operand 0']
    loop: start=0, step=1, limit=4
    $region2: #{_lambda_.11} parent=1 // loop_pre_header
      _
    $region3: #{_lambda_.11} parent=1 // loop_header
      %s10 = sphi 0, %s14
      %p11 = scmp.ge.s32.totalorder %s10, 4
      %s17 = sphi 0, %s29
      %s18 = sphi 0, %s25
      %s19 = sphi 0, %s17
      %s20 = sphi 0, %s18
      %s21 = sphi 0, %s19
      %s22 = sphi 0, %s20
      %s32 = sphi 0, %s34
      %s35 = sphi 0, %s32
      %s36 = sphi 0, %s35
      %s52 = sphi 0, %s36
      %s58 = sphi 0, %s60
      %s61 = sphi 0, %s58
      %s62 = sphi 0, %s61
      %s78 = sphi 0, %s62
      %s84 = sphi 0, %s86
      %s87 = sphi 0, %s84
      %s88 = sphi 0, %s87
      %s104 = sphi 0, %s88
      %s110 = sphi 0, %s112
      %s113 = sphi 0, %s110
      %s114 = sphi 0, %s113
      %s130 = sphi 0, %s114
      %s138 = sphi 0, %s140
      %s141 = sphi 0, %s138
      %s142 = sphi 0, %s141
      %s158 = sphi 0, %s142
    $region4: #{_lambda_.11} parent=1 // loop_header_branch
      %13 = sbr.rel (%p11) target = $region8
    $region5: #{_lambda_.11} parent=1 // loop_body
      %s15 = ssub.s32 %s10, 1
      %s16 = ssub.s32 %s10, 2
      %s23 = sadd.s32 1, %s18
      %p24 = scmp.ge.s32.totalorder %s23, 2
      %s25 = scalar_select %p24, 0, %s23
      %s26 = sadd.s32 1, %s17
      %s27 = scalar_select %p24, %s26, %s17
      %p28 = scmp.ge.s32.totalorder %s27, 1
      %s29 = scalar_select %p28, 0, %s27
      %s30 = ssub.s32 %s18, %s25
      %p31 = scmp.eq.s32.totalorder %s30, 0
      %s33 = sadd.s32 %s32, 1
      %s34 = scalar_select %p31, %s32, %s33
      %p37 = pneg %p31
      %p38 = scmp.eq.s32.totalorder %s10, 1
      %p39 = por %p37, %p38
      %p40 = scmp.ne.s32.totalorder %s32, %s35
      %p41 = scmp.eq.s32.totalorder %s10, 0
      %p42 = por %p40, %p41
      %p43 = scmp.ne.s32.totalorder %s32, %s35
      %p44 = scmp.eq.s32.totalorder %s15, 1
      %p45 = por %p43, %p44
      %p46 = scmp.ne.s32.totalorder %s35, %s36
      %p47 = scmp.eq.s32.totalorder %s15, 0
      %p48 = por %p46, %p47
      %p49 = scmp.ne.s32.totalorder %s35, %s36
      %p50 = scmp.eq.s32.totalorder %s16, 1
      %p51 = por %p49, %p50
      %p53 = scmp.ne.s32.totalorder %s36, %s52
      %p54 = scmp.eq.s32.totalorder %s16, 0
      %p55 = por %p53, %p54
      %s56 = ssub.s32 %s17, %s29
      %p57 = scmp.eq.s32.totalorder %s56, 0
      %s59 = sadd.s32 %s58, 1
      %s60 = scalar_select %p57, %s58, %s59
      %p63 = pneg %p57
      %p64 = scmp.eq.s32.totalorder %s10, 1
      %p65 = por %p63, %p64
      %p66 = scmp.ne.s32.totalorder %s58, %s61
      %p67 = scmp.eq.s32.totalorder %s10, 0
      %p68 = por %p66, %p67
      %p69 = scmp.ne.s32.totalorder %s58, %s61
      %p70 = scmp.eq.s32.totalorder %s15, 1
      %p71 = por %p69, %p70
      %p72 = scmp.ne.s32.totalorder %s61, %s62
      %p73 = scmp.eq.s32.totalorder %s15, 0
      %p74 = por %p72, %p73
      %p75 = scmp.ne.s32.totalorder %s61, %s62
      %p76 = scmp.eq.s32.totalorder %s16, 1
      %p77 = por %p75, %p76
      %p79 = scmp.ne.s32.totalorder %s62, %s78
      %p80 = scmp.eq.s32.totalorder %s16, 0
      %p81 = por %p79, %p80
      %s82 = ssub.s32 %s17, %s29
      %p83 = scmp.eq.s32.totalorder %s82, 0
      %s85 = sadd.s32 %s84, 1
      %s86 = scalar_select %p83, %s84, %s85
      %p89 = pneg %p83
      %p90 = scmp.eq.s32.totalorder %s10, 1
      %p91 = por %p89, %p90
      %p92 = scmp.ne.s32.totalorder %s84, %s87
      %p93 = scmp.eq.s32.totalorder %s10, 0
      %p94 = por %p92, %p93
      %p95 = scmp.ne.s32.totalorder %s84, %s87
      %p96 = scmp.eq.s32.totalorder %s15, 1
      %p97 = por %p95, %p96
      %p98 = scmp.ne.s32.totalorder %s87, %s88
      %p99 = scmp.eq.s32.totalorder %s15, 0
      %p100 = por %p98, %p99
      %p101 = scmp.ne.s32.totalorder %s87, %s88
      %p102 = scmp.eq.s32.totalorder %s16, 1
      %p103 = por %p101, %p102
      %p105 = scmp.ne.s32.totalorder %s88, %s104
      %p106 = scmp.eq.s32.totalorder %s16, 0
      %p107 = por %p105, %p106
      %s108 = ssub.s32 %s17, %s29
      %p109 = scmp.eq.s32.totalorder %s108, 0
      %s111 = sadd.s32 %s110, 1
      %s112 = scalar_select %p109, %s110, %s111
      %p115 = pneg %p109
      %p116 = scmp.eq.s32.totalorder %s10, 1
      %p117 = por %p115, %p116
      %p118 = scmp.ne.s32.totalorder %s110, %s113
      %p119 = scmp.eq.s32.totalorder %s10, 0
      %p120 = por %p118, %p119
      %p121 = scmp.ne.s32.totalorder %s110, %s113
      %p122 = scmp.eq.s32.totalorder %s15, 1
      %p123 = por %p121, %p122
      %p124 = scmp.ne.s32.totalorder %s113, %s114
      %p125 = scmp.eq.s32.totalorder %s15, 0
      %p126 = por %p124, %p125
      %p127 = scmp.ne.s32.totalorder %s113, %s114
      %p128 = scmp.eq.s32.totalorder %s16, 1
      %p129 = por %p127, %p128
      %p131 = scmp.ne.s32.totalorder %s114, %s130
      %p132 = scmp.eq.s32.totalorder %s16, 0
      %p133 = por %p131, %p132
      %s134 = ssub.s32 %s17, %s29
      %s135 = ssub.s32 %s18, %s25
      %s136 = sor.u32 %s134, %s135
      %p137 = scmp.eq.s32.totalorder %s136, 0
      %s139 = sadd.s32 %s138, 1
      %s140 = scalar_select %p137, %s138, %s139
      %p143 = pneg %p137
      %p144 = scmp.eq.s32.totalorder %s10, 1
      %p145 = por %p143, %p144
      %p146 = scmp.ne.s32.totalorder %s138, %s141
      %p147 = scmp.eq.s32.totalorder %s10, 0
      %p148 = por %p146, %p147
      %p149 = scmp.ne.s32.totalorder %s138, %s141
      %p150 = scmp.eq.s32.totalorder %s15, 1
      %p151 = por %p149, %p150
      %p152 = scmp.ne.s32.totalorder %s141, %s142
      %p153 = scmp.eq.s32.totalorder %s15, 0
      %p154 = por %p152, %p153
      %p155 = scmp.ne.s32.totalorder %s141, %s142
      %p156 = scmp.eq.s32.totalorder %s16, 1
      %p157 = por %p155, %p156
      %p159 = scmp.ne.s32.totalorder %s142, %s158
      %p160 = scmp.eq.s32.totalorder %s16, 0
      %p161 = por %p159, %p160
      %p162 = scmp.le.s32.totalorder 1, %s10
      %p163 = scmp.lt.s32.totalorder %s10, 3
      %p164 = pnand %p162, %p163
      %p165 = pneg %p164
      // Predicated region
      $region9: #{_lambda_.11} parent=5 // pred_check
        _
      $region10: #{_lambda_.11} parent=5 // pred_check_branch
        %167 = sbr.rel (%p164) target = $region12
      $region11: #{_lambda_.11} parent=5 // pred_region
        %s168 = ssub.s32 %s10, 1
        // Predicated region
        $region13: #{_lambda_.11} parent=11 // pred_check
          %p169 = pneg %p74
        $region14: #{_lambda_.11} parent=11 // pred_check_branch
          %171 = sbr.rel (%p169) target = $region16
        $region15: #{_lambda_.11} parent=11 // pred_region
          %s172 = smul.u32 2, %s19
          %p173 = scmp.lt.s32.totalorder %s172, 1
          %s174 = scalar_select %p173, %s172, 1
          %s175 = smul.addr %s174, 4
          %s176 = scalar_lea.vmem %s1, %s175
          %s177 = smul.u32 2, %s19
        $region16: #{_lambda_.11} parent=11 // pred_fallthru
          _
        // Predicated region
        $region17: #{_lambda_.11} parent=11 // pred_check
          %p178 = pneg %p100
        $region18: #{_lambda_.11} parent=11 // pred_check_branch
          %180 = sbr.rel (%p178) target = $region20
        $region19: #{_lambda_.11} parent=11 // pred_region
          %s181 = smul.u32 2, %s19
          %p182 = scmp.lt.s32.totalorder %s181, 1
          %s183 = scalar_select %p182, %s181, 1
          %s184 = smul.addr %s183, 8
          %s185 = scalar_lea.vmem %s2, %s184
          %s186 = smul.u32 2, %s19
        $region20: #{_lambda_.11} parent=11 // pred_fallthru
          _
        // Predicated region
        $region21: #{_lambda_.11} parent=11 // pred_check
          %p187 = pneg %p126
        $region22: #{_lambda_.11} parent=11 // pred_check_branch
          %189 = sbr.rel (%p187) target = $region24
        $region23: #{_lambda_.11} parent=11 // pred_region
          %s190 = smul.u32 2, %s19
          %p191 = scmp.lt.s32.totalorder %s190, 1
          %s192 = scalar_select %p191, %s190, 1
          %s193 = smul.addr %s192, 8
          %s194 = scalar_lea.vmem %s3, %s193
          %s195 = smul.u32 2, %s19
        $region24: #{_lambda_.11} parent=11 // pred_fallthru
          _
      $region12: #{_lambda_.11} parent=5 // pred_fallthru
        _
      %p196 = scmp.lt.s32.totalorder %s10, 2
      // Predicated region
      $region25: #{_lambda_.11} parent=5 // pred_check
        %p197 = pneg %p196
      $region26: #{_lambda_.11} parent=5 // pred_check_branch
        %199 = sbr.rel (%p197) target = $region28
      $region27: #{_lambda_.11} parent=5 // pred_region
        // Predicated region
        $region29: #{_lambda_.11} parent=27 // pred_check
          %p200 = pneg %p42
        $region30: #{_lambda_.11} parent=27 // pred_check_branch
          %202 = sbr.rel (%p200) target = $region32
        $region31: #{_lambda_.11} parent=27 // pred_region
          %s203 = smul.u32 16, %s18
          %p204 = scmp.lt.s32.totalorder %s203, 31
          %s205 = scalar_select %p204, %s203, 31
          %s206 = smul.addr %s205, 4
          %s207 = scalar_lea.vmem %s0, %s206
          %s208 = smul.u32 16, %s18
        $region32: #{_lambda_.11} parent=27 // pred_fallthru
          _
      $region28: #{_lambda_.11} parent=5 // pred_fallthru
        _
      %p209 = scmp.le.s32.totalorder 1, %s10
      %p210 = scmp.lt.s32.totalorder %s10, 3
      %p211 = pnand %p209, %p210
      %p212 = pneg %p211
      // Predicated region
      $region33: #{_lambda_.11} parent=5 // pred_check
        _
      $region34: #{_lambda_.11} parent=5 // pred_check_branch
        %214 = sbr.rel (%p211) target = $region36
      $region35: #{_lambda_.11} parent=5 // pred_region
        %s215 = ssub.s32 %s10, 1
        %s216 = smul.u32 16, %s20
        %p217 = scmp.lt.s32.totalorder %s216, 31
        %s218 = scalar_select %p217, %s216, 31
        %s219 = smul.addr %s218, 4
        %s220 = scalar_lea.vmem %s0, %s219
        %p221 = pneg %p48
        %p222 = pneg %p45
        %s223 = smul.u32 2, %s19
        %p224 = scmp.lt.s32.totalorder %s223, 1
        %s225 = scalar_select %p224, %s223, 1
        %s226 = smul.addr %s225, 4
        %s227 = scalar_lea.vmem %s1, %s226
        %p228 = pneg %p74
        %p229 = pneg %p71
        %s230 = smul.u32 2, %s19
        %p231 = scmp.lt.s32.totalorder %s230, 1
        %s232 = scalar_select %p231, %s230, 1
        %s233 = smul.addr %s232, 8
        %s234 = scalar_lea.vmem %s2, %s233
        %p235 = pneg %p100
        %p236 = pneg %p97
        %s237 = smul.u32 2, %s19
        %p238 = scmp.lt.s32.totalorder %s237, 1
        %s239 = scalar_select %p238, %s237, 1
        %s240 = smul.addr %s239, 8
        %s241 = scalar_lea.vmem %s3, %s240
        %p242 = pneg %p126
        %p243 = pneg %p123
        %p244 = pneg %p154
        %p245 = pneg %p151
        %s246 = sand.u32 %s141, 1
        %s247 = sand.u32 %s141, 1
        %s248 = smul.addr %s247, 8
        %s249 = scalar_lea.vmem [#allocation2], %s248
        %s250 = smul.u32 16, %s20
        %p251 = scmp.lt.s32.totalorder %s250, 31
        %s252 = scalar_select %p251, %s250, 31
        %s253 = smul.addr %s252, 4
        %s254 = scalar_lea.vmem %s0, %s253
        %s255 = smul.u32 16, %s20
        %s256 = smul.u32 2, %s19
        %p257 = scmp.lt.s32.totalorder %s256, 1
        %s258 = scalar_select %p257, %s256, 1
        %s259 = smul.addr %s258, 4
        %s260 = scalar_lea.vmem %s1, %s259
        %s261 = smul.u32 2, %s19
        %s262 = smul.u32 2, %s19
        %p263 = scmp.lt.s32.totalorder %s262, 1
        %s264 = scalar_select %p263, %s262, 1
        %s265 = smul.addr %s264, 8
        %s266 = scalar_lea.vmem %s2, %s265
        %s267 = smul.u32 2, %s19
        %s268 = smul.u32 2, %s19
        %p269 = scmp.lt.s32.totalorder %s268, 1
        %s270 = scalar_select %p269, %s268, 1
        %s271 = smul.addr %s270, 8
        %s272 = scalar_lea.vmem %s3, %s271
        %s273 = smul.u32 2, %s19
        %s274 = smul.u32 2, %s19
        %v276 = vld [vmem:[%s260] sm:$0xf]
        %v277 = vld [vmem:[%s260 + $0x4] sm:$0xf]
        %v278 = vld [vmem:[%s254] sm:$0xf]
        %v279 = vld [vmem:[%s254 + $0x4] sm:$0xf]
        %v280 = vld [vmem:[%s254 + $0x8] sm:$0xf]
        %v281 = vld [vmem:[%s254 + $0xc] sm:$0xf]
        %v282 = vld [vmem:[%s254 + $0x10] sm:$0xf]
        %v283 = vld [vmem:[%s254 + $0x14] sm:$0xf]
        %v284 = vld [vmem:[%s254 + $0x18] sm:$0xf]
        %v285 = vld [vmem:[%s254 + $0x1c] sm:$0xf]
        %v286 = vld [vmem:[%s254 + $0x20] sm:$0xf]
        %v287 = vld [vmem:[%s254 + $0x24] sm:$0xf]
        %v288 = vld [vmem:[%s254 + $0x28] sm:$0xf]
        %v289 = vld [vmem:[%s254 + $0x2c] sm:$0xf]
        %v290 = vld [vmem:[%s254 + $0x30] sm:$0xf]
        %v291 = vld [vmem:[%s254 + $0x34] sm:$0xf]
        %v292 = vld [vmem:[%s254 + $0x38] sm:$0xf]
        %v293 = vld [vmem:[%s254 + $0x3c] sm:$0xf]
        %v296 = vunpack.c.l.b16 %v276
        %v297 = vunpack.c.l.b16 %v277
        %v298 = vpack.c.b16 %v297, %v296
        %v316 = vunpack.c.l.b16 %v278
        %v317 = vunpack.c.l.b16 %v279
        %v318 = vunpack.c.l.b16 %v280
        %v319 = vunpack.c.l.b16 %v281
        %v320 = vunpack.c.l.b16 %v282
        %v321 = vunpack.c.l.b16 %v283
        %v322 = vunpack.c.l.b16 %v284
        %v323 = vunpack.c.l.b16 %v285
        %v324 = vunpack.c.l.b16 %v286
        %v325 = vunpack.c.l.b16 %v287
        %v326 = vunpack.c.l.b16 %v288
        %v327 = vunpack.c.l.b16 %v289
        %v328 = vunpack.c.l.b16 %v290
        %v329 = vunpack.c.l.b16 %v291
        %v330 = vunpack.c.l.b16 %v292
        %v331 = vunpack.c.l.b16 %v293
        %v332 = vpack.c.b16 %v317, %v316
        %v333 = vpack.c.b16 %v319, %v318
        %v334 = vpack.c.b16 %v321, %v320
        %v335 = vpack.c.b16 %v323, %v322
        %v336 = vpack.c.b16 %v325, %v324
        %v337 = vpack.c.b16 %v327, %v326
        %v338 = vpack.c.b16 %v329, %v328
        %v339 = vpack.c.b16 %v331, %v330
        %348 = vmatprep.subr.bf16.mxu0 0
        %349 = vmatpush1.bf16.xpose.msra.mxu0 %v339
        %350 = vmatprep.subr.bf16.mxu0 0
        %351 = vmatpush1.bf16.xpose.msra.mxu0 %v338
        %352 = vmatprep.subr.bf16.mxu0 0
        %353 = vmatpush1.bf16.xpose.msra.mxu0 %v337
        %354 = vmatprep.subr.bf16.mxu0 0
        %355 = vmatpush1.bf16.xpose.msra.mxu0 %v336
        %356 = vmatprep.subr.bf16.mxu0 0
        %357 = vmatpush1.bf16.xpose.msra.mxu0 %v335
        %358 = vmatprep.subr.bf16.mxu0 0
        %359 = vmatpush1.bf16.xpose.msra.mxu0 %v334
        %360 = vmatprep.subr.bf16.mxu0 0
        %361 = vmatpush1.bf16.xpose.msra.mxu0 %v333
        %362 = vmatprep.subr.bf16.mxu0 0
        %363 = vmatpush1.bf16.xpose.msra.mxu0 %v332
        %364 = vmatprep.subr.bf16.mxu0 0
        %365 = vmatpush2.bf16.xpose.msra.mxu0 0
        %366 = vmatprep.subr.bf16.mxu0 0
        %367 = vmatpush2.bf16.xpose.msra.mxu0 0
        %368 = vmatprep.subr.bf16.mxu0 0
        %369 = vmatpush2.bf16.xpose.msra.mxu0 0
        %370 = vmatprep.subr.bf16.mxu0 0
        %371 = vmatpush2.bf16.xpose.msra.mxu0 0
        %372 = vmatprep.subr.bf16.mxu0 0
        %373 = vmatpush2.bf16.xpose.msra.mxu0 0
        %374 = vmatprep.subr.bf16.mxu0 0
        %375 = vmatpush2.bf16.xpose.msra.mxu0 0
        %376 = vmatprep.subr.bf16.mxu0 0
        %377 = vmatpush2.bf16.xpose.msra.mxu0 0
        %378 = vmatprep.subr.bf16.mxu0 0
        %379 = vmatpush2.bf16.xpose.msra.mxu0 0
        %380 = vmatprep.mubr.bf16.mxu0 0
        %381 = vmatmul.mubr.bf16.gmra.mxu0 %v298
        %v382 = vpop.f32.mrf.mxu0
        %v383 = vadd.f32 0.0, %v382
        %v384 = vpop.f32.mrf.mxu0
        %v385 = vpop.f32.mrf.mxu0
        %v386 = vadd.f32 0.0, %v385
        %v387 = vpop.f32.mrf.mxu0
        %388 = vdwg.mxu0
        %v389 = vld [vmem:[%s266] sm:$0xff]
        %v390 = vld [vmem:[%s266 + $0x8] sm:$0xff]
        %v391 = vld [vmem:[%s272] sm:$0xff]
        %v392 = vld [vmem:[%s272 + $0x8] sm:$0xff]
        %v393 = vlog2.pop %v391
        %v394 = vmul.f32 %v393, 0.6931472
        %v395 = vlog2.pop %v392
        %v396 = vmul.f32 %v395, 0.6931472
        %v397 = vadd.f32 %v389, %v394
        %v398 = vadd.f32 %v390, %v396
        %400 = vset.pattern.permute.xlu0 0
        %401 = vperm.xlu0 %400, %v397
        %v402 = vpop.permute.xlu0 %401
        %405 = vset.pattern.permute.xlu0 0
        %406 = vperm.xlu0 %405, %v398
        %v407 = vpop.permute.xlu0 %406
        %v409 = vsub.f32 %v383, %v402
        %v410 = vsub.f32 %v386, %v407
        %v411 = vmul.f32 %v409, 1.442695
        %v412 = vpow.pop %v411
        %v413 = vmul.f32 %v410, 1.442695
        %v414 = vpow.pop %v413
        %s415 = smul.u32 %s20, 128
        %v416 = vlaneseq
        %v417 = vand.u32 %v416, 127
        %v418 = vstv %s415
        %v419 = vadd.s32 %v418, %v417
        %vm420 = vcmp.lt.s32.totalorder %v419, 200
        %v421 = vsel %vm420, %v412, 0.0
        %v422 = vsel %vm420, %v414, 0.0
        %v423 = vpack.c.bf16 %v422, %v421
        %v425 = vunpack.c.l.b16 %v423
        %v426 = vunpack.c.h.b16 %v423
        %v427 = vpack.c.b16 %v425, %v425
        %v428 = vpack.c.b16 %v426, %v426
        %431 = vst [vmem:[%s249] sm:$0xf] %v427
        %432 = vst [vmem:[%s249 + $0x4] sm:$0xf] %v428
        %s433 = sand.u32 %s141, 1
        %s434 = sand.u32 %s141, 1
        %s435 = smul.addr %s434, 8
        %s436 = scalar_lea.vmem [#allocation2], %s435
        // Predicated region
        $region37: #{_lambda_.11} parent=35 // pred_check
          %p437 = pneg %p151
        $region38: #{_lambda_.11} parent=35 // pred_check_branch
          %439 = sbr.rel (%p437) target = $region40
        $region39: #{_lambda_.11} parent=35 // pred_region
          %s440 = smul.u32 2, %s19
          %s441 = smul.addr %s440, 2
          %s442 = sadd.s32 %s20, %s441
          %s443 = smul.addr %s442, 4
          %s444 = scalar_lea.vmem %s4, %s443
          // Predicated region
          $region41: #{_lambda_.11} parent=39 // pred_check
            _
          $region42: #{_lambda_.11} parent=39 // pred_check_branch
            %446 = sbr.rel (0) target = $region44
          $region43: #{_lambda_.11} parent=39 // pred_region
            // Predicated region
            $region45: #{_lambda_.11} parent=43 // pred_check
              _
            $region46: #{_lambda_.11} parent=43 // pred_check_branch
              %448 = sbr.rel target = $region48
            $region47: #{_lambda_.11} parent=43 // pred_region
              // Predicated region
              $region60: #{_lambda_.11} parent=47 // pred_check
                _
              $region61: #{_lambda_.11} parent=47 // pred_check_branch
                %466 = sbr.rel (0) target = $region63
              $region62: #{_lambda_.11} parent=47 // pred_region
                loop: start=0, step=1, limit=1
                $region64: #{_lambda_.11} parent=62 // loop_pre_header
                  _
                $region65: #{_lambda_.11} parent=62 // loop_header
                  %s468 = sphi 0, %s472
                  %p469 = scmp.ge.s32.totalorder %s468, 1
                  %s473 = sphi %s436, %s436
                  %s474 = sphi %s444, %s444
                $region66: #{_lambda_.11} parent=62 // loop_header_branch
                  %471 = sbr.rel (%p469) target = $region70
                $region67: #{_lambda_.11} parent=62 // loop_body
                  _
                $region68: #{_lambda_.11} parent=62 // loop_footer
                  %s472 = sadd.s32 1, %s468
                $region69: #{_lambda_.11} parent=62 // loop_footer_branch
                  %467 = sbr.rel target = $region65
                $region70: #{_lambda_.11} parent=62 // loop_exit
                  _
                %s476 = ssub.s32 16, 1
                loop: start=0, step=1, limit=1
                $region71: #{_lambda_.11} parent=62 // loop_pre_header
                  _
                $region72: #{_lambda_.11} parent=62 // loop_header
                  %s478 = sphi 0, %s482
                  %p479 = scmp.ge.s32.totalorder %s478, 1
                  %s483 = sphi %s436, %s436
                  %s484 = sphi %s444, %s444
                $region73: #{_lambda_.11} parent=62 // loop_header_branch
                  %481 = sbr.rel (%p479) target = $region77
                $region74: #{_lambda_.11} parent=62 // loop_body
                  %v485 = vld [vmem:[%s483] sm:%s476]
                  %486 = vst [vmem:[%s484] sm:%s476] %v485
                  %v487 = vld [vmem:[%s483 + $0x4] sm:%s476]
                  %488 = vst [vmem:[%s484 + $0x8] sm:%s476] %v487
                $region75: #{_lambda_.11} parent=62 // loop_footer
                  %s482 = sadd.s32 1, %s478
                $region76: #{_lambda_.11} parent=62 // loop_footer_branch
                  %477 = sbr.rel target = $region72
                $region77: #{_lambda_.11} parent=62 // loop_exit
                  _
              $region63: #{_lambda_.11} parent=47 // pred_fallthru
                _
            $region48: #{_lambda_.11} parent=43 // pred_fallthru
              _
            // Predicated region
            $region49: #{_lambda_.11} parent=43 // pred_check
              _
            $region50: #{_lambda_.11} parent=43 // pred_check_branch
              %450 = sbr.rel (0) target = $region52
            $region51: #{_lambda_.11} parent=43 // pred_region
              %s452 = ssub.s32 16, 1
              loop: start=0, step=1, limit=1
              $region53: #{_lambda_.11} parent=51 // loop_pre_header
                _
              $region54: #{_lambda_.11} parent=51 // loop_header
                %s454 = sphi 0, %s458
                %p455 = scmp.ge.s32.totalorder %s454, 1
                %s459 = sphi %s436, %s436
                %s460 = sphi %s444, %s444
              $region55: #{_lambda_.11} parent=51 // loop_header_branch
                %457 = sbr.rel (%p455) target = $region59
              $region56: #{_lambda_.11} parent=51 // loop_body
                %v461 = vld [vmem:[%s459] sm:%s452]
                %462 = vst [vmem:[%s460] sm:%s452] %v461
                %v463 = vld [vmem:[%s459 + $0x4] sm:%s452]
                %464 = vst [vmem:[%s460 + $0x8] sm:%s452] %v463
              $region57: #{_lambda_.11} parent=51 // loop_footer
                %s458 = sadd.s32 1, %s454
              $region58: #{_lambda_.11} parent=51 // loop_footer_branch
                %453 = sbr.rel target = $region54
              $region59: #{_lambda_.11} parent=51 // loop_exit
                _
            $region52: #{_lambda_.11} parent=43 // pred_fallthru
              _
          $region44: #{_lambda_.11} parent=39 // pred_fallthru
            _
          %489 = vnop
        $region40: #{_lambda_.11} parent=35 // pred_fallthru
          _
      $region36: #{_lambda_.11} parent=5 // pred_fallthru
        _
      %p490 = scmp.le.s32.totalorder 2, %s10
      // Predicated region
      $region78: #{_lambda_.11} parent=5 // pred_check
        %p491 = pneg %p490
      $region79: #{_lambda_.11} parent=5 // pred_check_branch
        %493 = sbr.rel (%p491) target = $region81
      $region80: #{_lambda_.11} parent=5 // pred_region
        %s494 = ssub.s32 %s10, 2
        // Predicated region
        $region82: #{_lambda_.11} parent=80 // pred_check
          %p495 = pneg %p157
        $region83: #{_lambda_.11} parent=80 // pred_check_branch
          %497 = sbr.rel (%p495) target = $region85
        $region84: #{_lambda_.11} parent=80 // pred_region
          %s498 = sand.u32 %s142, 1
          %s499 = sand.u32 %s142, 1
          %s500 = smul.addr %s499, 8
          %s501 = scalar_lea.vmem [#allocation2], %s500
        $region85: #{_lambda_.11} parent=80 // pred_fallthru
          _
      $region81: #{_lambda_.11} parent=5 // pred_fallthru
        _
    $region6: #{_lambda_.11} parent=1 // loop_footer
      %s14 = sadd.s32 1, %s10
    $region7: #{_lambda_.11} parent=1 // loop_footer_branch
      %9 = sbr.rel target = $region3
    $region8: #{_lambda_.11} parent=1 // loop_exit
      _

// kernel: _lambda_.10
$region0: #{_lambda_.10}
  #allocation0 [shape = 'u32[]', space=smem, size = 0x4, offset = 0x4, fixed_abs, tag = 'smem constant byte address 0x4 - core index']
  #allocation1 [shape = 'u32[144,128]{1,0:T(1,128)}', space=vmem, size = 0x12000, scoped, tag = 'internal scratch']
  %s0 = inlined_call_operand.vmem [shape: bf16[256,128], index: 0, kind: input, shape index: {}]
  %s1 = inlined_call_operand.vmem [shape: bf16[16,128], index: 1, kind: input, shape index: {}]
  %s2 = inlined_call_operand.vmem [shape: f32[16,1], index: 2, kind: output, shape index: {0}]
  %s3 = inlined_call_operand.vmem [shape: f32[16,1], index: 3, kind: output, shape index: {1}]
  %4 = xla_tuple %s2, %s3
  %s5 = sld [smem:[#allocation0]]
  $region53: #{_lambda_.10} parent=0
    _
  %s7 = ssub.s32 1, %s5
  %s8 = scalar_select 0, %s7, %s5
  loop: start=0, step=1, limit=4
  $region2: #{_lambda_.10} parent=0 // loop_pre_header
    _
  $region3: #{_lambda_.10} parent=0 // loop_header
    %s10 = sphi 0, %s14
    %p11 = scmp.ge.s32.totalorder %s10, 4
    %s17 = sphi 0, %s29
    %s18 = sphi 0, %s25
    %s19 = sphi 0, %s17
    %s20 = sphi 0, %s18
    %s21 = sphi 0, %s19
    %s22 = sphi 0, %s20
    %s32 = sphi 0, %s34
    %s35 = sphi 0, %s32
    %s36 = sphi 0, %s35
    %s52 = sphi 0, %s36
    %s58 = sphi 0, %s60
    %s61 = sphi 0, %s58
    %s62 = sphi 0, %s61
    %s78 = sphi 0, %s62
    %s84 = sphi 0, %s86
    %s87 = sphi 0, %s84
    %s88 = sphi 0, %s87
    %s104 = sphi 0, %s88
    %s110 = sphi 0, %s112
    %s113 = sphi 0, %s110
    %s114 = sphi 0, %s113
    %s130 = sphi 0, %s114
  $region4: #{_lambda_.10} parent=0 // loop_header_branch
    %13 = sbr.rel (%p11) target = $region8
  $region5: #{_lambda_.10} parent=0 // loop_body
    %s15 = ssub.s32 %s10, 1
    %s16 = ssub.s32 %s10, 2
    %s23 = sadd.s32 1, %s18
    %p24 = scmp.ge.s32.totalorder %s23, 2
    %s25 = scalar_select %p24, 0, %s23
    %s26 = sadd.s32 1, %s17
    %s27 = scalar_select %p24, %s26, %s17
    %p28 = scmp.ge.s32.totalorder %s27, 1
    %s29 = scalar_select %p28, 0, %s27
    %s30 = ssub.s32 %s18, %s25
    %p31 = scmp.eq.s32.totalorder %s30, 0
    %s33 = sadd.s32 %s32, 1
    %s34 = scalar_select %p31, %s32, %s33
    %p37 = pneg %p31
    %p38 = scmp.eq.s32.totalorder %s10, 1
    %p39 = por %p37, %p38
    %p40 = scmp.ne.s32.totalorder %s32, %s35
    %p41 = scmp.eq.s32.totalorder %s10, 0
    %p42 = por %p40, %p41
    %p43 = scmp.ne.s32.totalorder %s32, %s35
    %p44 = scmp.eq.s32.totalorder %s15, 1
    %p45 = por %p43, %p44
    %p46 = scmp.ne.s32.totalorder %s35, %s36
    %p47 = scmp.eq.s32.totalorder %s15, 0
    %p48 = por %p46, %p47
    %p49 = scmp.ne.s32.totalorder %s35, %s36
    %p50 = scmp.eq.s32.totalorder %s16, 1
    %p51 = por %p49, %p50
    %p53 = scmp.ne.s32.totalorder %s36, %s52
    %p54 = scmp.eq.s32.totalorder %s16, 0
    %p55 = por %p53, %p54
    %s56 = ssub.s32 %s17, %s29
    %p57 = scmp.eq.s32.totalorder %s56, 0
    %s59 = sadd.s32 %s58, 1
    %s60 = scalar_select %p57, %s58, %s59
    %p63 = pneg %p57
    %p64 = scmp.eq.s32.totalorder %s10, 1
    %p65 = por %p63, %p64
    %p66 = scmp.ne.s32.totalorder %s58, %s61
    %p67 = scmp.eq.s32.totalorder %s10, 0
    %p68 = por %p66, %p67
    %p69 = scmp.ne.s32.totalorder %s58, %s61
    %p70 = scmp.eq.s32.totalorder %s15, 1
    %p71 = por %p69, %p70
    %p72 = scmp.ne.s32.totalorder %s61, %s62
    %p73 = scmp.eq.s32.totalorder %s15, 0
    %p74 = por %p72, %p73
    %p75 = scmp.ne.s32.totalorder %s61, %s62
    %p76 = scmp.eq.s32.totalorder %s16, 1
    %p77 = por %p75, %p76
    %p79 = scmp.ne.s32.totalorder %s62, %s78
    %p80 = scmp.eq.s32.totalorder %s16, 0
    %p81 = por %p79, %p80
    %s82 = ssub.s32 %s17, %s29
    %p83 = scmp.eq.s32.totalorder %s82, 0
    %s85 = sadd.s32 %s84, 1
    %s86 = scalar_select %p83, %s84, %s85
    %p89 = pneg %p83
    %p90 = scmp.eq.s32.totalorder %s10, 1
    %p91 = por %p89, %p90
    %p92 = scmp.ne.s32.totalorder %s84, %s87
    %p93 = scmp.eq.s32.totalorder %s10, 0
    %p94 = por %p92, %p93
    %p95 = scmp.ne.s32.totalorder %s84, %s87
    %p96 = scmp.eq.s32.totalorder %s15, 1
    %p97 = por %p95, %p96
    %p98 = scmp.ne.s32.totalorder %s87, %s88
    %p99 = scmp.eq.s32.totalorder %s15, 0
    %p100 = por %p98, %p99
    %p101 = scmp.ne.s32.totalorder %s87, %s88
    %p102 = scmp.eq.s32.totalorder %s16, 1
    %p103 = por %p101, %p102
    %p105 = scmp.ne.s32.totalorder %s88, %s104
    %p106 = scmp.eq.s32.totalorder %s16, 0
    %p107 = por %p105, %p106
    %s108 = ssub.s32 %s17, %s29
    %p109 = scmp.eq.s32.totalorder %s108, 0
    %s111 = sadd.s32 %s110, 1
    %s112 = scalar_select %p109, %s110, %s111
    %p115 = pneg %p109
    %p116 = scmp.eq.s32.totalorder %s10, 1
    %p117 = por %p115, %p116
    %p118 = scmp.ne.s32.totalorder %s110, %s113
    %p119 = scmp.eq.s32.totalorder %s10, 0
    %p120 = por %p118, %p119
    %p121 = scmp.ne.s32.totalorder %s110, %s113
    %p122 = scmp.eq.s32.totalorder %s15, 1
    %p123 = por %p121, %p122
    %p124 = scmp.ne.s32.totalorder %s113, %s114
    %p125 = scmp.eq.s32.totalorder %s15, 0
    %p126 = por %p124, %p125
    %p127 = scmp.ne.s32.totalorder %s113, %s114
    %p128 = scmp.eq.s32.totalorder %s16, 1
    %p129 = por %p127, %p128
    %p131 = scmp.ne.s32.totalorder %s114, %s130
    %p132 = scmp.eq.s32.totalorder %s16, 0
    %p133 = por %p131, %p132
    %p134 = scmp.le.s32.totalorder 1, %s10
    %p135 = scmp.lt.s32.totalorder %s10, 3
    %p136 = pnand %p134, %p135
    %p137 = pneg %p136
    // Predicated region
    $region9: #{_lambda_.10} parent=5 // pred_check
      _
    $region10: #{_lambda_.10} parent=5 // pred_check_branch
      %139 = sbr.rel (%p136) target = $region12
    $region11: #{_lambda_.10} parent=5 // pred_region
      %s140 = ssub.s32 %s10, 1
      // Predicated region
      $region13: #{_lambda_.10} parent=11 // pred_check
        %p141 = pneg %p74
      $region14: #{_lambda_.10} parent=11 // pred_check_branch
        %143 = sbr.rel (%p141) target = $region16
      $region15: #{_lambda_.10} parent=11 // pred_region
        %s144 = smul.u32 2, %s19
        %p145 = scmp.lt.s32.totalorder %s144, 1
        %s146 = scalar_select %p145, %s144, 1
        %s147 = smul.addr %s146, 4
        %s148 = scalar_lea.vmem %s1, %s147
        %s149 = smul.u32 2, %s19
      $region16: #{_lambda_.10} parent=11 // pred_fallthru
        _
    $region12: #{_lambda_.10} parent=5 // pred_fallthru
      _
    %p150 = scmp.lt.s32.totalorder %s10, 2
    // Predicated region
    $region17: #{_lambda_.10} parent=5 // pred_check
      %p151 = pneg %p150
    $region18: #{_lambda_.10} parent=5 // pred_check_branch
      %153 = sbr.rel (%p151) target = $region20
    $region19: #{_lambda_.10} parent=5 // pred_region
      // Predicated region
      $region21: #{_lambda_.10} parent=19 // pred_check
        %p154 = pneg %p42
      $region22: #{_lambda_.10} parent=19 // pred_check_branch
        %156 = sbr.rel (%p154) target = $region24
      $region23: #{_lambda_.10} parent=19 // pred_region
        %s157 = smul.u32 16, %s18
        %p158 = scmp.lt.s32.totalorder %s157, 31
        %s159 = scalar_select %p158, %s157, 31
        %s160 = smul.addr %s159, 4
        %s161 = scalar_lea.vmem %s0, %s160
        %s162 = smul.u32 16, %s18
      $region24: #{_lambda_.10} parent=19 // pred_fallthru
        _
    $region20: #{_lambda_.10} parent=5 // pred_fallthru
      _
    %p163 = scmp.le.s32.totalorder 1, %s10
    %p164 = scmp.lt.s32.totalorder %s10, 3
    %p165 = pnand %p163, %p164
    %p166 = pneg %p165
    // Predicated region
    $region25: #{_lambda_.10} parent=5 // pred_check
      _
    $region26: #{_lambda_.10} parent=5 // pred_check_branch
      %168 = sbr.rel (%p165) target = $region28
    $region27: #{_lambda_.10} parent=5 // pred_region
      %s169 = ssub.s32 %s10, 1
      %s170 = smul.u32 16, %s20
      %p171 = scmp.lt.s32.totalorder %s170, 31
      %s172 = scalar_select %p171, %s170, 31
      %s173 = smul.addr %s172, 4
      %s174 = scalar_lea.vmem %s0, %s173
      %p175 = pneg %p48
      %p176 = pneg %p45
      %s177 = smul.u32 2, %s19
      %p178 = scmp.lt.s32.totalorder %s177, 1
      %s179 = scalar_select %p178, %s177, 1
      %s180 = smul.addr %s179, 4
      %s181 = scalar_lea.vmem %s1, %s180
      %p182 = pneg %p74
      %p183 = pneg %p71
      %p184 = pneg %p100
      %p185 = pneg %p97
      %s186 = smul.u32 2, %s19
      %p187 = scmp.lt.s32.totalorder %s186, 1
      %s188 = scalar_select %p187, %s186, 1
      %s189 = smul.addr %s188, 8
      %s190 = scalar_lea.vmem %s2, %s189
      %p191 = pneg %p126
      %p192 = pneg %p123
      %s193 = smul.u32 2, %s19
      %p194 = scmp.lt.s32.totalorder %s193, 1
      %s195 = scalar_select %p194, %s193, 1
      %s196 = smul.addr %s195, 8
      %s197 = scalar_lea.vmem %s3, %s196
      %s198 = smul.u32 16, %s20
      %p199 = scmp.lt.s32.totalorder %s198, 31
      %s200 = scalar_select %p199, %s198, 31
      %s201 = smul.addr %s200, 4
      %s202 = scalar_lea.vmem %s0, %s201
      %s203 = smul.u32 16, %s20
      %s204 = smul.u32 2, %s19
      %p205 = scmp.lt.s32.totalorder %s204, 1
      %s206 = scalar_select %p205, %s204, 1
      %s207 = smul.addr %s206, 4
      %s208 = scalar_lea.vmem %s1, %s207
      %s209 = smul.u32 2, %s19
      %s210 = smul.u32 2, %s19
      %p211 = scmp.lt.s32.totalorder %s210, 1
      %s212 = scalar_select %p211, %s210, 1
      %s213 = smul.addr %s212, 8
      %s214 = scalar_lea.vmem %s2, %s213
      %s215 = smul.u32 2, %s19
      %s216 = smul.u32 2, %s19
      %p217 = scmp.lt.s32.totalorder %s216, 1
      %s218 = scalar_select %p217, %s216, 1
      %s219 = smul.addr %s218, 8
      %s220 = scalar_lea.vmem %s3, %s219
      %s221 = smul.u32 2, %s19
      %p223 = scmp.eq.s32.totalorder %s20, 0
      // Predicated region
      $region29: #{_lambda_.10} parent=27 // pred_check
        %p224 = pneg %p223
      $region30: #{_lambda_.10} parent=27 // pred_check_branch
        %226 = sbr.rel (%p224) target = $region32
      $region31: #{_lambda_.10} parent=27 // pred_region
        %vm227 = vcmask 7168
        %228 = vst.msk [vmem:[%s214] sm:$0xff] %vm227, -1e+30
        %229 = vst.msk [vmem:[%s214 + $0x8] sm:$0xff] %vm227, -1e+30
        %230 = vst.msk [vmem:[%s220] sm:$0xff] %vm227, 0.0
        %231 = vst.msk [vmem:[%s220 + $0x8] sm:$0xff] %vm227, 0.0
      $region32: #{_lambda_.10} parent=27 // pred_fallthru
        _
      %v232 = vld [vmem:[%s208] sm:$0xf]
      %v233 = vld [vmem:[%s208 + $0x4] sm:$0xf]
      %v234 = vld [vmem:[%s202] sm:$0xf]
      %v235 = vld [vmem:[%s202 + $0x4] sm:$0xf]
      %v236 = vld [vmem:[%s202 + $0x8] sm:$0xf]
      %v237 = vld [vmem:[%s202 + $0xc] sm:$0xf]
      %v238 = vld [vmem:[%s202 + $0x10] sm:$0xf]
      %v239 = vld [vmem:[%s202 + $0x14] sm:$0xf]
      %v240 = vld [vmem:[%s202 + $0x18] sm:$0xf]
      %v241 = vld [vmem:[%s202 + $0x1c] sm:$0xf]
      %v242 = vld [vmem:[%s202 + $0x20] sm:$0xf]
      %v243 = vld [vmem:[%s202 + $0x24] sm:$0xf]
      %v244 = vld [vmem:[%s202 + $0x28] sm:$0xf]
      %v245 = vld [vmem:[%s202 + $0x2c] sm:$0xf]
      %v246 = vld [vmem:[%s202 + $0x30] sm:$0xf]
      %v247 = vld [vmem:[%s202 + $0x34] sm:$0xf]
      %v248 = vld [vmem:[%s202 + $0x38] sm:$0xf]
      %v249 = vld [vmem:[%s202 + $0x3c] sm:$0xf]
      %v252 = vunpack.c.l.b16 %v232
      %v253 = vunpack.c.l.b16 %v233
      %v254 = vpack.c.b16 %v253, %v252
      %v272 = vunpack.c.l.b16 %v234
      %v273 = vunpack.c.l.b16 %v235
      %v274 = vunpack.c.l.b16 %v236
      %v275 = vunpack.c.l.b16 %v237
      %v276 = vunpack.c.l.b16 %v238
      %v277 = vunpack.c.l.b16 %v239
      %v278 = vunpack.c.l.b16 %v240
      %v279 = vunpack.c.l.b16 %v241
      %v280 = vunpack.c.l.b16 %v242
      %v281 = vunpack.c.l.b16 %v243
      %v282 = vunpack.c.l.b16 %v244
      %v283 = vunpack.c.l.b16 %v245
      %v284 = vunpack.c.l.b16 %v246
      %v285 = vunpack.c.l.b16 %v247
      %v286 = vunpack.c.l.b16 %v248
      %v287 = vunpack.c.l.b16 %v249
      %v288 = vpack.c.b16 %v273, %v272
      %v289 = vpack.c.b16 %v275, %v274
      %v290 = vpack.c.b16 %v277, %v276
      %v291 = vpack.c.b16 %v279, %v278
      %v292 = vpack.c.b16 %v281, %v280
      %v293 = vpack.c.b16 %v283, %v282
      %v294 = vpack.c.b16 %v285, %v284
      %v295 = vpack.c.b16 %v287, %v286
      %304 = vmatprep.subr.bf16.mxu0 0
      %305 = vmatpush1.bf16.xpose.msra.mxu0 %v295
      %306 = vmatprep.subr.bf16.mxu0 0
      %307 = vmatpush1.bf16.xpose.msra.mxu0 %v294
      %308 = vmatprep.subr.bf16.mxu0 0
      %309 = vmatpush1.bf16.xpose.msra.mxu0 %v293
      %310 = vmatprep.subr.bf16.mxu0 0
      %311 = vmatpush1.bf16.xpose.msra.mxu0 %v292
      %312 = vmatprep.subr.bf16.mxu0 0
      %313 = vmatpush1.bf16.xpose.msra.mxu0 %v291
      %314 = vmatprep.subr.bf16.mxu0 0
      %315 = vmatpush1.bf16.xpose.msra.mxu0 %v290
      %316 = vmatprep.subr.bf16.mxu0 0
      %317 = vmatpush1.bf16.xpose.msra.mxu0 %v289
      %318 = vmatprep.subr.bf16.mxu0 0
      %319 = vmatpush1.bf16.xpose.msra.mxu0 %v288
      %320 = vmatprep.subr.bf16.mxu0 0
      %321 = vmatpush2.bf16.xpose.msra.mxu0 0
      %322 = vmatprep.subr.bf16.mxu0 0
      %323 = vmatpush2.bf16.xpose.msra.mxu0 0
      %324 = vmatprep.subr.bf16.mxu0 0
      %325 = vmatpush2.bf16.xpose.msra.mxu0 0
      %326 = vmatprep.subr.bf16.mxu0 0
      %327 = vmatpush2.bf16.xpose.msra.mxu0 0
      %328 = vmatprep.subr.bf16.mxu0 0
      %329 = vmatpush2.bf16.xpose.msra.mxu0 0
      %330 = vmatprep.subr.bf16.mxu0 0
      %331 = vmatpush2.bf16.xpose.msra.mxu0 0
      %332 = vmatprep.subr.bf16.mxu0 0
      %333 = vmatpush2.bf16.xpose.msra.mxu0 0
      %334 = vmatprep.subr.bf16.mxu0 0
      %335 = vmatpush2.bf16.xpose.msra.mxu0 0
      %336 = vmatprep.mubr.bf16.mxu0 0
      %337 = vmatmul.mubr.bf16.gmra.mxu0 %v254
      %v338 = vpop.f32.mrf.mxu0
      %v339 = vadd.f32 0.0, %v338
      %v340 = vpop.f32.mrf.mxu0
      %v341 = vpop.f32.mrf.mxu0
      %v342 = vadd.f32 0.0, %v341
      %v343 = vpop.f32.mrf.mxu0
      %344 = vdwg.mxu0
      %s345 = smul.u32 %s20, 128
      %v346 = vlaneseq
      %v347 = vand.u32 %v346, 127
      %v348 = vstv %s345
      %v349 = vadd.s32 %v348, %v347
      %vm350 = vcmp.lt.s32.totalorder %v349, 200
      %v351 = vsel %vm350, %v339, -1e+30
      %v352 = vsel %vm350, %v342, -1e+30
      %353 = vmax.xlane.f32.xlu0 %v351
      %v354 = vpop.xlane.xlu0 %353
      %355 = vmax.xlane.f32.xlu0 %v352
      %v356 = vpop.xlane.xlu0 %355
      %v357 = vld [vmem:[%s214] sm:$0xff]
      %v358 = vld [vmem:[%s214 + $0x8] sm:$0xff]
      %v359 = vmax.f32 %v357, %v354
      %v360 = vmax.f32 %v358, %v356
      %v361 = vld [vmem:[%s220] sm:$0xff]
      %v362 = vld [vmem:[%s220 + $0x8] sm:$0xff]
      %v363 = vsub.f32 %v357, %v359
      %v364 = vsub.f32 %v358, %v360
      %v365 = vmul.f32 %v363, 1.442695
      %v366 = vpow.pop %v365
      %v367 = vmul.f32 %v364, 1.442695
      %v368 = vpow.pop %v367
      %v369 = vmul.f32 %v361, %v366
      %v370 = vmul.f32 %v362, %v368
      %372 = vset.pattern.permute.xlu0 0
      %373 = vperm.xlu0 %372, %v359
      %v374 = vpop.permute.xlu0 %373
      %377 = vset.pattern.permute.xlu0 0
      %378 = vperm.xlu0 %377, %v360
      %v379 = vpop.permute.xlu0 %378
      %v381 = vsub.f32 %v351, %v374
      %v382 = vsub.f32 %v352, %v379
      %v383 = vmul.f32 %v381, 1.442695
      %v384 = vpow.pop %v383
      %v385 = vmul.f32 %v382, 1.442695
      %v386 = vpow.pop %v385
      %387 = vadd.xlane.f32.xlu0 %v384
      %v388 = vpop.xlane.xlu0 %387
      %389 = vadd.xlane.f32.xlu0 %v386
      %v390 = vpop.xlane.xlu0 %389
      %v391 = vadd.f32 %v369, %v388
      %v392 = vadd.f32 %v370, %v390
      %vm393 = vcmask 7168
      %394 = vst.msk [vmem:[%s220] sm:$0xff] %vm393, %v391
      %395 = vst.msk [vmem:[%s220 + $0x8] sm:$0xff] %vm393, %v392
      %396 = vst.msk [vmem:[%s214] sm:$0xff] %vm393, %v359
      %397 = vst.msk [vmem:[%s214 + $0x8] sm:$0xff] %vm393, %v360
      %s398 = smul.u32 2, %s19
      %p399 = scmp.lt.s32.totalorder %s398, 1
      %s400 = scalar_select %p399, %s398, 1
      %s401 = smul.addr %s400, 8
      %s402 = scalar_lea.vmem %s2, %s401
      %s403 = smul.u32 2, %s19
      %p404 = scmp.lt.s32.totalorder %s403, 1
      %s405 = scalar_select %p404, %s403, 1
      %s406 = smul.addr %s405, 8
      %s407 = scalar_lea.vmem %s3, %s406
      // Predicated region
      $region33: #{_lambda_.10} parent=27 // pred_check
        %p408 = pneg %p97
      $region34: #{_lambda_.10} parent=27 // pred_check_branch
        %410 = sbr.rel (%p408) target = $region36
      $region35: #{_lambda_.10} parent=27 // pred_region
        %s411 = smul.u32 2, %s19
      $region36: #{_lambda_.10} parent=27 // pred_fallthru
        _
      // Predicated region
      $region37: #{_lambda_.10} parent=27 // pred_check
        %p412 = pneg %p123
      $region38: #{_lambda_.10} parent=27 // pred_check_branch
        %414 = sbr.rel (%p412) target = $region40
      $region39: #{_lambda_.10} parent=27 // pred_region
        %s415 = smul.u32 2, %s19
      $region40: #{_lambda_.10} parent=27 // pred_fallthru
        _
      // Predicated region
      $region41: #{_lambda_.10} parent=27 // pred_check
        %p416 = pneg %p97
      $region42: #{_lambda_.10} parent=27 // pred_check_branch
        %418 = sbr.rel (%p416) target = $region44
      $region43: #{_lambda_.10} parent=27 // pred_region
        %s419 = smul.u32 2, %s19
        %p420 = scmp.lt.s32.totalorder %s419, 1
        %s421 = scalar_select %p420, %s419, 1
        %s422 = smul.addr %s421, 8
        %s423 = scalar_lea.vmem %s2, %s422
      $region44: #{_lambda_.10} parent=27 // pred_fallthru
        _
      // Predicated region
      $region45: #{_lambda_.10} parent=27 // pred_check
        %p424 = pneg %p123
      $region46: #{_lambda_.10} parent=27 // pred_check_branch
        %426 = sbr.rel (%p424) target = $region48
      $region47: #{_lambda_.10} parent=27 // pred_region
        %s427 = smul.u32 2, %s19
        %p428 = scmp.lt.s32.totalorder %s427, 1
        %s429 = scalar_select %p428, %s427, 1
        %s430 = smul.addr %s429, 8
        %s431 = scalar_lea.vmem %s3, %s430
      $region48: #{_lambda_.10} parent=27 // pred_fallthru
        _
    $region28: #{_lambda_.10} parent=5 // pred_fallthru
      _
    %p432 = scmp.le.s32.totalorder 2, %s10
    // Predicated region
    $region49: #{_lambda_.10} parent=5 // pred_check
      %p433 = pneg %p432
    $region50: #{_lambda_.10} parent=5 // pred_check_branch
      %435 = sbr.rel (%p433) target = $region52
    $region51: #{_lambda_.10} parent=5 // pred_region
      %s436 = ssub.s32 %s10, 2
    $region52: #{_lambda_.10} parent=5 // pred_fallthru
      _
  $region6: #{_lambda_.10} parent=0 // loop_footer
    %s14 = sadd.s32 1, %s10
  $region7: #{_lambda_.10} parent=0 // loop_footer_branch
    %9 = sbr.rel target = $region3
  $region8: #{_lambda_.10} parent=0 // loop_exit
    _

// kernel: _lambda_.14
$region0: #{_lambda_.14}
  #allocation0 [shape = 'u32[]', space=smem, size = 0x4, offset = 0x4, fixed_abs, tag = 'smem constant byte address 0x4 - core index']
  #allocation1 [shape = 'u32[144,128]{1,0:T(1,128)}', space=vmem, size = 0x12000, scoped, tag = 'internal scratch']
  %s0 = inlined_call_operand.vmem [shape: f32[8,16], index: 0, kind: input, shape index: {}]
  %s1 = inlined_call_operand.vmem [shape: bf16[16,256], index: 1, kind: input, shape index: {}]
  %s2 = inlined_call_operand.vmem [shape: bf16[8,256], index: 2, kind: input, shape index: {}]
  %s3 = inlined_call_operand.vmem [shape: f32[8,1], index: 3, kind: output, shape index: {}]
  %s4 = sld [smem:[#allocation0]]
  $region90: #{_lambda_.14} parent=0
    _
  %s6 = ssub.s32 1, %s4
  %s7 = scalar_select 0, %s6, %s4
  $region1: #{_lambda_.14} parent=0
    #allocation2 [shape = 'u8[8192]{0}', space=vmem, size = 0x2000, scoped, tag = 'input window, operand 1']
    loop: start=0, step=1, limit=4
    $region2: #{_lambda_.14} parent=1 // loop_pre_header
      _
    $region3: #{_lambda_.14} parent=1 // loop_header
      %s9 = sphi 0, %s13
      %p10 = scmp.ge.s32.totalorder %s9, 4
      %s16 = sphi 0, %s28
      %s17 = sphi 0, %s24
      %s18 = sphi 0, %s16
      %s19 = sphi 0, %s17
      %s20 = sphi 0, %s18
      %s21 = sphi 0, %s19
      %s31 = sphi 0, %s33
      %s34 = sphi 0, %s31
      %s35 = sphi 0, %s34
      %s51 = sphi 0, %s35
      %s57 = sphi 0, %s59
      %s60 = sphi 0, %s57
      %s61 = sphi 0, %s60
      %s77 = sphi 0, %s61
      %s85 = sphi 0, %s87
      %s88 = sphi 0, %s85
      %s89 = sphi 0, %s88
      %s105 = sphi 0, %s89
      %s111 = sphi 0, %s113
      %s114 = sphi 0, %s111
      %s115 = sphi 0, %s114
      %s131 = sphi 0, %s115
    $region4: #{_lambda_.14} parent=1 // loop_header_branch
      %12 = sbr.rel (%p10) target = $region8
    $region5: #{_lambda_.14} parent=1 // loop_body
      %s14 = ssub.s32 %s9, 1
      %s15 = ssub.s32 %s9, 2
      %s22 = sadd.s32 1, %s17
      %p23 = scmp.ge.s32.totalorder %s22, 2
      %s24 = scalar_select %p23, 0, %s22
      %s25 = sadd.s32 1, %s16
      %s26 = scalar_select %p23, %s25, %s16
      %p27 = scmp.ge.s32.totalorder %s26, 1
      %s28 = scalar_select %p27, 0, %s26
      %s29 = ssub.s32 %s16, %s28
      %p30 = scmp.eq.s32.totalorder %s29, 0
      %s32 = sadd.s32 %s31, 1
      %s33 = scalar_select %p30, %s31, %s32
      %p36 = pneg %p30
      %p37 = scmp.eq.s32.totalorder %s9, 1
      %p38 = por %p36, %p37
      %p39 = scmp.ne.s32.totalorder %s31, %s34
      %p40 = scmp.eq.s32.totalorder %s9, 0
      %p41 = por %p39, %p40
      %p42 = scmp.ne.s32.totalorder %s31, %s34
      %p43 = scmp.eq.s32.totalorder %s14, 1
      %p44 = por %p42, %p43
      %p45 = scmp.ne.s32.totalorder %s34, %s35
      %p46 = scmp.eq.s32.totalorder %s14, 0
      %p47 = por %p45, %p46
      %p48 = scmp.ne.s32.totalorder %s34, %s35
      %p49 = scmp.eq.s32.totalorder %s15, 1
      %p50 = por %p48, %p49
      %p52 = scmp.ne.s32.totalorder %s35, %s51
      %p53 = scmp.eq.s32.totalorder %s15, 0
      %p54 = por %p52, %p53
      %s55 = ssub.s32 %s17, %s24
      %p56 = scmp.eq.s32.totalorder %s55, 0
      %s58 = sadd.s32 %s57, 1
      %s59 = scalar_select %p56, %s57, %s58
      %p62 = pneg %p56
      %p63 = scmp.eq.s32.totalorder %s9, 1
      %p64 = por %p62, %p63
      %p65 = scmp.ne.s32.totalorder %s57, %s60
      %p66 = scmp.eq.s32.totalorder %s9, 0
      %p67 = por %p65, %p66
      %p68 = scmp.ne.s32.totalorder %s57, %s60
      %p69 = scmp.eq.s32.totalorder %s14, 1
      %p70 = por %p68, %p69
      %p71 = scmp.ne.s32.totalorder %s60, %s61
      %p72 = scmp.eq.s32.totalorder %s14, 0
      %p73 = por %p71, %p72
      %p74 = scmp.ne.s32.totalorder %s60, %s61
      %p75 = scmp.eq.s32.totalorder %s15, 1
      %p76 = por %p74, %p75
      %p78 = scmp.ne.s32.totalorder %s61, %s77
      %p79 = scmp.eq.s32.totalorder %s15, 0
      %p80 = por %p78, %p79
      %s81 = ssub.s32 %s16, %s28
      %s82 = ssub.s32 %s17, %s24
      %s83 = sor.u32 %s81, %s82
      %p84 = scmp.eq.s32.totalorder %s83, 0
      %s86 = sadd.s32 %s85, 1
      %s87 = scalar_select %p84, %s85, %s86
      %p90 = pneg %p84
      %p91 = scmp.eq.s32.totalorder %s9, 1
      %p92 = por %p90, %p91
      %p93 = scmp.ne.s32.totalorder %s85, %s88
      %p94 = scmp.eq.s32.totalorder %s9, 0
      %p95 = por %p93, %p94
      %p96 = scmp.ne.s32.totalorder %s85, %s88
      %p97 = scmp.eq.s32.totalorder %s14, 1
      %p98 = por %p96, %p97
      %p99 = scmp.ne.s32.totalorder %s88, %s89
      %p100 = scmp.eq.s32.totalorder %s14, 0
      %p101 = por %p99, %p100
      %p102 = scmp.ne.s32.totalorder %s88, %s89
      %p103 = scmp.eq.s32.totalorder %s15, 1
      %p104 = por %p102, %p103
      %p106 = scmp.ne.s32.totalorder %s89, %s105
      %p107 = scmp.eq.s32.totalorder %s15, 0
      %p108 = por %p106, %p107
      %s109 = ssub.s32 %s16, %s28
      %p110 = scmp.eq.s32.totalorder %s109, 0
      %s112 = sadd.s32 %s111, 1
      %s113 = scalar_select %p110, %s111, %s112
      %p116 = pneg %p110
      %p117 = scmp.eq.s32.totalorder %s9, 1
      %p118 = por %p116, %p117
      %p119 = scmp.ne.s32.totalorder %s111, %s114
      %p120 = scmp.eq.s32.totalorder %s9, 0
      %p121 = por %p119, %p120
      %p122 = scmp.ne.s32.totalorder %s111, %s114
      %p123 = scmp.eq.s32.totalorder %s14, 1
      %p124 = por %p122, %p123
      %p125 = scmp.ne.s32.totalorder %s114, %s115
      %p126 = scmp.eq.s32.totalorder %s14, 0
      %p127 = por %p125, %p126
      %p128 = scmp.ne.s32.totalorder %s114, %s115
      %p129 = scmp.eq.s32.totalorder %s15, 1
      %p130 = por %p128, %p129
      %p132 = scmp.ne.s32.totalorder %s115, %s131
      %p133 = scmp.eq.s32.totalorder %s15, 0
      %p134 = por %p132, %p133
      %p135 = scmp.le.s32.totalorder 1, %s9
      %p136 = scmp.lt.s32.totalorder %s9, 3
      %p137 = pnand %p135, %p136
      %p138 = pneg %p137
      // Predicated region
      $region9: #{_lambda_.14} parent=5 // pred_check
        _
      $region10: #{_lambda_.14} parent=5 // pred_check_branch
        %140 = sbr.rel (%p137) target = $region12
      $region11: #{_lambda_.14} parent=5 // pred_region
        %s141 = ssub.s32 %s9, 1
        // Predicated region
        $region13: #{_lambda_.14} parent=11 // pred_check
          %p142 = pneg %p47
        $region14: #{_lambda_.14} parent=11 // pred_check_branch
          %144 = sbr.rel (%p142) target = $region16
        $region15: #{_lambda_.14} parent=11 // pred_region
          %p145 = scmp.lt.s32.totalorder %s18, 0
          %s146 = scalar_select %p145, %s18, 0
          %s147 = smul.addr %s146, 8
          %s148 = scalar_lea.vmem %s0, %s147
        $region16: #{_lambda_.14} parent=11 // pred_fallthru
          _
      $region12: #{_lambda_.14} parent=5 // pred_fallthru
        _
      %p149 = scmp.lt.s32.totalorder %s9, 2
      // Predicated region
      $region17: #{_lambda_.14} parent=5 // pred_check
        %p150 = pneg %p149
      $region18: #{_lambda_.14} parent=5 // pred_check_branch
        %152 = sbr.rel (%p150) target = $region20
      $region19: #{_lambda_.14} parent=5 // pred_region
        // Predicated region
        $region21: #{_lambda_.14} parent=19 // pred_check
          %p153 = pneg %p67
        $region22: #{_lambda_.14} parent=19 // pred_check_branch
          %155 = sbr.rel (%p153) target = $region24
        $region23: #{_lambda_.14} parent=19 // pred_region
          %s156 = sand.u32 %s57, 1
          %s157 = sand.u32 %s57, 1
          %s158 = smul.addr %s157, 8
          %s159 = scalar_lea.vmem [#allocation2], %s158
          %s160 = smul.addr %s17, 4
          %s161 = scalar_lea.vmem %s1, %s160
          // Predicated region
          $region25: #{_lambda_.14} parent=23 // pred_check
            _
          $region26: #{_lambda_.14} parent=23 // pred_check_branch
            %163 = sbr.rel (0) target = $region28
          $region27: #{_lambda_.14} parent=23 // pred_region
            // Predicated region
            $region29: #{_lambda_.14} parent=27 // pred_check
              _
            $region30: #{_lambda_.14} parent=27 // pred_check_branch
              %165 = sbr.rel target = $region32
            $region31: #{_lambda_.14} parent=27 // pred_region
              // Predicated region
              $region44: #{_lambda_.14} parent=31 // pred_check
                _
              $region45: #{_lambda_.14} parent=31 // pred_check_branch
                %183 = sbr.rel (0) target = $region47
              $region46: #{_lambda_.14} parent=31 // pred_region
                loop: start=0, step=1, limit=1
                $region48: #{_lambda_.14} parent=46 // loop_pre_header
                  _
                $region49: #{_lambda_.14} parent=46 // loop_header
                  %s185 = sphi 0, %s189
                  %p186 = scmp.ge.s32.totalorder %s185, 1
                  %s190 = sphi %s161, %s161
                  %s191 = sphi %s159, %s159
                $region50: #{_lambda_.14} parent=46 // loop_header_branch
                  %188 = sbr.rel (%p186) target = $region54
                $region51: #{_lambda_.14} parent=46 // loop_body
                  _
                $region52: #{_lambda_.14} parent=46 // loop_footer
                  %s189 = sadd.s32 1, %s185
                $region53: #{_lambda_.14} parent=46 // loop_footer_branch
                  %184 = sbr.rel target = $region49
                $region54: #{_lambda_.14} parent=46 // loop_exit
                  _
                %s193 = ssub.s32 16, 1
                loop: start=0, step=1, limit=1
                $region55: #{_lambda_.14} parent=46 // loop_pre_header
                  _
                $region56: #{_lambda_.14} parent=46 // loop_header
                  %s195 = sphi 0, %s199
                  %p196 = scmp.ge.s32.totalorder %s195, 1
                  %s200 = sphi %s161, %s161
                  %s201 = sphi %s159, %s159
                $region57: #{_lambda_.14} parent=46 // loop_header_branch
                  %198 = sbr.rel (%p196) target = $region61
                $region58: #{_lambda_.14} parent=46 // loop_body
                  %v202 = vld [vmem:[%s200] sm:%s193]
                  %203 = vst [vmem:[%s201] sm:%s193] %v202
                  %v204 = vld [vmem:[%s200 + $0x8] sm:%s193]
                  %205 = vst [vmem:[%s201 + $0x4] sm:%s193] %v204
                $region59: #{_lambda_.14} parent=46 // loop_footer
                  %s199 = sadd.s32 1, %s195
                $region60: #{_lambda_.14} parent=46 // loop_footer_branch
                  %194 = sbr.rel target = $region56
                $region61: #{_lambda_.14} parent=46 // loop_exit
                  _
              $region47: #{_lambda_.14} parent=31 // pred_fallthru
                _
            $region32: #{_lambda_.14} parent=27 // pred_fallthru
              _
            // Predicated region
            $region33: #{_lambda_.14} parent=27 // pred_check
              _
            $region34: #{_lambda_.14} parent=27 // pred_check_branch
              %167 = sbr.rel (0) target = $region36
            $region35: #{_lambda_.14} parent=27 // pred_region
              %s169 = ssub.s32 16, 1
              loop: start=0, step=1, limit=1
              $region37: #{_lambda_.14} parent=35 // loop_pre_header
                _
              $region38: #{_lambda_.14} parent=35 // loop_header
                %s171 = sphi 0, %s175
                %p172 = scmp.ge.s32.totalorder %s171, 1
                %s176 = sphi %s161, %s161
                %s177 = sphi %s159, %s159
              $region39: #{_lambda_.14} parent=35 // loop_header_branch
                %174 = sbr.rel (%p172) target = $region43
              $region40: #{_lambda_.14} parent=35 // loop_body
                %v178 = vld [vmem:[%s176] sm:%s169]
                %179 = vst [vmem:[%s177] sm:%s169] %v178
                %v180 = vld [vmem:[%s176 + $0x8] sm:%s169]
                %181 = vst [vmem:[%s177 + $0x4] sm:%s169] %v180
              $region41: #{_lambda_.14} parent=35 // loop_footer
                %s175 = sadd.s32 1, %s171
              $region42: #{_lambda_.14} parent=35 // loop_footer_branch
                %170 = sbr.rel target = $region38
              $region43: #{_lambda_.14} parent=35 // loop_exit
                _
            $region36: #{_lambda_.14} parent=27 // pred_fallthru
              _
          $region28: #{_lambda_.14} parent=23 // pred_fallthru
            _
          %206 = vnop
        $region24: #{_lambda_.14} parent=19 // pred_fallthru
          _
        // Predicated region
        $region62: #{_lambda_.14} parent=19 // pred_check
          %p207 = pneg %p95
        $region63: #{_lambda_.14} parent=19 // pred_check_branch
          %209 = sbr.rel (%p207) target = $region65
        $region64: #{_lambda_.14} parent=19 // pred_region
          %p210 = scmp.lt.s32.totalorder %s16, 0
          %s211 = scalar_select %p210, %s16, 0
          %p212 = scmp.lt.s32.totalorder %s17, 1
          %s213 = scalar_select %p212, %s17, 1
          %s214 = smul.addr %s211, 2
          %s215 = sadd.s32 %s213, %s214
          %s216 = smul.addr %s215, 4
          %s217 = scalar_lea.vmem %s2, %s216
        $region65: #{_lambda_.14} parent=19 // pred_fallthru
          _
      $region20: #{_lambda_.14} parent=5 // pred_fallthru
        _
      %p218 = scmp.le.s32.totalorder 1, %s9
      %p219 = scmp.lt.s32.totalorder %s9, 3
      %p220 = pnand %p218, %p219
      %p221 = pneg %p220
      // Predicated region
      $region66: #{_lambda_.14} parent=5 // pred_check
        _
      $region67: #{_lambda_.14} parent=5 // pred_check_branch
        %223 = sbr.rel (%p220) target = $region69
      $region68: #{_lambda_.14} parent=5 // pred_region
        %s224 = ssub.s32 %s9, 1
        %s225 = sand.u32 %s60, 1
        %s226 = sand.u32 %s60, 1
        %s227 = smul.addr %s226, 8
        %s228 = scalar_lea.vmem [#allocation2], %s227
        // Predicated region
        $region70: #{_lambda_.14} parent=68 // pred_check
          %p229 = pneg %p73
        $region71: #{_lambda_.14} parent=68 // pred_check_branch
          %231 = sbr.rel (%p229) target = $region73
        $region72: #{_lambda_.14} parent=68 // pred_region
          _
        $region73: #{_lambda_.14} parent=68 // pred_fallthru
          _
        %p232 = scmp.lt.s32.totalorder %s18, 0
        %s233 = scalar_select %p232, %s18, 0
        %s234 = smul.addr %s233, 8
        %s235 = scalar_lea.vmem %s0, %s234
        %p236 = pneg %p47
        %p237 = pneg %p44
        %s238 = sand.u32 %s60, 1
        %s239 = sand.u32 %s60, 1
        %s240 = smul.addr %s239, 8
        %s241 = scalar_lea.vmem [#allocation2], %s240
        %p242 = pneg %p73
        %p243 = pneg %p70
        %p244 = scmp.lt.s32.totalorder %s18, 0
        %s245 = scalar_select %p244, %s18, 0
        %p246 = scmp.lt.s32.totalorder %s19, 1
        %s247 = scalar_select %p246, %s19, 1
        %s248 = smul.addr %s245, 2
        %s249 = sadd.s32 %s247, %s248
        %s250 = smul.addr %s249, 4
        %s251 = scalar_lea.vmem %s2, %s250
        %p252 = pneg %p101
        %p253 = pneg %p98
        %p254 = pneg %p127
        %p255 = pneg %p124
        %p256 = scmp.lt.s32.totalorder %s18, 0
        %s257 = scalar_select %p256, %s18, 0
        %s258 = smul.addr %s257, 8
        %s259 = scalar_lea.vmem %s3, %s258
        %p260 = scmp.lt.s32.totalorder %s18, 0
        %s261 = scalar_select %p260, %s18, 0
        %s262 = smul.addr %s261, 8
        %s263 = scalar_lea.vmem %s0, %s262
        %p264 = scmp.lt.s32.totalorder %s18, 0
        %s265 = scalar_select %p264, %s18, 0
        %p266 = scmp.lt.s32.totalorder %s19, 1
        %s267 = scalar_select %p266, %s19, 1
        %s268 = smul.addr %s265, 2
        %s269 = sadd.s32 %s267, %s268
        %s270 = smul.addr %s269, 4
        %s271 = scalar_lea.vmem %s2, %s270
        %p272 = scmp.lt.s32.totalorder %s18, 0
        %s273 = scalar_select %p272, %s18, 0
        %s274 = smul.addr %s273, 8
        %s275 = scalar_lea.vmem %s3, %s274
        %p276 = scmp.eq.s32.totalorder %s19, 0
        // Predicated region
        $region74: #{_lambda_.14} parent=68 // pred_check
          %p277 = pneg %p276
        $region75: #{_lambda_.14} parent=68 // pred_check_branch
          %279 = sbr.rel (%p277) target = $region77
        $region76: #{_lambda_.14} parent=68 // pred_region
          %vm280 = vcmask 7168
          %281 = vst.msk [vmem:[%s275] sm:$0xff] %vm280, 0.0
        $region77: #{_lambda_.14} parent=68 // pred_fallthru
          _
        %v282 = vld [vmem:[%s263] sm:$0xff]
        %v283 = vld [vmem:[%s228] sm:$0xf]
        %v284 = vld [vmem:[%s228 + $0x4] sm:$0xf]
        %v285 = vunpack.c.l.bf16 %v283
        %v286 = vunpack.c.l.bf16 %v284
        %vm287 = vcmask 130048
        %v289 = vsel %vm287, %v282, 0
        %291 = vmatprep.subr.mxu0 0.0
        %292 = vmatpush1.msra.mxu0 0.0
        %293 = vmatprep.subr.mxu0 0.0
        %294 = vmatpush1.msra.mxu0 0.0
        %295 = vmatprep.subr.mxu0 0.0
        %296 = vmatpush1.msra.mxu0 0.0
        %297 = vmatprep.subr.mxu0 0.0
        %298 = vmatpush1.msra.mxu0 0.0
        %299 = vmatprep.subr.mxu0 0.0
        %300 = vmatpush1.msra.mxu0 0.0
        %301 = vmatprep.subr.mxu0 0.0
        %302 = vmatpush1.msra.mxu0 0.0
        %303 = vmatprep.subr.mxu0 0.0
        %304 = vmatpush1.msra.mxu0 0.0
        %305 = vmatprep.subr.mxu0 0.0
        %306 = vmatpush1.msra.mxu0 0.0
        %307 = vmatprep.subr.mxu0 0.0
        %308 = vmatpush1.msra.mxu0 0.0
        %309 = vmatprep.subr.mxu0 0.0
        %310 = vmatpush1.msra.mxu0 0.0
        %311 = vmatprep.subr.mxu0 0.0
        %312 = vmatpush1.msra.mxu0 0.0
        %313 = vmatprep.subr.mxu0 0.0
        %314 = vmatpush1.msra.mxu0 0.0
        %315 = vmatprep.subr.mxu0 0.0
        %316 = vmatpush1.msra.mxu0 0.0
        %317 = vmatprep.subr.mxu0 0.0
        %318 = vmatpush1.msra.mxu0 0.0
        %319 = vmatprep.subr.mxu0 0.0
        %320 = vmatpush1.msra.mxu0 %v286
        %321 = vmatprep.subr.mxu0 0.0
        %322 = vmatpush1.msra.mxu0 %v285
        %323 = vmatprep.subr.mxu0 0.0
        %324 = vmatpush2.msra.mxu0 0.0
        %325 = vmatprep.subr.mxu0 0.0
        %326 = vmatpush2.msra.mxu0 0.0
        %327 = vmatprep.subr.mxu0 0.0
        %328 = vmatpush2.msra.mxu0 0.0
        %329 = vmatprep.subr.mxu0 0.0
        %330 = vmatpush2.msra.mxu0 0.0
        %331 = vmatprep.subr.mxu0 0.0
        %332 = vmatpush2.msra.mxu0 0.0
        %333 = vmatprep.subr.mxu0 0.0
        %334 = vmatpush2.msra.mxu0 0.0
        %335 = vmatprep.subr.mxu0 0.0
        %336 = vmatpush2.msra.mxu0 0.0
        %337 = vmatprep.subr.mxu0 0.0
        %338 = vmatpush2.msra.mxu0 0.0
        %339 = vmatprep.subr.mxu0 0.0
        %340 = vmatpush2.msra.mxu0 0.0
        %341 = vmatprep.subr.mxu0 0.0
        %342 = vmatpush2.msra.mxu0 0.0
        %343 = vmatprep.subr.mxu0 0.0
        %344 = vmatpush2.msra.mxu0 0.0
        %345 = vmatprep.subr.mxu0 0.0
        %346 = vmatpush2.msra.mxu0 0.0
        %347 = vmatprep.subr.mxu0 0.0
        %348 = vmatpush2.msra.mxu0 0.0
        %349 = vmatprep.subr.mxu0 0.0
        %350 = vmatpush2.msra.mxu0 0.0
        %351 = vmatprep.subr.mxu0 0.0
        %352 = vmatpush2.msra.mxu0 0.0
        %353 = vmatprep.subr.mxu0 0.0
        %354 = vmatpush2.msra.mxu0 0.0
        %355 = vmatprep.mubr.f32.mxu0 0.0
        %356 = vmatmul.mubr.f32.gmra.mxu0 %v289
        %v357 = vpop.f32.mrf.mxu0
        %v358 = vadd.f32 0.0, %v357
        %v359 = vpop.f32.mrf.mxu0
        %360 = vdwg.mxu0
        %v361 = vld [vmem:[%s275] sm:$0xff]
        %v362 = vld [vmem:[%s271] sm:$0xf]
        %v363 = vunpack.c.l.bf16 %v362
        %v364 = vmax.f32 %v358, 1e-30
        %v365 = vlog2.pop %v364
        %v366 = vmul.f32 %v365, 0.6931472
        %v367 = vmul.f32 %v363, %v366
        %368 = vadd.xlane.f32.xlu0 %v367
        %v369 = vpop.xlane.xlu0 %368
        %v370 = vsub.f32 %v361, %v369
        %vm371 = vcmask 7168
        %372 = vst.msk [vmem:[%s275] sm:$0xff] %vm371, %v370
        %p373 = scmp.lt.s32.totalorder %s18, 0
        %s374 = scalar_select %p373, %s18, 0
        %s375 = smul.addr %s374, 8
        %s376 = scalar_lea.vmem %s3, %s375
        // Predicated region
        $region78: #{_lambda_.14} parent=68 // pred_check
          %p377 = pneg %p124
        $region79: #{_lambda_.14} parent=68 // pred_check_branch
          %379 = sbr.rel (%p377) target = $region81
        $region80: #{_lambda_.14} parent=68 // pred_region
          _
        $region81: #{_lambda_.14} parent=68 // pred_fallthru
          _
        // Predicated region
        $region82: #{_lambda_.14} parent=68 // pred_check
          %p380 = pneg %p124
        $region83: #{_lambda_.14} parent=68 // pred_check_branch
          %382 = sbr.rel (%p380) target = $region85
        $region84: #{_lambda_.14} parent=68 // pred_region
          %p383 = scmp.lt.s32.totalorder %s18, 0
          %s384 = scalar_select %p383, %s18, 0
          %s385 = smul.addr %s384, 8
          %s386 = scalar_lea.vmem %s3, %s385
        $region85: #{_lambda_.14} parent=68 // pred_fallthru
          _
      $region69: #{_lambda_.14} parent=5 // pred_fallthru
        _
      %p387 = scmp.le.s32.totalorder 2, %s9
      // Predicated region
      $region86: #{_lambda_.14} parent=5 // pred_check
        %p388 = pneg %p387
      $region87: #{_lambda_.14} parent=5 // pred_check_branch
        %390 = sbr.rel (%p388) target = $region89
      $region88: #{_lambda_.14} parent=5 // pred_region
        %s391 = ssub.s32 %s9, 2
      $region89: #{_lambda_.14} parent=5 // pred_fallthru
        _
    $region6: #{_lambda_.14} parent=1 // loop_footer
      %s13 = sadd.s32 1, %s9
    $region7: #{_lambda_.14} parent=1 // loop_footer_branch
      %8 = sbr.rel target = $region3
    $region8: #{_lambda_.14} parent=1 // loop_exit
      _

// kernel: _lambda_.8
$region0: #{_lambda_.8}
  #allocation0 [shape = 'u32[]', space=smem, size = 0x4, offset = 0x4, fixed_abs, tag = 'smem constant byte address 0x4 - core index']
  #allocation1 [shape = 'u32[144,128]{1,0:T(1,128)}', space=vmem, size = 0x12000, scoped, tag = 'internal scratch']
  #allocation2 [shape = 'f32[8,128]{1,0:T(8,128)}', space=vmem, size = 0x1000, scoped, tag = 'scratch operand']
  %s0 = inlined_call_operand.vmem [shape: bf16[8,256], index: 0, kind: input, shape index: {}]
  %s1 = inlined_call_operand.vmem [shape: bf16[256,128], index: 1, kind: input, shape index: {}]
  %s2 = inlined_call_operand.vmem [shape: f32[1,128], index: 2, kind: input, shape index: {}]
  %s3 = inlined_call_operand.vmem [shape: bf16[128,128], index: 3, kind: input, shape index: {}]
  %s4 = inlined_call_operand.vmem [shape: f32[1,128], index: 4, kind: input, shape index: {}]
  %s5 = inlined_call_operand.vmem [shape: bf16[128,32], index: 5, kind: input, shape index: {}]
  %s6 = inlined_call_operand.vmem [shape: f32[1,32], index: 6, kind: input, shape index: {}]
  %s7 = inlined_call_operand.vmem [shape: f32[8,16], index: 7, kind: output, shape index: {0}]
  %s8 = inlined_call_operand.vmem [shape: f32[8,1], index: 8, kind: output, shape index: {1}]
  %9 = xla_tuple %s7, %s8
  %s10 = sld [smem:[#allocation0]]
  $region77: #{_lambda_.8} parent=0
    _
  %s12 = ssub.s32 1, %s10
  %s13 = scalar_select 0, %s12, %s10
  loop: start=0, step=1, limit=4
  $region2: #{_lambda_.8} parent=0 // loop_pre_header
    _
  $region3: #{_lambda_.8} parent=0 // loop_header
    %s15 = sphi 0, %s19
    %p16 = scmp.ge.s32.totalorder %s15, 4
    %s22 = sphi 0, %s34
    %s23 = sphi 0, %s30
    %s24 = sphi 0, %s22
    %s25 = sphi 0, %s23
    %s26 = sphi 0, %s24
    %s27 = sphi 0, %s25
    %s39 = sphi 0, %s41
    %s42 = sphi 0, %s39
    %s43 = sphi 0, %s42
    %s59 = sphi 0, %s43
    %s65 = sphi 0, %s67
    %s68 = sphi 0, %s65
    %s69 = sphi 0, %s68
    %s85 = sphi 0, %s69
    %s89 = sphi 0, %s89
    %s91 = sphi 0, %s89
    %s92 = sphi 0, %s91
    %s106 = sphi 0, %s92
    %s110 = sphi 0, %s110
    %s112 = sphi 0, %s110
    %s113 = sphi 0, %s112
    %s127 = sphi 0, %s113
    %s131 = sphi 0, %s131
    %s133 = sphi 0, %s131
    %s134 = sphi 0, %s133
    %s148 = sphi 0, %s134
    %s152 = sphi 0, %s152
    %s154 = sphi 0, %s152
    %s155 = sphi 0, %s154
    %s169 = sphi 0, %s155
    %s173 = sphi 0, %s173
    %s175 = sphi 0, %s173
    %s176 = sphi 0, %s175
    %s190 = sphi 0, %s176
    %s196 = sphi 0, %s198
    %s199 = sphi 0, %s196
    %s200 = sphi 0, %s199
    %s216 = sphi 0, %s200
    %s222 = sphi 0, %s224
    %s225 = sphi 0, %s222
    %s226 = sphi 0, %s225
    %s242 = sphi 0, %s226
  $region4: #{_lambda_.8} parent=0 // loop_header_branch
    %18 = sbr.rel (%p16) target = $region8
  $region5: #{_lambda_.8} parent=0 // loop_body
    %s20 = ssub.s32 %s15, 1
    %s21 = ssub.s32 %s15, 2
    %s28 = sadd.s32 1, %s23
    %p29 = scmp.ge.s32.totalorder %s28, 2
    %s30 = scalar_select %p29, 0, %s28
    %s31 = sadd.s32 1, %s22
    %s32 = scalar_select %p29, %s31, %s22
    %p33 = scmp.ge.s32.totalorder %s32, 1
    %s34 = scalar_select %p33, 0, %s32
    %s35 = ssub.s32 %s22, %s34
    %s36 = ssub.s32 %s23, %s30
    %s37 = sor.u32 %s35, %s36
    %p38 = scmp.eq.s32.totalorder %s37, 0
    %s40 = sadd.s32 %s39, 1
    %s41 = scalar_select %p38, %s39, %s40
    %p44 = pneg %p38
    %p45 = scmp.eq.s32.totalorder %s15, 1
    %p46 = por %p44, %p45
    %p47 = scmp.ne.s32.totalorder %s39, %s42
    %p48 = scmp.eq.s32.totalorder %s15, 0
    %p49 = por %p47, %p48
    %p50 = scmp.ne.s32.totalorder %s39, %s42
    %p51 = scmp.eq.s32.totalorder %s20, 1
    %p52 = por %p50, %p51
    %p53 = scmp.ne.s32.totalorder %s42, %s43
    %p54 = scmp.eq.s32.totalorder %s20, 0
    %p55 = por %p53, %p54
    %p56 = scmp.ne.s32.totalorder %s42, %s43
    %p57 = scmp.eq.s32.totalorder %s21, 1
    %p58 = por %p56, %p57
    %p60 = scmp.ne.s32.totalorder %s43, %s59
    %p61 = scmp.eq.s32.totalorder %s21, 0
    %p62 = por %p60, %p61
    %s63 = ssub.s32 %s23, %s30
    %p64 = scmp.eq.s32.totalorder %s63, 0
    %s66 = sadd.s32 %s65, 1
    %s67 = scalar_select %p64, %s65, %s66
    %p70 = pneg %p64
    %p71 = scmp.eq.s32.totalorder %s15, 1
    %p72 = por %p70, %p71
    %p73 = scmp.ne.s32.totalorder %s65, %s68
    %p74 = scmp.eq.s32.totalorder %s15, 0
    %p75 = por %p73, %p74
    %p76 = scmp.ne.s32.totalorder %s65, %s68
    %p77 = scmp.eq.s32.totalorder %s20, 1
    %p78 = por %p76, %p77
    %p79 = scmp.ne.s32.totalorder %s68, %s69
    %p80 = scmp.eq.s32.totalorder %s20, 0
    %p81 = por %p79, %p80
    %p82 = scmp.ne.s32.totalorder %s68, %s69
    %p83 = scmp.eq.s32.totalorder %s21, 1
    %p84 = por %p82, %p83
    %p86 = scmp.ne.s32.totalorder %s69, %s85
    %p87 = scmp.eq.s32.totalorder %s21, 0
    %p88 = por %p86, %p87
    %s90 = sadd.s32 %s89, 1
    %p93 = scmp.eq.s32.totalorder %s15, 1
    %p94 = scmp.ne.s32.totalorder %s89, %s91
    %p95 = scmp.eq.s32.totalorder %s15, 0
    %p96 = por %p94, %p95
    %p97 = scmp.ne.s32.totalorder %s89, %s91
    %p98 = scmp.eq.s32.totalorder %s20, 1
    %p99 = por %p97, %p98
    %p100 = scmp.ne.s32.totalorder %s91, %s92
    %p101 = scmp.eq.s32.totalorder %s20, 0
    %p102 = por %p100, %p101
    %p103 = scmp.ne.s32.totalorder %s91, %s92
    %p104 = scmp.eq.s32.totalorder %s21, 1
    %p105 = por %p103, %p104
    %p107 = scmp.ne.s32.totalorder %s92, %s106
    %p108 = scmp.eq.s32.totalorder %s21, 0
    %p109 = por %p107, %p108
    %s111 = sadd.s32 %s110, 1
    %p114 = scmp.eq.s32.totalorder %s15, 1
    %p115 = scmp.ne.s32.totalorder %s110, %s112
    %p116 = scmp.eq.s32.totalorder %s15, 0
    %p117 = por %p115, %p116
    %p118 = scmp.ne.s32.totalorder %s110, %s112
    %p119 = scmp.eq.s32.totalorder %s20, 1
    %p120 = por %p118, %p119
    %p121 = scmp.ne.s32.totalorder %s112, %s113
    %p122 = scmp.eq.s32.totalorder %s20, 0
    %p123 = por %p121, %p122
    %p124 = scmp.ne.s32.totalorder %s112, %s113
    %p125 = scmp.eq.s32.totalorder %s21, 1
    %p126 = por %p124, %p125
    %p128 = scmp.ne.s32.totalorder %s113, %s127
    %p129 = scmp.eq.s32.totalorder %s21, 0
    %p130 = por %p128, %p129
    %s132 = sadd.s32 %s131, 1
    %p135 = scmp.eq.s32.totalorder %s15, 1
    %p136 = scmp.ne.s32.totalorder %s131, %s133
    %p137 = scmp.eq.s32.totalorder %s15, 0
    %p138 = por %p136, %p137
    %p139 = scmp.ne.s32.totalorder %s131, %s133
    %p140 = scmp.eq.s32.totalorder %s20, 1
    %p141 = por %p139, %p140
    %p142 = scmp.ne.s32.totalorder %s133, %s134
    %p143 = scmp.eq.s32.totalorder %s20, 0
    %p144 = por %p142, %p143
    %p145 = scmp.ne.s32.totalorder %s133, %s134
    %p146 = scmp.eq.s32.totalorder %s21, 1
    %p147 = por %p145, %p146
    %p149 = scmp.ne.s32.totalorder %s134, %s148
    %p150 = scmp.eq.s32.totalorder %s21, 0
    %p151 = por %p149, %p150
    %s153 = sadd.s32 %s152, 1
    %p156 = scmp.eq.s32.totalorder %s15, 1
    %p157 = scmp.ne.s32.totalorder %s152, %s154
    %p158 = scmp.eq.s32.totalorder %s15, 0
    %p159 = por %p157, %p158
    %p160 = scmp.ne.s32.totalorder %s152, %s154
    %p161 = scmp.eq.s32.totalorder %s20, 1
    %p162 = por %p160, %p161
    %p163 = scmp.ne.s32.totalorder %s154, %s155
    %p164 = scmp.eq.s32.totalorder %s20, 0
    %p165 = por %p163, %p164
    %p166 = scmp.ne.s32.totalorder %s154, %s155
    %p167 = scmp.eq.s32.totalorder %s21, 1
    %p168 = por %p166, %p167
    %p170 = scmp.ne.s32.totalorder %s155, %s169
    %p171 = scmp.eq.s32.totalorder %s21, 0
    %p172 = por %p170, %p171
    %s174 = sadd.s32 %s173, 1
    %p177 = scmp.eq.s32.totalorder %s15, 1
    %p178 = scmp.ne.s32.totalorder %s173, %s175
    %p179 = scmp.eq.s32.totalorder %s15, 0
    %p180 = por %p178, %p179
    %p181 = scmp.ne.s32.totalorder %s173, %s175
    %p182 = scmp.eq.s32.totalorder %s20, 1
    %p183 = por %p181, %p182
    %p184 = scmp.ne.s32.totalorder %s175, %s176
    %p185 = scmp.eq.s32.totalorder %s20, 0
    %p186 = por %p184, %p185
    %p187 = scmp.ne.s32.totalorder %s175, %s176
    %p188 = scmp.eq.s32.totalorder %s21, 1
    %p189 = por %p187, %p188
    %p191 = scmp.ne.s32.totalorder %s176, %s190
    %p192 = scmp.eq.s32.totalorder %s21, 0
    %p193 = por %p191, %p192
    %s194 = ssub.s32 %s22, %s34
    %p195 = scmp.eq.s32.totalorder %s194, 0
    %s197 = sadd.s32 %s196, 1
    %s198 = scalar_select %p195, %s196, %s197
    %p201 = pneg %p195
    %p202 = scmp.eq.s32.totalorder %s15, 1
    %p203 = por %p201, %p202
    %p204 = scmp.ne.s32.totalorder %s196, %s199
    %p205 = scmp.eq.s32.totalorder %s15, 0
    %p206 = por %p204, %p205
    %p207 = scmp.ne.s32.totalorder %s196, %s199
    %p208 = scmp.eq.s32.totalorder %s20, 1
    %p209 = por %p207, %p208
    %p210 = scmp.ne.s32.totalorder %s199, %s200
    %p211 = scmp.eq.s32.totalorder %s20, 0
    %p212 = por %p210, %p211
    %p213 = scmp.ne.s32.totalorder %s199, %s200
    %p214 = scmp.eq.s32.totalorder %s21, 1
    %p215 = por %p213, %p214
    %p217 = scmp.ne.s32.totalorder %s200, %s216
    %p218 = scmp.eq.s32.totalorder %s21, 0
    %p219 = por %p217, %p218
    %s220 = ssub.s32 %s22, %s34
    %p221 = scmp.eq.s32.totalorder %s220, 0
    %s223 = sadd.s32 %s222, 1
    %s224 = scalar_select %p221, %s222, %s223
    %p227 = pneg %p221
    %p228 = scmp.eq.s32.totalorder %s15, 1
    %p229 = por %p227, %p228
    %p230 = scmp.ne.s32.totalorder %s222, %s225
    %p231 = scmp.eq.s32.totalorder %s15, 0
    %p232 = por %p230, %p231
    %p233 = scmp.ne.s32.totalorder %s222, %s225
    %p234 = scmp.eq.s32.totalorder %s20, 1
    %p235 = por %p233, %p234
    %p236 = scmp.ne.s32.totalorder %s225, %s226
    %p237 = scmp.eq.s32.totalorder %s20, 0
    %p238 = por %p236, %p237
    %p239 = scmp.ne.s32.totalorder %s225, %s226
    %p240 = scmp.eq.s32.totalorder %s21, 1
    %p241 = por %p239, %p240
    %p243 = scmp.ne.s32.totalorder %s226, %s242
    %p244 = scmp.eq.s32.totalorder %s21, 0
    %p245 = por %p243, %p244
    %p246 = scmp.le.s32.totalorder 1, %s15
    %p247 = scmp.lt.s32.totalorder %s15, 3
    %p248 = pnand %p246, %p247
    %p249 = pneg %p248
    // Predicated region
    $region9: #{_lambda_.8} parent=5 // pred_check
      _
    $region10: #{_lambda_.8} parent=5 // pred_check_branch
      %251 = sbr.rel (%p248) target = $region12
    $region11: #{_lambda_.8} parent=5 // pred_region
      %s252 = ssub.s32 %s15, 1
      // Predicated region
      $region13: #{_lambda_.8} parent=11 // pred_check
        %p253 = pneg %p102
      $region14: #{_lambda_.8} parent=11 // pred_check_branch
        %255 = sbr.rel (%p253) target = $region16
      $region15: #{_lambda_.8} parent=11 // pred_region
        _
      $region16: #{_lambda_.8} parent=11 // pred_fallthru
        _
      // Predicated region
      $region17: #{_lambda_.8} parent=11 // pred_check
        %p256 = pneg %p123
      $region18: #{_lambda_.8} parent=11 // pred_check_branch
        %258 = sbr.rel (%p256) target = $region20
      $region19: #{_lambda_.8} parent=11 // pred_region
        _
      $region20: #{_lambda_.8} parent=11 // pred_fallthru
        _
      // Predicated region
      $region21: #{_lambda_.8} parent=11 // pred_check
        %p259 = pneg %p144
      $region22: #{_lambda_.8} parent=11 // pred_check_branch
        %261 = sbr.rel (%p259) target = $region24
      $region23: #{_lambda_.8} parent=11 // pred_region
        _
      $region24: #{_lambda_.8} parent=11 // pred_fallthru
        _
      // Predicated region
      $region25: #{_lambda_.8} parent=11 // pred_check
        %p262 = pneg %p165
      $region26: #{_lambda_.8} parent=11 // pred_check_branch
        %264 = sbr.rel (%p262) target = $region28
      $region27: #{_lambda_.8} parent=11 // pred_region
        _
      $region28: #{_lambda_.8} parent=11 // pred_fallthru
        _
      // Predicated region
      $region29: #{_lambda_.8} parent=11 // pred_check
        %p265 = pneg %p186
      $region30: #{_lambda_.8} parent=11 // pred_check_branch
        %267 = sbr.rel (%p265) target = $region32
      $region31: #{_lambda_.8} parent=11 // pred_region
        _
      $region32: #{_lambda_.8} parent=11 // pred_fallthru
        _
    $region12: #{_lambda_.8} parent=5 // pred_fallthru
      _
    %p268 = scmp.lt.s32.totalorder %s15, 2
    // Predicated region
    $region33: #{_lambda_.8} parent=5 // pred_check
      %p269 = pneg %p268
    $region34: #{_lambda_.8} parent=5 // pred_check_branch
      %271 = sbr.rel (%p269) target = $region36
    $region35: #{_lambda_.8} parent=5 // pred_region
      // Predicated region
      $region37: #{_lambda_.8} parent=35 // pred_check
        %p272 = pneg %p49
      $region38: #{_lambda_.8} parent=35 // pred_check_branch
        %274 = sbr.rel (%p272) target = $region40
      $region39: #{_lambda_.8} parent=35 // pred_region
        %p275 = scmp.lt.s32.totalorder %s22, 0
        %s276 = scalar_select %p275, %s22, 0
        %p277 = scmp.lt.s32.totalorder %s23, 1
        %s278 = scalar_select %p277, %s23, 1
        %s279 = smul.addr %s276, 2
        %s280 = sadd.s32 %s278, %s279
        %s281 = smul.addr %s280, 4
        %s282 = scalar_lea.vmem %s0, %s281
      $region40: #{_lambda_.8} parent=35 // pred_fallthru
        _
      // Predicated region
      $region41: #{_lambda_.8} parent=35 // pred_check
        %p283 = pneg %p75
      $region42: #{_lambda_.8} parent=35 // pred_check_branch
        %285 = sbr.rel (%p283) target = $region44
      $region43: #{_lambda_.8} parent=35 // pred_region
        %s286 = smul.u32 16, %s23
        %p287 = scmp.lt.s32.totalorder %s286, 31
        %s288 = scalar_select %p287, %s286, 31
        %s289 = smul.addr %s288, 4
        %s290 = scalar_lea.vmem %s1, %s289
        %s291 = smul.u32 16, %s23
      $region44: #{_lambda_.8} parent=35 // pred_fallthru
        _
    $region36: #{_lambda_.8} parent=5 // pred_fallthru
      _
    %p292 = scmp.le.s32.totalorder 1, %s15
    %p293 = scmp.lt.s32.totalorder %s15, 3
    %p294 = pnand %p292, %p293
    %p295 = pneg %p294
    // Predicated region
    $region45: #{_lambda_.8} parent=5 // pred_check
      _
    $region46: #{_lambda_.8} parent=5 // pred_check_branch
      %297 = sbr.rel (%p294) target = $region48
    $region47: #{_lambda_.8} parent=5 // pred_region
      %s298 = ssub.s32 %s15, 1
      %p299 = scmp.lt.s32.totalorder %s24, 0
      %s300 = scalar_select %p299, %s24, 0
      %p301 = scmp.lt.s32.totalorder %s25, 1
      %s302 = scalar_select %p301, %s25, 1
      %s303 = smul.addr %s300, 2
      %s304 = sadd.s32 %s302, %s303
      %s305 = smul.addr %s304, 4
      %s306 = scalar_lea.vmem %s0, %s305
      %p307 = pneg %p55
      %p308 = pneg %p52
      %s309 = smul.u32 16, %s25
      %p310 = scmp.lt.s32.totalorder %s309, 31
      %s311 = scalar_select %p310, %s309, 31
      %s312 = smul.addr %s311, 4
      %s313 = scalar_lea.vmem %s1, %s312
      %p314 = pneg %p81
      %p315 = pneg %p78
      %p316 = pneg %p102
      %p317 = pneg %p99
      %p318 = pneg %p123
      %p319 = pneg %p120
      %p320 = pneg %p144
      %p321 = pneg %p141
      %p322 = pneg %p165
      %p323 = pneg %p162
      %p324 = pneg %p186
      %p325 = pneg %p183
      %p326 = pneg %p212
      %p327 = pneg %p209
      %p328 = scmp.lt.s32.totalorder %s24, 0
      %s329 = scalar_select %p328, %s24, 0
      %s330 = smul.addr %s329, 8
      %s331 = scalar_lea.vmem %s7, %s330
      %p332 = pneg %p238
      %p333 = pneg %p235
      %p334 = scmp.lt.s32.totalorder %s24, 0
      %s335 = scalar_select %p334, %s24, 0
      %s336 = smul.addr %s335, 8
      %s337 = scalar_lea.vmem %s8, %s336
      %p338 = scmp.lt.s32.totalorder %s24, 0
      %s339 = scalar_select %p338, %s24, 0
      %p340 = scmp.lt.s32.totalorder %s25, 1
      %s341 = scalar_select %p340, %s25, 1
      %s342 = smul.addr %s339, 2
      %s343 = sadd.s32 %s341, %s342
      %s344 = smul.addr %s343, 4
      %s345 = scalar_lea.vmem %s0, %s344
      %s346 = smul.u32 16, %s25
      %p347 = scmp.lt.s32.totalorder %s346, 31
      %s348 = scalar_select %p347, %s346, 31
      %s349 = smul.addr %s348, 4
      %s350 = scalar_lea.vmem %s1, %s349
      %s351 = smul.u32 16, %s25
      %p352 = scmp.lt.s32.totalorder %s24, 0
      %s353 = scalar_select %p352, %s24, 0
      %s354 = smul.addr %s353, 8
      %s355 = scalar_lea.vmem %s7, %s354
      %p356 = scmp.lt.s32.totalorder %s24, 0
      %s357 = scalar_select %p356, %s24, 0
      %s358 = smul.addr %s357, 8
      %s359 = scalar_lea.vmem %s8, %s358
      %p361 = scmp.eq.s32.totalorder %s25, 0
      // Predicated region
      $region49: #{_lambda_.8} parent=47 // pred_check
        %p362 = pneg %p361
      $region50: #{_lambda_.8} parent=47 // pred_check_branch
        %364 = sbr.rel (%p362) target = $region52
      $region51: #{_lambda_.8} parent=47 // pred_region
        %365 = vst [vmem:[#allocation2] sm:$0xff] 0.0
      $region52: #{_lambda_.8} parent=47 // pred_fallthru
        _
      %v366 = vld [vmem:[#allocation2] sm:$0xff]
      %v367 = vld [vmem:[%s345] sm:$0xf]
      %v368 = vld [vmem:[%s350] sm:$0xf]
      %v369 = vld [vmem:[%s350 + $0x4] sm:$0xf]
      %v370 = vld [vmem:[%s350 + $0x8] sm:$0xf]
      %v371 = vld [vmem:[%s350 + $0xc] sm:$0xf]
      %v372 = vld [vmem:[%s350 + $0x10] sm:$0xf]
      %v373 = vld [vmem:[%s350 + $0x14] sm:$0xf]
      %v374 = vld [vmem:[%s350 + $0x18] sm:$0xf]
      %v375 = vld [vmem:[%s350 + $0x1c] sm:$0xf]
      %v376 = vld [vmem:[%s350 + $0x20] sm:$0xf]
      %v377 = vld [vmem:[%s350 + $0x24] sm:$0xf]
      %v378 = vld [vmem:[%s350 + $0x28] sm:$0xf]
      %v379 = vld [vmem:[%s350 + $0x2c] sm:$0xf]
      %v380 = vld [vmem:[%s350 + $0x30] sm:$0xf]
      %v381 = vld [vmem:[%s350 + $0x34] sm:$0xf]
      %v382 = vld [vmem:[%s350 + $0x38] sm:$0xf]
      %v383 = vld [vmem:[%s350 + $0x3c] sm:$0xf]
      %v400 = vunpack.c.l.b16 %v368
      %v401 = vunpack.c.l.b16 %v369
      %v402 = vunpack.c.l.b16 %v370
      %v403 = vunpack.c.l.b16 %v371
      %v404 = vunpack.c.l.b16 %v372
      %v405 = vunpack.c.l.b16 %v373
      %v406 = vunpack.c.l.b16 %v374
      %v407 = vunpack.c.l.b16 %v375
      %v408 = vunpack.c.l.b16 %v376
      %v409 = vunpack.c.l.b16 %v377
      %v410 = vunpack.c.l.b16 %v378
      %v411 = vunpack.c.l.b16 %v379
      %v412 = vunpack.c.l.b16 %v380
      %v413 = vunpack.c.l.b16 %v381
      %v414 = vunpack.c.l.b16 %v382
      %v415 = vunpack.c.l.b16 %v383
      %v416 = vpack.c.b16 %v401, %v400
      %v417 = vpack.c.b16 %v403, %v402
      %v418 = vpack.c.b16 %v405, %v404
      %v419 = vpack.c.b16 %v407, %v406
      %v420 = vpack.c.b16 %v409, %v408
      %v421 = vpack.c.b16 %v411, %v410
      %v422 = vpack.c.b16 %v413, %v412
      %v423 = vpack.c.b16 %v415, %v414
      %432 = vmatprep.subr.bf16.mxu0 0
      %433 = vmatpush1.bf16.msra.mxu0 %v423
      %434 = vmatprep.subr.bf16.mxu0 0
      %435 = vmatpush1.bf16.msra.mxu0 %v422
      %436 = vmatprep.subr.bf16.mxu0 0
      %437 = vmatpush1.bf16.msra.mxu0 %v421
      %438 = vmatprep.subr.bf16.mxu0 0
      %439 = vmatpush1.bf16.msra.mxu0 %v420
      %440 = vmatprep.subr.bf16.mxu0 0
      %441 = vmatpush1.bf16.msra.mxu0 %v419
      %442 = vmatprep.subr.bf16.mxu0 0
      %443 = vmatpush1.bf16.msra.mxu0 %v418
      %444 = vmatprep.subr.bf16.mxu0 0
      %445 = vmatpush1.bf16.msra.mxu0 %v417
      %446 = vmatprep.subr.bf16.mxu0 0
      %447 = vmatpush1.bf16.msra.mxu0 %v416
      %448 = vmatprep.subr.bf16.mxu0 0
      %449 = vmatpush2.bf16.msra.mxu0 0
      %450 = vmatprep.subr.bf16.mxu0 0
      %451 = vmatpush2.bf16.msra.mxu0 0
      %452 = vmatprep.subr.bf16.mxu0 0
      %453 = vmatpush2.bf16.msra.mxu0 0
      %454 = vmatprep.subr.bf16.mxu0 0
      %455 = vmatpush2.bf16.msra.mxu0 0
      %456 = vmatprep.subr.bf16.mxu0 0
      %457 = vmatpush2.bf16.msra.mxu0 0
      %458 = vmatprep.subr.bf16.mxu0 0
      %459 = vmatpush2.bf16.msra.mxu0 0
      %460 = vmatprep.subr.bf16.mxu0 0
      %461 = vmatpush2.bf16.msra.mxu0 0
      %462 = vmatprep.subr.bf16.mxu0 0
      %463 = vmatpush2.bf16.msra.mxu0 0
      %464 = vmatprep.mubr.bf16.mxu0 0
      %465 = vmatmul.mubr.bf16.gmra.mxu0 %v367
      %v466 = vpop.f32.mrf.mxu0
      %v467 = vadd.f32 0.0, %v466
      %v468 = vpop.f32.mrf.mxu0
      %v469 = vpop.f32.mrf.mxu0
      %v470 = vpop.f32.mrf.mxu0
      %471 = vdwg.mxu0
      %v472 = vadd.f32 %v366, %v467
      %473 = vst [vmem:[#allocation2] sm:$0xff] %v472
      %p474 = scmp.eq.s32.totalorder %s25, 1
      // Predicated region
      $region53: #{_lambda_.8} parent=47 // pred_check
        %p475 = pneg %p474
      $region54: #{_lambda_.8} parent=47 // pred_check_branch
        %477 = sbr.rel (%p475) target = $region56
      $region55: #{_lambda_.8} parent=47 // pred_region
        %v478 = vld [vmem:[#allocation2] sm:$0xff]
        %v479 = vld [vmem:[%s2] sm:$0x1]
        %v481 = vlaneseq
        %v482 = vshrl.u32 %v481, 7
        %v483 = vsub.s32 0, %v482
        %v484 = vrot.slane %v479, %v483
        %v486 = vadd.f32 %v478, %v484
        %v487 = vmax.f32 %v486, 0.0
        %v488 = vpack.c.bf16 %v487, %v487
        %v489 = vld [vmem:[%s3] sm:$0xf]
        %v490 = vld [vmem:[%s3 + $0x4] sm:$0xf]
        %v491 = vld [vmem:[%s3 + $0x8] sm:$0xf]
        %v492 = vld [vmem:[%s3 + $0xc] sm:$0xf]
        %v493 = vld [vmem:[%s3 + $0x10] sm:$0xf]
        %v494 = vld [vmem:[%s3 + $0x14] sm:$0xf]
        %v495 = vld [vmem:[%s3 + $0x18] sm:$0xf]
        %v496 = vld [vmem:[%s3 + $0x1c] sm:$0xf]
        %v497 = vld [vmem:[%s3 + $0x20] sm:$0xf]
        %v498 = vld [vmem:[%s3 + $0x24] sm:$0xf]
        %v499 = vld [vmem:[%s3 + $0x28] sm:$0xf]
        %v500 = vld [vmem:[%s3 + $0x2c] sm:$0xf]
        %v501 = vld [vmem:[%s3 + $0x30] sm:$0xf]
        %v502 = vld [vmem:[%s3 + $0x34] sm:$0xf]
        %v503 = vld [vmem:[%s3 + $0x38] sm:$0xf]
        %v504 = vld [vmem:[%s3 + $0x3c] sm:$0xf]
        %v505 = vld [vmem:[%s4] sm:$0x1]
        %v507 = vlaneseq
        %v508 = vshrl.u32 %v507, 7
        %v509 = vsub.s32 0, %v508
        %v510 = vrot.slane %v505, %v509
        %v528 = vunpack.c.l.b16 %v489
        %v529 = vunpack.c.l.b16 %v490
        %v530 = vunpack.c.l.b16 %v491
        %v531 = vunpack.c.l.b16 %v492
        %v532 = vunpack.c.l.b16 %v493
        %v533 = vunpack.c.l.b16 %v494
        %v534 = vunpack.c.l.b16 %v495
        %v535 = vunpack.c.l.b16 %v496
        %v536 = vunpack.c.l.b16 %v497
        %v537 = vunpack.c.l.b16 %v498
        %v538 = vunpack.c.l.b16 %v499
        %v539 = vunpack.c.l.b16 %v500
        %v540 = vunpack.c.l.b16 %v501
        %v541 = vunpack.c.l.b16 %v502
        %v542 = vunpack.c.l.b16 %v503
        %v543 = vunpack.c.l.b16 %v504
        %v544 = vpack.c.b16 %v529, %v528
        %v545 = vpack.c.b16 %v531, %v530
        %v546 = vpack.c.b16 %v533, %v532
        %v547 = vpack.c.b16 %v535, %v534
        %v548 = vpack.c.b16 %v537, %v536
        %v549 = vpack.c.b16 %v539, %v538
        %v550 = vpack.c.b16 %v541, %v540
        %v551 = vpack.c.b16 %v543, %v542
        %560 = vmatprep.subr.bf16.mxu0 0
        %561 = vmatpush1.bf16.msra.mxu0 %v551
        %562 = vmatprep.subr.bf16.mxu0 0
        %563 = vmatpush1.bf16.msra.mxu0 %v550
        %564 = vmatprep.subr.bf16.mxu0 0
        %565 = vmatpush1.bf16.msra.mxu0 %v549
        %566 = vmatprep.subr.bf16.mxu0 0
        %567 = vmatpush1.bf16.msra.mxu0 %v548
        %568 = vmatprep.subr.bf16.mxu0 0
        %569 = vmatpush1.bf16.msra.mxu0 %v547
        %570 = vmatprep.subr.bf16.mxu0 0
        %571 = vmatpush1.bf16.msra.mxu0 %v546
        %572 = vmatprep.subr.bf16.mxu0 0
        %573 = vmatpush1.bf16.msra.mxu0 %v545
        %574 = vmatprep.subr.bf16.mxu0 0
        %575 = vmatpush1.bf16.msra.mxu0 %v544
        %576 = vmatprep.subr.bf16.mxu0 0
        %577 = vmatpush2.bf16.msra.mxu0 0
        %578 = vmatprep.subr.bf16.mxu0 0
        %579 = vmatpush2.bf16.msra.mxu0 0
        %580 = vmatprep.subr.bf16.mxu0 0
        %581 = vmatpush2.bf16.msra.mxu0 0
        %582 = vmatprep.subr.bf16.mxu0 0
        %583 = vmatpush2.bf16.msra.mxu0 0
        %584 = vmatprep.subr.bf16.mxu0 0
        %585 = vmatpush2.bf16.msra.mxu0 0
        %586 = vmatprep.subr.bf16.mxu0 0
        %587 = vmatpush2.bf16.msra.mxu0 0
        %588 = vmatprep.subr.bf16.mxu0 0
        %589 = vmatpush2.bf16.msra.mxu0 0
        %590 = vmatprep.subr.bf16.mxu0 0
        %591 = vmatpush2.bf16.msra.mxu0 0
        %592 = vmatprep.mubr.bf16.mxu0 0
        %593 = vmatmul.mubr.bf16.gmra.mxu0 %v488
        %v594 = vpop.f32.mrf.mxu0
        %v595 = vadd.f32 %v510, %v594
        %v596 = vpop.f32.mrf.mxu0
        %v597 = vpop.f32.mrf.mxu0
        %v598 = vpop.f32.mrf.mxu0
        %599 = vdwg.mxu0
        %v600 = vmax.f32 %v595, 0.0
        %v601 = vpack.c.bf16 %v600, %v600
        %v602 = vld [vmem:[%s5] sm:$0xf]
        %v603 = vld [vmem:[%s5 + $0x4] sm:$0xf]
        %v604 = vld [vmem:[%s5 + $0x8] sm:$0xf]
        %v605 = vld [vmem:[%s5 + $0xc] sm:$0xf]
        %v606 = vld [vmem:[%s5 + $0x10] sm:$0xf]
        %v607 = vld [vmem:[%s5 + $0x14] sm:$0xf]
        %v608 = vld [vmem:[%s5 + $0x18] sm:$0xf]
        %v609 = vld [vmem:[%s5 + $0x1c] sm:$0xf]
        %v610 = vld [vmem:[%s5 + $0x20] sm:$0xf]
        %v611 = vld [vmem:[%s5 + $0x24] sm:$0xf]
        %v612 = vld [vmem:[%s5 + $0x28] sm:$0xf]
        %v613 = vld [vmem:[%s5 + $0x2c] sm:$0xf]
        %v614 = vld [vmem:[%s5 + $0x30] sm:$0xf]
        %v615 = vld [vmem:[%s5 + $0x34] sm:$0xf]
        %v616 = vld [vmem:[%s5 + $0x38] sm:$0xf]
        %v617 = vld [vmem:[%s5 + $0x3c] sm:$0xf]
        %v618 = vld [vmem:[%s6] sm:$0x1]
        %v620 = vlaneseq
        %v621 = vshrl.u32 %v620, 7
        %v622 = vsub.s32 0, %v621
        %v623 = vrot.slane %v618, %v622
        %v641 = vunpack.c.l.b16 %v602
        %v642 = vunpack.c.l.b16 %v603
        %v643 = vunpack.c.l.b16 %v604
        %v644 = vunpack.c.l.b16 %v605
        %v645 = vunpack.c.l.b16 %v606
        %v646 = vunpack.c.l.b16 %v607
        %v647 = vunpack.c.l.b16 %v608
        %v648 = vunpack.c.l.b16 %v609
        %v649 = vunpack.c.l.b16 %v610
        %v650 = vunpack.c.l.b16 %v611
        %v651 = vunpack.c.l.b16 %v612
        %v652 = vunpack.c.l.b16 %v613
        %v653 = vunpack.c.l.b16 %v614
        %v654 = vunpack.c.l.b16 %v615
        %v655 = vunpack.c.l.b16 %v616
        %v656 = vunpack.c.l.b16 %v617
        %v657 = vpack.c.b16 %v642, %v641
        %v658 = vpack.c.b16 %v644, %v643
        %v659 = vpack.c.b16 %v646, %v645
        %v660 = vpack.c.b16 %v648, %v647
        %v661 = vpack.c.b16 %v650, %v649
        %v662 = vpack.c.b16 %v652, %v651
        %v663 = vpack.c.b16 %v654, %v653
        %v664 = vpack.c.b16 %v656, %v655
        %673 = vmatprep.subr.bf16.mxu0 0
        %674 = vmatpush1.bf16.msra.mxu0 %v664
        %675 = vmatprep.subr.bf16.mxu0 0
        %676 = vmatpush1.bf16.msra.mxu0 %v663
        %677 = vmatprep.subr.bf16.mxu0 0
        %678 = vmatpush1.bf16.msra.mxu0 %v662
        %679 = vmatprep.subr.bf16.mxu0 0
        %680 = vmatpush1.bf16.msra.mxu0 %v661
        %681 = vmatprep.subr.bf16.mxu0 0
        %682 = vmatpush1.bf16.msra.mxu0 %v660
        %683 = vmatprep.subr.bf16.mxu0 0
        %684 = vmatpush1.bf16.msra.mxu0 %v659
        %685 = vmatprep.subr.bf16.mxu0 0
        %686 = vmatpush1.bf16.msra.mxu0 %v658
        %687 = vmatprep.subr.bf16.mxu0 0
        %688 = vmatpush1.bf16.msra.mxu0 %v657
        %689 = vmatprep.subr.bf16.mxu0 0
        %690 = vmatpush2.bf16.msra.mxu0 0
        %691 = vmatprep.subr.bf16.mxu0 0
        %692 = vmatpush2.bf16.msra.mxu0 0
        %693 = vmatprep.subr.bf16.mxu0 0
        %694 = vmatpush2.bf16.msra.mxu0 0
        %695 = vmatprep.subr.bf16.mxu0 0
        %696 = vmatpush2.bf16.msra.mxu0 0
        %697 = vmatprep.subr.bf16.mxu0 0
        %698 = vmatpush2.bf16.msra.mxu0 0
        %699 = vmatprep.subr.bf16.mxu0 0
        %700 = vmatpush2.bf16.msra.mxu0 0
        %701 = vmatprep.subr.bf16.mxu0 0
        %702 = vmatpush2.bf16.msra.mxu0 0
        %703 = vmatprep.subr.bf16.mxu0 0
        %704 = vmatpush2.bf16.msra.mxu0 0
        %705 = vmatprep.mubr.bf16.mxu0 0
        %706 = vmatmul.mubr.bf16.gmra.mxu0 %v601
        %v707 = vpop.f32.mrf.mxu0
        %v708 = vadd.f32 %v623, %v707
        %v709 = vpop.f32.mrf.mxu0
        %v710 = vpop.f32.mrf.mxu0
        %v711 = vpop.f32.mrf.mxu0
        %712 = vdwg.mxu0
        %v713 = vmul.f32 %v708, 2.0
        %v714 = vadd.f32 %v713, 1.0
        %v715 = vmul.f32 %v708, %v708
        %717 = vrot.lane.b32.xlu0 %v715, 16
        %v718 = vpop.permute.xlu0 %717
        %v720 = vsub.f32 %v714, %v718
        %v721 = vmul.f32 %v713, 1.442695
        %v722 = vpow.pop %v721
        %v723 = vsub.f32 %v720, %v722
        %725 = vrot.lane.b32.xlu0 %v723, 112
        %v726 = vpop.permute.xlu0 %725
        %vm728 = vcmask 130048
        %v729 = vsel %vm728, %v726, 0.0
        %730 = vadd.xlane.f32.xlu0 %v729
        %v731 = vpop.xlane.xlu0 %730
        %v732 = vmul.f32 %v731, -0.5
        %vm733 = vcmask 7168
        %734 = vst.msk [vmem:[%s359] sm:$0xff] %vm733, %v732
        %v735 = vsel %vm728, %v708, -inf
        %736 = vmax.xlane.f32.xlu0 %v735
        %v737 = vpop.xlane.xlu0 %736
        %v738 = vsub.f32 %v708, %v737
        %v739 = vmul.f32 %v738, 1.442695
        %v740 = vpow.pop %v739
        %v741 = vsel %vm728, %v740, 0.0
        %742 = vadd.xlane.f32.xlu0 %v741
        %v743 = vpop.xlane.xlu0 %742
        %v744 = vrcp.pop %v743
        %v745 = vmul.f32 %v740, %v744
        %746 = vst.msk [vmem:[%s355] sm:$0xff] %vm728, %v745
      $region56: #{_lambda_.8} parent=47 // pred_fallthru
        _
      %p747 = scmp.lt.s32.totalorder %s24, 0
      %s748 = scalar_select %p747, %s24, 0
      %s749 = smul.addr %s748, 8
      %s750 = scalar_lea.vmem %s7, %s749
      %p751 = scmp.lt.s32.totalorder %s24, 0
      %s752 = scalar_select %p751, %s24, 0
      %s753 = smul.addr %s752, 8
      %s754 = scalar_lea.vmem %s8, %s753
      // Predicated region
      $region57: #{_lambda_.8} parent=47 // pred_check
        %p755 = pneg %p209
      $region58: #{_lambda_.8} parent=47 // pred_check_branch
        %757 = sbr.rel (%p755) target = $region60
      $region59: #{_lambda_.8} parent=47 // pred_region
        _
      $region60: #{_lambda_.8} parent=47 // pred_fallthru
        _
      // Predicated region
      $region61: #{_lambda_.8} parent=47 // pred_check
        %p758 = pneg %p235
      $region62: #{_lambda_.8} parent=47 // pred_check_branch
        %760 = sbr.rel (%p758) target = $region64
      $region63: #{_lambda_.8} parent=47 // pred_region
        _
      $region64: #{_lambda_.8} parent=47 // pred_fallthru
        _
      // Predicated region
      $region65: #{_lambda_.8} parent=47 // pred_check
        %p761 = pneg %p209
      $region66: #{_lambda_.8} parent=47 // pred_check_branch
        %763 = sbr.rel (%p761) target = $region68
      $region67: #{_lambda_.8} parent=47 // pred_region
        %p764 = scmp.lt.s32.totalorder %s24, 0
        %s765 = scalar_select %p764, %s24, 0
        %s766 = smul.addr %s765, 8
        %s767 = scalar_lea.vmem %s7, %s766
      $region68: #{_lambda_.8} parent=47 // pred_fallthru
        _
      // Predicated region
      $region69: #{_lambda_.8} parent=47 // pred_check
        %p768 = pneg %p235
      $region70: #{_lambda_.8} parent=47 // pred_check_branch
        %770 = sbr.rel (%p768) target = $region72
      $region71: #{_lambda_.8} parent=47 // pred_region
        %p771 = scmp.lt.s32.totalorder %s24, 0
        %s772 = scalar_select %p771, %s24, 0
        %s773 = smul.addr %s772, 8
        %s774 = scalar_lea.vmem %s8, %s773
      $region72: #{_lambda_.8} parent=47 // pred_fallthru
        _
    $region48: #{_lambda_.8} parent=5 // pred_fallthru
      _
    %p775 = scmp.le.s32.totalorder 2, %s15
    // Predicated region
    $region73: #{_lambda_.8} parent=5 // pred_check
      %p776 = pneg %p775
    $region74: #{_lambda_.8} parent=5 // pred_check_branch
      %778 = sbr.rel (%p776) target = $region76
    $region75: #{_lambda_.8} parent=5 // pred_region
      %s779 = ssub.s32 %s15, 2
    $region76: #{_lambda_.8} parent=5 // pred_fallthru
      _
  $region6: #{_lambda_.8} parent=0 // loop_footer
    %s19 = sadd.s32 1, %s15
  $region7: #{_lambda_.8} parent=0 // loop_footer_branch
    %14 = sbr.rel target = $region3
  $region8: #{_lambda_.8} parent=0 // loop_exit
    _

// kernel: _lambda_.12
$region0: #{_lambda_.12}
  #allocation0 [shape = 'u32[]', space=smem, size = 0x4, offset = 0x4, fixed_abs, tag = 'smem constant byte address 0x4 - core index']
  #allocation1 [shape = 'u32[144,128]{1,0:T(1,128)}', space=vmem, size = 0x12000, scoped, tag = 'internal scratch']
  %s0 = inlined_call_operand.vmem [shape: bf16[384,128], index: 0, kind: input, shape index: {}]
  %s1 = inlined_call_operand.vmem [shape: bf16[16,128], index: 1, kind: input, shape index: {}]
  %s2 = inlined_call_operand.vmem [shape: f32[16,1], index: 2, kind: output, shape index: {0}]
  %s3 = inlined_call_operand.vmem [shape: f32[16,1], index: 3, kind: output, shape index: {1}]
  %4 = xla_tuple %s2, %s3
  %s5 = sld [smem:[#allocation0]]
  $region53: #{_lambda_.12} parent=0
    _
  %s7 = ssub.s32 1, %s5
  %s8 = scalar_select 0, %s7, %s5
  loop: start=0, step=1, limit=5
  $region2: #{_lambda_.12} parent=0 // loop_pre_header
    _
  $region3: #{_lambda_.12} parent=0 // loop_header
    %s10 = sphi 0, %s14
    %p11 = scmp.ge.s32.totalorder %s10, 5
    %s17 = sphi 0, %s29
    %s18 = sphi 0, %s25
    %s19 = sphi 0, %s17
    %s20 = sphi 0, %s18
    %s21 = sphi 0, %s19
    %s22 = sphi 0, %s20
    %s32 = sphi 0, %s34
    %s35 = sphi 0, %s32
    %s36 = sphi 0, %s35
    %s52 = sphi 0, %s36
    %s58 = sphi 0, %s60
    %s61 = sphi 0, %s58
    %s62 = sphi 0, %s61
    %s78 = sphi 0, %s62
    %s84 = sphi 0, %s86
    %s87 = sphi 0, %s84
    %s88 = sphi 0, %s87
    %s104 = sphi 0, %s88
    %s110 = sphi 0, %s112
    %s113 = sphi 0, %s110
    %s114 = sphi 0, %s113
    %s130 = sphi 0, %s114
  $region4: #{_lambda_.12} parent=0 // loop_header_branch
    %13 = sbr.rel (%p11) target = $region8
  $region5: #{_lambda_.12} parent=0 // loop_body
    %s15 = ssub.s32 %s10, 1
    %s16 = ssub.s32 %s10, 2
    %s23 = sadd.s32 1, %s18
    %p24 = scmp.ge.s32.totalorder %s23, 3
    %s25 = scalar_select %p24, 0, %s23
    %s26 = sadd.s32 1, %s17
    %s27 = scalar_select %p24, %s26, %s17
    %p28 = scmp.ge.s32.totalorder %s27, 1
    %s29 = scalar_select %p28, 0, %s27
    %s30 = ssub.s32 %s18, %s25
    %p31 = scmp.eq.s32.totalorder %s30, 0
    %s33 = sadd.s32 %s32, 1
    %s34 = scalar_select %p31, %s32, %s33
    %p37 = pneg %p31
    %p38 = scmp.eq.s32.totalorder %s10, 2
    %p39 = por %p37, %p38
    %p40 = scmp.ne.s32.totalorder %s32, %s35
    %p41 = scmp.eq.s32.totalorder %s10, 0
    %p42 = por %p40, %p41
    %p43 = scmp.ne.s32.totalorder %s32, %s35
    %p44 = scmp.eq.s32.totalorder %s15, 2
    %p45 = por %p43, %p44
    %p46 = scmp.ne.s32.totalorder %s35, %s36
    %p47 = scmp.eq.s32.totalorder %s15, 0
    %p48 = por %p46, %p47
    %p49 = scmp.ne.s32.totalorder %s35, %s36
    %p50 = scmp.eq.s32.totalorder %s16, 2
    %p51 = por %p49, %p50
    %p53 = scmp.ne.s32.totalorder %s36, %s52
    %p54 = scmp.eq.s32.totalorder %s16, 0
    %p55 = por %p53, %p54
    %s56 = ssub.s32 %s17, %s29
    %p57 = scmp.eq.s32.totalorder %s56, 0
    %s59 = sadd.s32 %s58, 1
    %s60 = scalar_select %p57, %s58, %s59
    %p63 = pneg %p57
    %p64 = scmp.eq.s32.totalorder %s10, 2
    %p65 = por %p63, %p64
    %p66 = scmp.ne.s32.totalorder %s58, %s61
    %p67 = scmp.eq.s32.totalorder %s10, 0
    %p68 = por %p66, %p67
    %p69 = scmp.ne.s32.totalorder %s58, %s61
    %p70 = scmp.eq.s32.totalorder %s15, 2
    %p71 = por %p69, %p70
    %p72 = scmp.ne.s32.totalorder %s61, %s62
    %p73 = scmp.eq.s32.totalorder %s15, 0
    %p74 = por %p72, %p73
    %p75 = scmp.ne.s32.totalorder %s61, %s62
    %p76 = scmp.eq.s32.totalorder %s16, 2
    %p77 = por %p75, %p76
    %p79 = scmp.ne.s32.totalorder %s62, %s78
    %p80 = scmp.eq.s32.totalorder %s16, 0
    %p81 = por %p79, %p80
    %s82 = ssub.s32 %s17, %s29
    %p83 = scmp.eq.s32.totalorder %s82, 0
    %s85 = sadd.s32 %s84, 1
    %s86 = scalar_select %p83, %s84, %s85
    %p89 = pneg %p83
    %p90 = scmp.eq.s32.totalorder %s10, 2
    %p91 = por %p89, %p90
    %p92 = scmp.ne.s32.totalorder %s84, %s87
    %p93 = scmp.eq.s32.totalorder %s10, 0
    %p94 = por %p92, %p93
    %p95 = scmp.ne.s32.totalorder %s84, %s87
    %p96 = scmp.eq.s32.totalorder %s15, 2
    %p97 = por %p95, %p96
    %p98 = scmp.ne.s32.totalorder %s87, %s88
    %p99 = scmp.eq.s32.totalorder %s15, 0
    %p100 = por %p98, %p99
    %p101 = scmp.ne.s32.totalorder %s87, %s88
    %p102 = scmp.eq.s32.totalorder %s16, 2
    %p103 = por %p101, %p102
    %p105 = scmp.ne.s32.totalorder %s88, %s104
    %p106 = scmp.eq.s32.totalorder %s16, 0
    %p107 = por %p105, %p106
    %s108 = ssub.s32 %s17, %s29
    %p109 = scmp.eq.s32.totalorder %s108, 0
    %s111 = sadd.s32 %s110, 1
    %s112 = scalar_select %p109, %s110, %s111
    %p115 = pneg %p109
    %p116 = scmp.eq.s32.totalorder %s10, 2
    %p117 = por %p115, %p116
    %p118 = scmp.ne.s32.totalorder %s110, %s113
    %p119 = scmp.eq.s32.totalorder %s10, 0
    %p120 = por %p118, %p119
    %p121 = scmp.ne.s32.totalorder %s110, %s113
    %p122 = scmp.eq.s32.totalorder %s15, 2
    %p123 = por %p121, %p122
    %p124 = scmp.ne.s32.totalorder %s113, %s114
    %p125 = scmp.eq.s32.totalorder %s15, 0
    %p126 = por %p124, %p125
    %p127 = scmp.ne.s32.totalorder %s113, %s114
    %p128 = scmp.eq.s32.totalorder %s16, 2
    %p129 = por %p127, %p128
    %p131 = scmp.ne.s32.totalorder %s114, %s130
    %p132 = scmp.eq.s32.totalorder %s16, 0
    %p133 = por %p131, %p132
    %p134 = scmp.le.s32.totalorder 1, %s10
    %p135 = scmp.lt.s32.totalorder %s10, 4
    %p136 = pnand %p134, %p135
    %p137 = pneg %p136
    // Predicated region
    $region9: #{_lambda_.12} parent=5 // pred_check
      _
    $region10: #{_lambda_.12} parent=5 // pred_check_branch
      %139 = sbr.rel (%p136) target = $region12
    $region11: #{_lambda_.12} parent=5 // pred_region
      %s140 = ssub.s32 %s10, 1
      // Predicated region
      $region13: #{_lambda_.12} parent=11 // pred_check
        %p141 = pneg %p74
      $region14: #{_lambda_.12} parent=11 // pred_check_branch
        %143 = sbr.rel (%p141) target = $region16
      $region15: #{_lambda_.12} parent=11 // pred_region
        %s144 = smul.u32 2, %s19
        %p145 = scmp.lt.s32.totalorder %s144, 1
        %s146 = scalar_select %p145, %s144, 1
        %s147 = smul.addr %s146, 4
        %s148 = scalar_lea.vmem %s1, %s147
        %s149 = smul.u32 2, %s19
      $region16: #{_lambda_.12} parent=11 // pred_fallthru
        _
    $region12: #{_lambda_.12} parent=5 // pred_fallthru
      _
    %p150 = scmp.lt.s32.totalorder %s10, 3
    // Predicated region
    $region17: #{_lambda_.12} parent=5 // pred_check
      %p151 = pneg %p150
    $region18: #{_lambda_.12} parent=5 // pred_check_branch
      %153 = sbr.rel (%p151) target = $region20
    $region19: #{_lambda_.12} parent=5 // pred_region
      // Predicated region
      $region21: #{_lambda_.12} parent=19 // pred_check
        %p154 = pneg %p42
      $region22: #{_lambda_.12} parent=19 // pred_check_branch
        %156 = sbr.rel (%p154) target = $region24
      $region23: #{_lambda_.12} parent=19 // pred_region
        %s157 = smul.u32 16, %s18
        %p158 = scmp.lt.s32.totalorder %s157, 47
        %s159 = scalar_select %p158, %s157, 47
        %s160 = smul.addr %s159, 4
        %s161 = scalar_lea.vmem %s0, %s160
        %s162 = smul.u32 16, %s18
      $region24: #{_lambda_.12} parent=19 // pred_fallthru
        _
    $region20: #{_lambda_.12} parent=5 // pred_fallthru
      _
    %p163 = scmp.le.s32.totalorder 1, %s10
    %p164 = scmp.lt.s32.totalorder %s10, 4
    %p165 = pnand %p163, %p164
    %p166 = pneg %p165
    // Predicated region
    $region25: #{_lambda_.12} parent=5 // pred_check
      _
    $region26: #{_lambda_.12} parent=5 // pred_check_branch
      %168 = sbr.rel (%p165) target = $region28
    $region27: #{_lambda_.12} parent=5 // pred_region
      %s169 = ssub.s32 %s10, 1
      %s170 = smul.u32 16, %s20
      %p171 = scmp.lt.s32.totalorder %s170, 47
      %s172 = scalar_select %p171, %s170, 47
      %s173 = smul.addr %s172, 4
      %s174 = scalar_lea.vmem %s0, %s173
      %p175 = pneg %p48
      %p176 = pneg %p45
      %s177 = smul.u32 2, %s19
      %p178 = scmp.lt.s32.totalorder %s177, 1
      %s179 = scalar_select %p178, %s177, 1
      %s180 = smul.addr %s179, 4
      %s181 = scalar_lea.vmem %s1, %s180
      %p182 = pneg %p74
      %p183 = pneg %p71
      %p184 = pneg %p100
      %p185 = pneg %p97
      %s186 = smul.u32 2, %s19
      %p187 = scmp.lt.s32.totalorder %s186, 1
      %s188 = scalar_select %p187, %s186, 1
      %s189 = smul.addr %s188, 8
      %s190 = scalar_lea.vmem %s2, %s189
      %p191 = pneg %p126
      %p192 = pneg %p123
      %s193 = smul.u32 2, %s19
      %p194 = scmp.lt.s32.totalorder %s193, 1
      %s195 = scalar_select %p194, %s193, 1
      %s196 = smul.addr %s195, 8
      %s197 = scalar_lea.vmem %s3, %s196
      %s198 = smul.u32 16, %s20
      %p199 = scmp.lt.s32.totalorder %s198, 47
      %s200 = scalar_select %p199, %s198, 47
      %s201 = smul.addr %s200, 4
      %s202 = scalar_lea.vmem %s0, %s201
      %s203 = smul.u32 16, %s20
      %s204 = smul.u32 2, %s19
      %p205 = scmp.lt.s32.totalorder %s204, 1
      %s206 = scalar_select %p205, %s204, 1
      %s207 = smul.addr %s206, 4
      %s208 = scalar_lea.vmem %s1, %s207
      %s209 = smul.u32 2, %s19
      %s210 = smul.u32 2, %s19
      %p211 = scmp.lt.s32.totalorder %s210, 1
      %s212 = scalar_select %p211, %s210, 1
      %s213 = smul.addr %s212, 8
      %s214 = scalar_lea.vmem %s2, %s213
      %s215 = smul.u32 2, %s19
      %s216 = smul.u32 2, %s19
      %p217 = scmp.lt.s32.totalorder %s216, 1
      %s218 = scalar_select %p217, %s216, 1
      %s219 = smul.addr %s218, 8
      %s220 = scalar_lea.vmem %s3, %s219
      %s221 = smul.u32 2, %s19
      %p223 = scmp.eq.s32.totalorder %s20, 0
      // Predicated region
      $region29: #{_lambda_.12} parent=27 // pred_check
        %p224 = pneg %p223
      $region30: #{_lambda_.12} parent=27 // pred_check_branch
        %226 = sbr.rel (%p224) target = $region32
      $region31: #{_lambda_.12} parent=27 // pred_region
        %vm227 = vcmask 7168
        %228 = vst.msk [vmem:[%s214] sm:$0xff] %vm227, -1e+30
        %229 = vst.msk [vmem:[%s214 + $0x8] sm:$0xff] %vm227, -1e+30
        %230 = vst.msk [vmem:[%s220] sm:$0xff] %vm227, 0.0
        %231 = vst.msk [vmem:[%s220 + $0x8] sm:$0xff] %vm227, 0.0
      $region32: #{_lambda_.12} parent=27 // pred_fallthru
        _
      %v232 = vld [vmem:[%s208] sm:$0xf]
      %v233 = vld [vmem:[%s208 + $0x4] sm:$0xf]
      %v234 = vld [vmem:[%s202] sm:$0xf]
      %v235 = vld [vmem:[%s202 + $0x4] sm:$0xf]
      %v236 = vld [vmem:[%s202 + $0x8] sm:$0xf]
      %v237 = vld [vmem:[%s202 + $0xc] sm:$0xf]
      %v238 = vld [vmem:[%s202 + $0x10] sm:$0xf]
      %v239 = vld [vmem:[%s202 + $0x14] sm:$0xf]
      %v240 = vld [vmem:[%s202 + $0x18] sm:$0xf]
      %v241 = vld [vmem:[%s202 + $0x1c] sm:$0xf]
      %v242 = vld [vmem:[%s202 + $0x20] sm:$0xf]
      %v243 = vld [vmem:[%s202 + $0x24] sm:$0xf]
      %v244 = vld [vmem:[%s202 + $0x28] sm:$0xf]
      %v245 = vld [vmem:[%s202 + $0x2c] sm:$0xf]
      %v246 = vld [vmem:[%s202 + $0x30] sm:$0xf]
      %v247 = vld [vmem:[%s202 + $0x34] sm:$0xf]
      %v248 = vld [vmem:[%s202 + $0x38] sm:$0xf]
      %v249 = vld [vmem:[%s202 + $0x3c] sm:$0xf]
      %v252 = vunpack.c.l.b16 %v232
      %v253 = vunpack.c.l.b16 %v233
      %v254 = vpack.c.b16 %v253, %v252
      %v272 = vunpack.c.l.b16 %v234
      %v273 = vunpack.c.l.b16 %v235
      %v274 = vunpack.c.l.b16 %v236
      %v275 = vunpack.c.l.b16 %v237
      %v276 = vunpack.c.l.b16 %v238
      %v277 = vunpack.c.l.b16 %v239
      %v278 = vunpack.c.l.b16 %v240
      %v279 = vunpack.c.l.b16 %v241
      %v280 = vunpack.c.l.b16 %v242
      %v281 = vunpack.c.l.b16 %v243
      %v282 = vunpack.c.l.b16 %v244
      %v283 = vunpack.c.l.b16 %v245
      %v284 = vunpack.c.l.b16 %v246
      %v285 = vunpack.c.l.b16 %v247
      %v286 = vunpack.c.l.b16 %v248
      %v287 = vunpack.c.l.b16 %v249
      %v288 = vpack.c.b16 %v273, %v272
      %v289 = vpack.c.b16 %v275, %v274
      %v290 = vpack.c.b16 %v277, %v276
      %v291 = vpack.c.b16 %v279, %v278
      %v292 = vpack.c.b16 %v281, %v280
      %v293 = vpack.c.b16 %v283, %v282
      %v294 = vpack.c.b16 %v285, %v284
      %v295 = vpack.c.b16 %v287, %v286
      %304 = vmatprep.subr.bf16.mxu0 0
      %305 = vmatpush1.bf16.xpose.msra.mxu0 %v295
      %306 = vmatprep.subr.bf16.mxu0 0
      %307 = vmatpush1.bf16.xpose.msra.mxu0 %v294
      %308 = vmatprep.subr.bf16.mxu0 0
      %309 = vmatpush1.bf16.xpose.msra.mxu0 %v293
      %310 = vmatprep.subr.bf16.mxu0 0
      %311 = vmatpush1.bf16.xpose.msra.mxu0 %v292
      %312 = vmatprep.subr.bf16.mxu0 0
      %313 = vmatpush1.bf16.xpose.msra.mxu0 %v291
      %314 = vmatprep.subr.bf16.mxu0 0
      %315 = vmatpush1.bf16.xpose.msra.mxu0 %v290
      %316 = vmatprep.subr.bf16.mxu0 0
      %317 = vmatpush1.bf16.xpose.msra.mxu0 %v289
      %318 = vmatprep.subr.bf16.mxu0 0
      %319 = vmatpush1.bf16.xpose.msra.mxu0 %v288
      %320 = vmatprep.subr.bf16.mxu0 0
      %321 = vmatpush2.bf16.xpose.msra.mxu0 0
      %322 = vmatprep.subr.bf16.mxu0 0
      %323 = vmatpush2.bf16.xpose.msra.mxu0 0
      %324 = vmatprep.subr.bf16.mxu0 0
      %325 = vmatpush2.bf16.xpose.msra.mxu0 0
      %326 = vmatprep.subr.bf16.mxu0 0
      %327 = vmatpush2.bf16.xpose.msra.mxu0 0
      %328 = vmatprep.subr.bf16.mxu0 0
      %329 = vmatpush2.bf16.xpose.msra.mxu0 0
      %330 = vmatprep.subr.bf16.mxu0 0
      %331 = vmatpush2.bf16.xpose.msra.mxu0 0
      %332 = vmatprep.subr.bf16.mxu0 0
      %333 = vmatpush2.bf16.xpose.msra.mxu0 0
      %334 = vmatprep.subr.bf16.mxu0 0
      %335 = vmatpush2.bf16.xpose.msra.mxu0 0
      %336 = vmatprep.mubr.bf16.mxu0 0
      %337 = vmatmul.mubr.bf16.gmra.mxu0 %v254
      %v338 = vpop.f32.mrf.mxu0
      %v339 = vadd.f32 0.0, %v338
      %v340 = vpop.f32.mrf.mxu0
      %v341 = vpop.f32.mrf.mxu0
      %v342 = vadd.f32 0.0, %v341
      %v343 = vpop.f32.mrf.mxu0
      %344 = vdwg.mxu0
      %345 = vmax.xlane.f32.xlu0 %v339
      %v346 = vpop.xlane.xlu0 %345
      %347 = vmax.xlane.f32.xlu0 %v342
      %v348 = vpop.xlane.xlu0 %347
      %v349 = vld [vmem:[%s214] sm:$0xff]
      %v350 = vld [vmem:[%s214 + $0x8] sm:$0xff]
      %v351 = vmax.f32 %v349, %v346
      %v352 = vmax.f32 %v350, %v348
      %v353 = vld [vmem:[%s220] sm:$0xff]
      %v354 = vld [vmem:[%s220 + $0x8] sm:$0xff]
      %v355 = vsub.f32 %v349, %v351
      %v356 = vsub.f32 %v350, %v352
      %v357 = vmul.f32 %v355, 1.442695
      %v358 = vpow.pop %v357
      %v359 = vmul.f32 %v356, 1.442695
      %v360 = vpow.pop %v359
      %v361 = vmul.f32 %v353, %v358
      %v362 = vmul.f32 %v354, %v360
      %364 = vset.pattern.permute.xlu0 0
      %365 = vperm.xlu0 %364, %v351
      %v366 = vpop.permute.xlu0 %365
      %369 = vset.pattern.permute.xlu0 0
      %370 = vperm.xlu0 %369, %v352
      %v371 = vpop.permute.xlu0 %370
      %v373 = vsub.f32 %v339, %v366
      %v374 = vsub.f32 %v342, %v371
      %v375 = vmul.f32 %v373, 1.442695
      %v376 = vpow.pop %v375
      %v377 = vmul.f32 %v374, 1.442695
      %v378 = vpow.pop %v377
      %379 = vadd.xlane.f32.xlu0 %v376
      %v380 = vpop.xlane.xlu0 %379
      %381 = vadd.xlane.f32.xlu0 %v378
      %v382 = vpop.xlane.xlu0 %381
      %v383 = vadd.f32 %v361, %v380
      %v384 = vadd.f32 %v362, %v382
      %vm385 = vcmask 7168
      %386 = vst.msk [vmem:[%s220] sm:$0xff] %vm385, %v383
      %387 = vst.msk [vmem:[%s220 + $0x8] sm:$0xff] %vm385, %v384
      %388 = vst.msk [vmem:[%s214] sm:$0xff] %vm385, %v351
      %389 = vst.msk [vmem:[%s214 + $0x8] sm:$0xff] %vm385, %v352
      %s390 = smul.u32 2, %s19
      %p391 = scmp.lt.s32.totalorder %s390, 1
      %s392 = scalar_select %p391, %s390, 1
      %s393 = smul.addr %s392, 8
      %s394 = scalar_lea.vmem %s2, %s393
      %s395 = smul.u32 2, %s19
      %p396 = scmp.lt.s32.totalorder %s395, 1
      %s397 = scalar_select %p396, %s395, 1
      %s398 = smul.addr %s397, 8
      %s399 = scalar_lea.vmem %s3, %s398
      // Predicated region
      $region33: #{_lambda_.12} parent=27 // pred_check
        %p400 = pneg %p97
      $region34: #{_lambda_.12} parent=27 // pred_check_branch
        %402 = sbr.rel (%p400) target = $region36
      $region35: #{_lambda_.12} parent=27 // pred_region
        %s403 = smul.u32 2, %s19
      $region36: #{_lambda_.12} parent=27 // pred_fallthru
        _
      // Predicated region
      $region37: #{_lambda_.12} parent=27 // pred_check
        %p404 = pneg %p123
      $region38: #{_lambda_.12} parent=27 // pred_check_branch
        %406 = sbr.rel (%p404) target = $region40
      $region39: #{_lambda_.12} parent=27 // pred_region
        %s407 = smul.u32 2, %s19
      $region40: #{_lambda_.12} parent=27 // pred_fallthru
        _
      // Predicated region
      $region41: #{_lambda_.12} parent=27 // pred_check
        %p408 = pneg %p97
      $region42: #{_lambda_.12} parent=27 // pred_check_branch
        %410 = sbr.rel (%p408) target = $region44
      $region43: #{_lambda_.12} parent=27 // pred_region
        %s411 = smul.u32 2, %s19
        %p412 = scmp.lt.s32.totalorder %s411, 1
        %s413 = scalar_select %p412, %s411, 1
        %s414 = smul.addr %s413, 8
        %s415 = scalar_lea.vmem %s2, %s414
      $region44: #{_lambda_.12} parent=27 // pred_fallthru
        _
      // Predicated region
      $region45: #{_lambda_.12} parent=27 // pred_check
        %p416 = pneg %p123
      $region46: #{_lambda_.12} parent=27 // pred_check_branch
        %418 = sbr.rel (%p416) target = $region48
      $region47: #{_lambda_.12} parent=27 // pred_region
        %s419 = smul.u32 2, %s19
        %p420 = scmp.lt.s32.totalorder %s419, 1
        %s421 = scalar_select %p420, %s419, 1
        %s422 = smul.addr %s421, 8
        %s423 = scalar_lea.vmem %s3, %s422
      $region48: #{_lambda_.12} parent=27 // pred_fallthru
        _
    $region28: #{_lambda_.12} parent=5 // pred_fallthru
      _
    %p424 = scmp.le.s32.totalorder 2, %s10
    // Predicated region
    $region49: #{_lambda_.12} parent=5 // pred_check
      %p425 = pneg %p424
    $region50: #{_lambda_.12} parent=5 // pred_check_branch
      %427 = sbr.rel (%p425) target = $region52
    $region51: #{_lambda_.12} parent=5 // pred_region
      %s428 = ssub.s32 %s10, 2
    $region52: #{_lambda_.12} parent=5 // pred_fallthru
      _
  $region6: #{_lambda_.12} parent=0 // loop_footer
    %s14 = sadd.s32 1, %s10
  $region7: #{_lambda_.12} parent=0 // loop_footer_branch
    %9 = sbr.rel target = $region3
  $region8: #{_lambda_.12} parent=0 // loop_exit
    _

// kernel: _lambda_.13
$region0: #{_lambda_.13}
  #allocation0 [shape = 'u32[]', space=smem, size = 0x4, offset = 0x4, fixed_abs, tag = 'smem constant byte address 0x4 - core index']
  #allocation1 [shape = 'u32[144,128]{1,0:T(1,128)}', space=vmem, size = 0x12000, scoped, tag = 'internal scratch']
  %s0 = inlined_call_operand.vmem [shape: bf16[384,128], index: 0, kind: input, shape index: {}]
  %s1 = inlined_call_operand.vmem [shape: bf16[16,128], index: 1, kind: input, shape index: {}]
  %s2 = inlined_call_operand.vmem [shape: f32[16,1], index: 2, kind: input, shape index: {}]
  %s3 = inlined_call_operand.vmem [shape: f32[16,1], index: 3, kind: input, shape index: {}]
  %s4 = inlined_call_operand.vmem [shape: bf16[16,384], index: 4, kind: output, shape index: {}]
  %s5 = sld [smem:[#allocation0]]
  $region86: #{_lambda_.13} parent=0
    _
  %s7 = ssub.s32 1, %s5
  %s8 = scalar_select 0, %s7, %s5
  $region1: #{_lambda_.13} parent=0
    #allocation2 [shape = 'u8[8192]{0}', space=vmem, size = 0x2000, scoped, tag = 'output window, operand 0']
    loop: start=0, step=1, limit=5
    $region2: #{_lambda_.13} parent=1 // loop_pre_header
      _
    $region3: #{_lambda_.13} parent=1 // loop_header
      %s10 = sphi 0, %s14
      %p11 = scmp.ge.s32.totalorder %s10, 5
      %s17 = sphi 0, %s29
      %s18 = sphi 0, %s25
      %s19 = sphi 0, %s17
      %s20 = sphi 0, %s18
      %s21 = sphi 0, %s19
      %s22 = sphi 0, %s20
      %s32 = sphi 0, %s34
      %s35 = sphi 0, %s32
      %s36 = sphi 0, %s35
      %s52 = sphi 0, %s36
      %s58 = sphi 0, %s60
      %s61 = sphi 0, %s58
      %s62 = sphi 0, %s61
      %s78 = sphi 0, %s62
      %s84 = sphi 0, %s86
      %s87 = sphi 0, %s84
      %s88 = sphi 0, %s87
      %s104 = sphi 0, %s88
      %s110 = sphi 0, %s112
      %s113 = sphi 0, %s110
      %s114 = sphi 0, %s113
      %s130 = sphi 0, %s114
      %s138 = sphi 0, %s140
      %s141 = sphi 0, %s138
      %s142 = sphi 0, %s141
      %s158 = sphi 0, %s142
    $region4: #{_lambda_.13} parent=1 // loop_header_branch
      %13 = sbr.rel (%p11) target = $region8
    $region5: #{_lambda_.13} parent=1 // loop_body
      %s15 = ssub.s32 %s10, 1
      %s16 = ssub.s32 %s10, 2
      %s23 = sadd.s32 1, %s18
      %p24 = scmp.ge.s32.totalorder %s23, 3
      %s25 = scalar_select %p24, 0, %s23
      %s26 = sadd.s32 1, %s17
      %s27 = scalar_select %p24, %s26, %s17
      %p28 = scmp.ge.s32.totalorder %s27, 1
      %s29 = scalar_select %p28, 0, %s27
      %s30 = ssub.s32 %s18, %s25
      %p31 = scmp.eq.s32.totalorder %s30, 0
      %s33 = sadd.s32 %s32, 1
      %s34 = scalar_select %p31, %s32, %s33
      %p37 = pneg %p31
      %p38 = scmp.eq.s32.totalorder %s10, 2
      %p39 = por %p37, %p38
      %p40 = scmp.ne.s32.totalorder %s32, %s35
      %p41 = scmp.eq.s32.totalorder %s10, 0
      %p42 = por %p40, %p41
      %p43 = scmp.ne.s32.totalorder %s32, %s35
      %p44 = scmp.eq.s32.totalorder %s15, 2
      %p45 = por %p43, %p44
      %p46 = scmp.ne.s32.totalorder %s35, %s36
      %p47 = scmp.eq.s32.totalorder %s15, 0
      %p48 = por %p46, %p47
      %p49 = scmp.ne.s32.totalorder %s35, %s36
      %p50 = scmp.eq.s32.totalorder %s16, 2
      %p51 = por %p49, %p50
      %p53 = scmp.ne.s32.totalorder %s36, %s52
      %p54 = scmp.eq.s32.totalorder %s16, 0
      %p55 = por %p53, %p54
      %s56 = ssub.s32 %s17, %s29
      %p57 = scmp.eq.s32.totalorder %s56, 0
      %s59 = sadd.s32 %s58, 1
      %s60 = scalar_select %p57, %s58, %s59
      %p63 = pneg %p57
      %p64 = scmp.eq.s32.totalorder %s10, 2
      %p65 = por %p63, %p64
      %p66 = scmp.ne.s32.totalorder %s58, %s61
      %p67 = scmp.eq.s32.totalorder %s10, 0
      %p68 = por %p66, %p67
      %p69 = scmp.ne.s32.totalorder %s58, %s61
      %p70 = scmp.eq.s32.totalorder %s15, 2
      %p71 = por %p69, %p70
      %p72 = scmp.ne.s32.totalorder %s61, %s62
      %p73 = scmp.eq.s32.totalorder %s15, 0
      %p74 = por %p72, %p73
      %p75 = scmp.ne.s32.totalorder %s61, %s62
      %p76 = scmp.eq.s32.totalorder %s16, 2
      %p77 = por %p75, %p76
      %p79 = scmp.ne.s32.totalorder %s62, %s78
      %p80 = scmp.eq.s32.totalorder %s16, 0
      %p81 = por %p79, %p80
      %s82 = ssub.s32 %s17, %s29
      %p83 = scmp.eq.s32.totalorder %s82, 0
      %s85 = sadd.s32 %s84, 1
      %s86 = scalar_select %p83, %s84, %s85
      %p89 = pneg %p83
      %p90 = scmp.eq.s32.totalorder %s10, 2
      %p91 = por %p89, %p90
      %p92 = scmp.ne.s32.totalorder %s84, %s87
      %p93 = scmp.eq.s32.totalorder %s10, 0
      %p94 = por %p92, %p93
      %p95 = scmp.ne.s32.totalorder %s84, %s87
      %p96 = scmp.eq.s32.totalorder %s15, 2
      %p97 = por %p95, %p96
      %p98 = scmp.ne.s32.totalorder %s87, %s88
      %p99 = scmp.eq.s32.totalorder %s15, 0
      %p100 = por %p98, %p99
      %p101 = scmp.ne.s32.totalorder %s87, %s88
      %p102 = scmp.eq.s32.totalorder %s16, 2
      %p103 = por %p101, %p102
      %p105 = scmp.ne.s32.totalorder %s88, %s104
      %p106 = scmp.eq.s32.totalorder %s16, 0
      %p107 = por %p105, %p106
      %s108 = ssub.s32 %s17, %s29
      %p109 = scmp.eq.s32.totalorder %s108, 0
      %s111 = sadd.s32 %s110, 1
      %s112 = scalar_select %p109, %s110, %s111
      %p115 = pneg %p109
      %p116 = scmp.eq.s32.totalorder %s10, 2
      %p117 = por %p115, %p116
      %p118 = scmp.ne.s32.totalorder %s110, %s113
      %p119 = scmp.eq.s32.totalorder %s10, 0
      %p120 = por %p118, %p119
      %p121 = scmp.ne.s32.totalorder %s110, %s113
      %p122 = scmp.eq.s32.totalorder %s15, 2
      %p123 = por %p121, %p122
      %p124 = scmp.ne.s32.totalorder %s113, %s114
      %p125 = scmp.eq.s32.totalorder %s15, 0
      %p126 = por %p124, %p125
      %p127 = scmp.ne.s32.totalorder %s113, %s114
      %p128 = scmp.eq.s32.totalorder %s16, 2
      %p129 = por %p127, %p128
      %p131 = scmp.ne.s32.totalorder %s114, %s130
      %p132 = scmp.eq.s32.totalorder %s16, 0
      %p133 = por %p131, %p132
      %s134 = ssub.s32 %s17, %s29
      %s135 = ssub.s32 %s18, %s25
      %s136 = sor.u32 %s134, %s135
      %p137 = scmp.eq.s32.totalorder %s136, 0
      %s139 = sadd.s32 %s138, 1
      %s140 = scalar_select %p137, %s138, %s139
      %p143 = pneg %p137
      %p144 = scmp.eq.s32.totalorder %s10, 2
      %p145 = por %p143, %p144
      %p146 = scmp.ne.s32.totalorder %s138, %s141
      %p147 = scmp.eq.s32.totalorder %s10, 0
      %p148 = por %p146, %p147
      %p149 = scmp.ne.s32.totalorder %s138, %s141
      %p150 = scmp.eq.s32.totalorder %s15, 2
      %p151 = por %p149, %p150
      %p152 = scmp.ne.s32.totalorder %s141, %s142
      %p153 = scmp.eq.s32.totalorder %s15, 0
      %p154 = por %p152, %p153
      %p155 = scmp.ne.s32.totalorder %s141, %s142
      %p156 = scmp.eq.s32.totalorder %s16, 2
      %p157 = por %p155, %p156
      %p159 = scmp.ne.s32.totalorder %s142, %s158
      %p160 = scmp.eq.s32.totalorder %s16, 0
      %p161 = por %p159, %p160
      %p162 = scmp.le.s32.totalorder 1, %s10
      %p163 = scmp.lt.s32.totalorder %s10, 4
      %p164 = pnand %p162, %p163
      %p165 = pneg %p164
      // Predicated region
      $region9: #{_lambda_.13} parent=5 // pred_check
        _
      $region10: #{_lambda_.13} parent=5 // pred_check_branch
        %167 = sbr.rel (%p164) target = $region12
      $region11: #{_lambda_.13} parent=5 // pred_region
        %s168 = ssub.s32 %s10, 1
        // Predicated region
        $region13: #{_lambda_.13} parent=11 // pred_check
          %p169 = pneg %p74
        $region14: #{_lambda_.13} parent=11 // pred_check_branch
          %171 = sbr.rel (%p169) target = $region16
        $region15: #{_lambda_.13} parent=11 // pred_region
          %s172 = smul.u32 2, %s19
          %p173 = scmp.lt.s32.totalorder %s172, 1
          %s174 = scalar_select %p173, %s172, 1
          %s175 = smul.addr %s174, 4
          %s176 = scalar_lea.vmem %s1, %s175
          %s177 = smul.u32 2, %s19
        $region16: #{_lambda_.13} parent=11 // pred_fallthru
          _
        // Predicated region
        $region17: #{_lambda_.13} parent=11 // pred_check
          %p178 = pneg %p100
        $region18: #{_lambda_.13} parent=11 // pred_check_branch
          %180 = sbr.rel (%p178) target = $region20
        $region19: #{_lambda_.13} parent=11 // pred_region
          %s181 = smul.u32 2, %s19
          %p182 = scmp.lt.s32.totalorder %s181, 1
          %s183 = scalar_select %p182, %s181, 1
          %s184 = smul.addr %s183, 8
          %s185 = scalar_lea.vmem %s2, %s184
          %s186 = smul.u32 2, %s19
        $region20: #{_lambda_.13} parent=11 // pred_fallthru
          _
        // Predicated region
        $region21: #{_lambda_.13} parent=11 // pred_check
          %p187 = pneg %p126
        $region22: #{_lambda_.13} parent=11 // pred_check_branch
          %189 = sbr.rel (%p187) target = $region24
        $region23: #{_lambda_.13} parent=11 // pred_region
          %s190 = smul.u32 2, %s19
          %p191 = scmp.lt.s32.totalorder %s190, 1
          %s192 = scalar_select %p191, %s190, 1
          %s193 = smul.addr %s192, 8
          %s194 = scalar_lea.vmem %s3, %s193
          %s195 = smul.u32 2, %s19
        $region24: #{_lambda_.13} parent=11 // pred_fallthru
          _
      $region12: #{_lambda_.13} parent=5 // pred_fallthru
        _
      %p196 = scmp.lt.s32.totalorder %s10, 3
      // Predicated region
      $region25: #{_lambda_.13} parent=5 // pred_check
        %p197 = pneg %p196
      $region26: #{_lambda_.13} parent=5 // pred_check_branch
        %199 = sbr.rel (%p197) target = $region28
      $region27: #{_lambda_.13} parent=5 // pred_region
        // Predicated region
        $region29: #{_lambda_.13} parent=27 // pred_check
          %p200 = pneg %p42
        $region30: #{_lambda_.13} parent=27 // pred_check_branch
          %202 = sbr.rel (%p200) target = $region32
        $region31: #{_lambda_.13} parent=27 // pred_region
          %s203 = smul.u32 16, %s18
          %p204 = scmp.lt.s32.totalorder %s203, 47
          %s205 = scalar_select %p204, %s203, 47
          %s206 = smul.addr %s205, 4
          %s207 = scalar_lea.vmem %s0, %s206
          %s208 = smul.u32 16, %s18
        $region32: #{_lambda_.13} parent=27 // pred_fallthru
          _
      $region28: #{_lambda_.13} parent=5 // pred_fallthru
        _
      %p209 = scmp.le.s32.totalorder 1, %s10
      %p210 = scmp.lt.s32.totalorder %s10, 4
      %p211 = pnand %p209, %p210
      %p212 = pneg %p211
      // Predicated region
      $region33: #{_lambda_.13} parent=5 // pred_check
        _
      $region34: #{_lambda_.13} parent=5 // pred_check_branch
        %214 = sbr.rel (%p211) target = $region36
      $region35: #{_lambda_.13} parent=5 // pred_region
        %s215 = ssub.s32 %s10, 1
        %s216 = smul.u32 16, %s20
        %p217 = scmp.lt.s32.totalorder %s216, 47
        %s218 = scalar_select %p217, %s216, 47
        %s219 = smul.addr %s218, 4
        %s220 = scalar_lea.vmem %s0, %s219
        %p221 = pneg %p48
        %p222 = pneg %p45
        %s223 = smul.u32 2, %s19
        %p224 = scmp.lt.s32.totalorder %s223, 1
        %s225 = scalar_select %p224, %s223, 1
        %s226 = smul.addr %s225, 4
        %s227 = scalar_lea.vmem %s1, %s226
        %p228 = pneg %p74
        %p229 = pneg %p71
        %s230 = smul.u32 2, %s19
        %p231 = scmp.lt.s32.totalorder %s230, 1
        %s232 = scalar_select %p231, %s230, 1
        %s233 = smul.addr %s232, 8
        %s234 = scalar_lea.vmem %s2, %s233
        %p235 = pneg %p100
        %p236 = pneg %p97
        %s237 = smul.u32 2, %s19
        %p238 = scmp.lt.s32.totalorder %s237, 1
        %s239 = scalar_select %p238, %s237, 1
        %s240 = smul.addr %s239, 8
        %s241 = scalar_lea.vmem %s3, %s240
        %p242 = pneg %p126
        %p243 = pneg %p123
        %p244 = pneg %p154
        %p245 = pneg %p151
        %s246 = sand.u32 %s141, 1
        %s247 = sand.u32 %s141, 1
        %s248 = smul.addr %s247, 8
        %s249 = scalar_lea.vmem [#allocation2], %s248
        %s250 = smul.u32 16, %s20
        %p251 = scmp.lt.s32.totalorder %s250, 47
        %s252 = scalar_select %p251, %s250, 47
        %s253 = smul.addr %s252, 4
        %s254 = scalar_lea.vmem %s0, %s253
        %s255 = smul.u32 16, %s20
        %s256 = smul.u32 2, %s19
        %p257 = scmp.lt.s32.totalorder %s256, 1
        %s258 = scalar_select %p257, %s256, 1
        %s259 = smul.addr %s258, 4
        %s260 = scalar_lea.vmem %s1, %s259
        %s261 = smul.u32 2, %s19
        %s262 = smul.u32 2, %s19
        %p263 = scmp.lt.s32.totalorder %s262, 1
        %s264 = scalar_select %p263, %s262, 1
        %s265 = smul.addr %s264, 8
        %s266 = scalar_lea.vmem %s2, %s265
        %s267 = smul.u32 2, %s19
        %s268 = smul.u32 2, %s19
        %p269 = scmp.lt.s32.totalorder %s268, 1
        %s270 = scalar_select %p269, %s268, 1
        %s271 = smul.addr %s270, 8
        %s272 = scalar_lea.vmem %s3, %s271
        %s273 = smul.u32 2, %s19
        %s274 = smul.u32 2, %s19
        %v276 = vld [vmem:[%s260] sm:$0xf]
        %v277 = vld [vmem:[%s260 + $0x4] sm:$0xf]
        %v278 = vld [vmem:[%s254] sm:$0xf]
        %v279 = vld [vmem:[%s254 + $0x4] sm:$0xf]
        %v280 = vld [vmem:[%s254 + $0x8] sm:$0xf]
        %v281 = vld [vmem:[%s254 + $0xc] sm:$0xf]
        %v282 = vld [vmem:[%s254 + $0x10] sm:$0xf]
        %v283 = vld [vmem:[%s254 + $0x14] sm:$0xf]
        %v284 = vld [vmem:[%s254 + $0x18] sm:$0xf]
        %v285 = vld [vmem:[%s254 + $0x1c] sm:$0xf]
        %v286 = vld [vmem:[%s254 + $0x20] sm:$0xf]
        %v287 = vld [vmem:[%s254 + $0x24] sm:$0xf]
        %v288 = vld [vmem:[%s254 + $0x28] sm:$0xf]
        %v289 = vld [vmem:[%s254 + $0x2c] sm:$0xf]
        %v290 = vld [vmem:[%s254 + $0x30] sm:$0xf]
        %v291 = vld [vmem:[%s254 + $0x34] sm:$0xf]
        %v292 = vld [vmem:[%s254 + $0x38] sm:$0xf]
        %v293 = vld [vmem:[%s254 + $0x3c] sm:$0xf]
        %v296 = vunpack.c.l.b16 %v276
        %v297 = vunpack.c.l.b16 %v277
        %v298 = vpack.c.b16 %v297, %v296
        %v316 = vunpack.c.l.b16 %v278
        %v317 = vunpack.c.l.b16 %v279
        %v318 = vunpack.c.l.b16 %v280
        %v319 = vunpack.c.l.b16 %v281
        %v320 = vunpack.c.l.b16 %v282
        %v321 = vunpack.c.l.b16 %v283
        %v322 = vunpack.c.l.b16 %v284
        %v323 = vunpack.c.l.b16 %v285
        %v324 = vunpack.c.l.b16 %v286
        %v325 = vunpack.c.l.b16 %v287
        %v326 = vunpack.c.l.b16 %v288
        %v327 = vunpack.c.l.b16 %v289
        %v328 = vunpack.c.l.b16 %v290
        %v329 = vunpack.c.l.b16 %v291
        %v330 = vunpack.c.l.b16 %v292
        %v331 = vunpack.c.l.b16 %v293
        %v332 = vpack.c.b16 %v317, %v316
        %v333 = vpack.c.b16 %v319, %v318
        %v334 = vpack.c.b16 %v321, %v320
        %v335 = vpack.c.b16 %v323, %v322
        %v336 = vpack.c.b16 %v325, %v324
        %v337 = vpack.c.b16 %v327, %v326
        %v338 = vpack.c.b16 %v329, %v328
        %v339 = vpack.c.b16 %v331, %v330
        %348 = vmatprep.subr.bf16.mxu0 0
        %349 = vmatpush1.bf16.xpose.msra.mxu0 %v339
        %350 = vmatprep.subr.bf16.mxu0 0
        %351 = vmatpush1.bf16.xpose.msra.mxu0 %v338
        %352 = vmatprep.subr.bf16.mxu0 0
        %353 = vmatpush1.bf16.xpose.msra.mxu0 %v337
        %354 = vmatprep.subr.bf16.mxu0 0
        %355 = vmatpush1.bf16.xpose.msra.mxu0 %v336
        %356 = vmatprep.subr.bf16.mxu0 0
        %357 = vmatpush1.bf16.xpose.msra.mxu0 %v335
        %358 = vmatprep.subr.bf16.mxu0 0
        %359 = vmatpush1.bf16.xpose.msra.mxu0 %v334
        %360 = vmatprep.subr.bf16.mxu0 0
        %361 = vmatpush1.bf16.xpose.msra.mxu0 %v333
        %362 = vmatprep.subr.bf16.mxu0 0
        %363 = vmatpush1.bf16.xpose.msra.mxu0 %v332
        %364 = vmatprep.subr.bf16.mxu0 0
        %365 = vmatpush2.bf16.xpose.msra.mxu0 0
        %366 = vmatprep.subr.bf16.mxu0 0
        %367 = vmatpush2.bf16.xpose.msra.mxu0 0
        %368 = vmatprep.subr.bf16.mxu0 0
        %369 = vmatpush2.bf16.xpose.msra.mxu0 0
        %370 = vmatprep.subr.bf16.mxu0 0
        %371 = vmatpush2.bf16.xpose.msra.mxu0 0
        %372 = vmatprep.subr.bf16.mxu0 0
        %373 = vmatpush2.bf16.xpose.msra.mxu0 0
        %374 = vmatprep.subr.bf16.mxu0 0
        %375 = vmatpush2.bf16.xpose.msra.mxu0 0
        %376 = vmatprep.subr.bf16.mxu0 0
        %377 = vmatpush2.bf16.xpose.msra.mxu0 0
        %378 = vmatprep.subr.bf16.mxu0 0
        %379 = vmatpush2.bf16.xpose.msra.mxu0 0
        %380 = vmatprep.mubr.bf16.mxu0 0
        %381 = vmatmul.mubr.bf16.gmra.mxu0 %v298
        %v382 = vpop.f32.mrf.mxu0
        %v383 = vadd.f32 0.0, %v382
        %v384 = vpop.f32.mrf.mxu0
        %v385 = vpop.f32.mrf.mxu0
        %v386 = vadd.f32 0.0, %v385
        %v387 = vpop.f32.mrf.mxu0
        %388 = vdwg.mxu0
        %v389 = vld [vmem:[%s266] sm:$0xff]
        %v390 = vld [vmem:[%s266 + $0x8] sm:$0xff]
        %v391 = vld [vmem:[%s272] sm:$0xff]
        %v392 = vld [vmem:[%s272 + $0x8] sm:$0xff]
        %v393 = vlog2.pop %v391
        %v394 = vmul.f32 %v393, 0.6931472
        %v395 = vlog2.pop %v392
        %v396 = vmul.f32 %v395, 0.6931472
        %v397 = vadd.f32 %v389, %v394
        %v398 = vadd.f32 %v390, %v396
        %400 = vset.pattern.permute.xlu0 0
        %401 = vperm.xlu0 %400, %v397
        %v402 = vpop.permute.xlu0 %401
        %405 = vset.pattern.permute.xlu0 0
        %406 = vperm.xlu0 %405, %v398
        %v407 = vpop.permute.xlu0 %406
        %v409 = vsub.f32 %v383, %v402
        %v410 = vsub.f32 %v386, %v407
        %v411 = vmul.f32 %v409, 1.442695
        %v412 = vpow.pop %v411
        %v413 = vmul.f32 %v410, 1.442695
        %v414 = vpow.pop %v413
        %v415 = vpack.c.bf16 %v414, %v412
        %v417 = vunpack.c.l.b16 %v415
        %v418 = vunpack.c.h.b16 %v415
        %v419 = vpack.c.b16 %v417, %v417
        %v420 = vpack.c.b16 %v418, %v418
        %423 = vst [vmem:[%s249] sm:$0xf] %v419
        %424 = vst [vmem:[%s249 + $0x4] sm:$0xf] %v420
        %s425 = sand.u32 %s141, 1
        %s426 = sand.u32 %s141, 1
        %s427 = smul.addr %s426, 8
        %s428 = scalar_lea.vmem [#allocation2], %s427
        // Predicated region
        $region37: #{_lambda_.13} parent=35 // pred_check
          %p429 = pneg %p151
        $region38: #{_lambda_.13} parent=35 // pred_check_branch
          %431 = sbr.rel (%p429) target = $region40
        $region39: #{_lambda_.13} parent=35 // pred_region
          %s432 = smul.u32 2, %s19
          %s433 = smul.addr %s432, 3
          %s434 = sadd.s32 %s20, %s433
          %s435 = smul.addr %s434, 4
          %s436 = scalar_lea.vmem %s4, %s435
          // Predicated region
          $region41: #{_lambda_.13} parent=39 // pred_check
            _
          $region42: #{_lambda_.13} parent=39 // pred_check_branch
            %438 = sbr.rel (0) target = $region44
          $region43: #{_lambda_.13} parent=39 // pred_region
            // Predicated region
            $region45: #{_lambda_.13} parent=43 // pred_check
              _
            $region46: #{_lambda_.13} parent=43 // pred_check_branch
              %440 = sbr.rel target = $region48
            $region47: #{_lambda_.13} parent=43 // pred_region
              // Predicated region
              $region60: #{_lambda_.13} parent=47 // pred_check
                _
              $region61: #{_lambda_.13} parent=47 // pred_check_branch
                %458 = sbr.rel (0) target = $region63
              $region62: #{_lambda_.13} parent=47 // pred_region
                loop: start=0, step=1, limit=1
                $region64: #{_lambda_.13} parent=62 // loop_pre_header
                  _
                $region65: #{_lambda_.13} parent=62 // loop_header
                  %s460 = sphi 0, %s464
                  %p461 = scmp.ge.s32.totalorder %s460, 1
                  %s465 = sphi %s428, %s428
                  %s466 = sphi %s436, %s436
                $region66: #{_lambda_.13} parent=62 // loop_header_branch
                  %463 = sbr.rel (%p461) target = $region70
                $region67: #{_lambda_.13} parent=62 // loop_body
                  _
                $region68: #{_lambda_.13} parent=62 // loop_footer
                  %s464 = sadd.s32 1, %s460
                $region69: #{_lambda_.13} parent=62 // loop_footer_branch
                  %459 = sbr.rel target = $region65
                $region70: #{_lambda_.13} parent=62 // loop_exit
                  _
                %s468 = ssub.s32 16, 1
                loop: start=0, step=1, limit=1
                $region71: #{_lambda_.13} parent=62 // loop_pre_header
                  _
                $region72: #{_lambda_.13} parent=62 // loop_header
                  %s470 = sphi 0, %s474
                  %p471 = scmp.ge.s32.totalorder %s470, 1
                  %s475 = sphi %s428, %s428
                  %s476 = sphi %s436, %s436
                $region73: #{_lambda_.13} parent=62 // loop_header_branch
                  %473 = sbr.rel (%p471) target = $region77
                $region74: #{_lambda_.13} parent=62 // loop_body
                  %v477 = vld [vmem:[%s475] sm:%s468]
                  %478 = vst [vmem:[%s476] sm:%s468] %v477
                  %v479 = vld [vmem:[%s475 + $0x4] sm:%s468]
                  %480 = vst [vmem:[%s476 + $0xc] sm:%s468] %v479
                $region75: #{_lambda_.13} parent=62 // loop_footer
                  %s474 = sadd.s32 1, %s470
                $region76: #{_lambda_.13} parent=62 // loop_footer_branch
                  %469 = sbr.rel target = $region72
                $region77: #{_lambda_.13} parent=62 // loop_exit
                  _
              $region63: #{_lambda_.13} parent=47 // pred_fallthru
                _
            $region48: #{_lambda_.13} parent=43 // pred_fallthru
              _
            // Predicated region
            $region49: #{_lambda_.13} parent=43 // pred_check
              _
            $region50: #{_lambda_.13} parent=43 // pred_check_branch
              %442 = sbr.rel (0) target = $region52
            $region51: #{_lambda_.13} parent=43 // pred_region
              %s444 = ssub.s32 16, 1
              loop: start=0, step=1, limit=1
              $region53: #{_lambda_.13} parent=51 // loop_pre_header
                _
              $region54: #{_lambda_.13} parent=51 // loop_header
                %s446 = sphi 0, %s450
                %p447 = scmp.ge.s32.totalorder %s446, 1
                %s451 = sphi %s428, %s428
                %s452 = sphi %s436, %s436
              $region55: #{_lambda_.13} parent=51 // loop_header_branch
                %449 = sbr.rel (%p447) target = $region59
              $region56: #{_lambda_.13} parent=51 // loop_body
                %v453 = vld [vmem:[%s451] sm:%s444]
                %454 = vst [vmem:[%s452] sm:%s444] %v453
                %v455 = vld [vmem:[%s451 + $0x4] sm:%s444]
                %456 = vst [vmem:[%s452 + $0xc] sm:%s444] %v455
              $region57: #{_lambda_.13} parent=51 // loop_footer
                %s450 = sadd.s32 1, %s446
              $region58: #{_lambda_.13} parent=51 // loop_footer_branch
                %445 = sbr.rel target = $region54
              $region59: #{_lambda_.13} parent=51 // loop_exit
                _
            $region52: #{_lambda_.13} parent=43 // pred_fallthru
              _
          $region44: #{_lambda_.13} parent=39 // pred_fallthru
            _
          %481 = vnop
        $region40: #{_lambda_.13} parent=35 // pred_fallthru
          _
      $region36: #{_lambda_.13} parent=5 // pred_fallthru
        _
      %p482 = scmp.le.s32.totalorder 2, %s10
      // Predicated region
      $region78: #{_lambda_.13} parent=5 // pred_check
        %p483 = pneg %p482
      $region79: #{_lambda_.13} parent=5 // pred_check_branch
        %485 = sbr.rel (%p483) target = $region81
      $region80: #{_lambda_.13} parent=5 // pred_region
        %s486 = ssub.s32 %s10, 2
        // Predicated region
        $region82: #{_lambda_.13} parent=80 // pred_check
          %p487 = pneg %p157
        $region83: #{_lambda_.13} parent=80 // pred_check_branch
          %489 = sbr.rel (%p487) target = $region85
        $region84: #{_lambda_.13} parent=80 // pred_region
          %s490 = sand.u32 %s142, 1
          %s491 = sand.u32 %s142, 1
          %s492 = smul.addr %s491, 8
          %s493 = scalar_lea.vmem [#allocation2], %s492
        $region85: #{_lambda_.13} parent=80 // pred_fallthru
          _
      $region81: #{_lambda_.13} parent=5 // pred_fallthru
        _
    $region6: #{_lambda_.13} parent=1 // loop_footer
      %s14 = sadd.s32 1, %s10
    $region7: #{_lambda_.13} parent=1 // loop_footer_branch
      %9 = sbr.rel target = $region3
    $region8: #{_lambda_.13} parent=1 // loop_exit
      _

// kernel: _lambda_.9
$region0: #{_lambda_.9}
  #allocation0 [shape = 'u32[]', space=smem, size = 0x4, offset = 0x4, fixed_abs, tag = 'smem constant byte address 0x4 - core index']
  #allocation1 [shape = 'u32[144,128]{1,0:T(1,128)}', space=vmem, size = 0x12000, scoped, tag = 'internal scratch']
  #allocation2 [shape = 'f32[8,256]{1,0:T(8,128)}', space=vmem, size = 0x2000, scoped, tag = 'scratch operand']
  %s0 = inlined_call_operand.vmem [shape: bf16[8,384], index: 0, kind: input, shape index: {}]
  %s1 = inlined_call_operand.vmem [shape: bf16[384,256], index: 1, kind: input, shape index: {}]
  %s2 = inlined_call_operand.vmem [shape: f32[1,256], index: 2, kind: input, shape index: {}]
  %s3 = inlined_call_operand.vmem [shape: bf16[256,128], index: 3, kind: input, shape index: {}]
  %s4 = inlined_call_operand.vmem [shape: f32[1,128], index: 4, kind: input, shape index: {}]
  %s5 = inlined_call_operand.vmem [shape: bf16[128,32], index: 5, kind: input, shape index: {}]
  %s6 = inlined_call_operand.vmem [shape: f32[1,32], index: 6, kind: input, shape index: {}]
  %s7 = inlined_call_operand.vmem [shape: f32[8,16], index: 7, kind: output, shape index: {0}]
  %s8 = inlined_call_operand.vmem [shape: f32[8,1], index: 8, kind: output, shape index: {1}]
  %9 = xla_tuple %s7, %s8
  %s10 = sld [smem:[#allocation0]]
  $region77: #{_lambda_.9} parent=0
    _
  %s12 = ssub.s32 1, %s10
  %s13 = scalar_select 0, %s12, %s10
  loop: start=0, step=1, limit=5
  $region2: #{_lambda_.9} parent=0 // loop_pre_header
    _
  $region3: #{_lambda_.9} parent=0 // loop_header
    %s15 = sphi 0, %s19
    %p16 = scmp.ge.s32.totalorder %s15, 5
    %s22 = sphi 0, %s34
    %s23 = sphi 0, %s30
    %s24 = sphi 0, %s22
    %s25 = sphi 0, %s23
    %s26 = sphi 0, %s24
    %s27 = sphi 0, %s25
    %s39 = sphi 0, %s41
    %s42 = sphi 0, %s39
    %s43 = sphi 0, %s42
    %s59 = sphi 0, %s43
    %s65 = sphi 0, %s67
    %s68 = sphi 0, %s65
    %s69 = sphi 0, %s68
    %s85 = sphi 0, %s69
    %s89 = sphi 0, %s89
    %s91 = sphi 0, %s89
    %s92 = sphi 0, %s91
    %s106 = sphi 0, %s92
    %s110 = sphi 0, %s110
    %s112 = sphi 0, %s110
    %s113 = sphi 0, %s112
    %s127 = sphi 0, %s113
    %s131 = sphi 0, %s131
    %s133 = sphi 0, %s131
    %s134 = sphi 0, %s133
    %s148 = sphi 0, %s134
    %s152 = sphi 0, %s152
    %s154 = sphi 0, %s152
    %s155 = sphi 0, %s154
    %s169 = sphi 0, %s155
    %s173 = sphi 0, %s173
    %s175 = sphi 0, %s173
    %s176 = sphi 0, %s175
    %s190 = sphi 0, %s176
    %s196 = sphi 0, %s198
    %s199 = sphi 0, %s196
    %s200 = sphi 0, %s199
    %s216 = sphi 0, %s200
    %s222 = sphi 0, %s224
    %s225 = sphi 0, %s222
    %s226 = sphi 0, %s225
    %s242 = sphi 0, %s226
  $region4: #{_lambda_.9} parent=0 // loop_header_branch
    %18 = sbr.rel (%p16) target = $region8
  $region5: #{_lambda_.9} parent=0 // loop_body
    %s20 = ssub.s32 %s15, 1
    %s21 = ssub.s32 %s15, 2
    %s28 = sadd.s32 1, %s23
    %p29 = scmp.ge.s32.totalorder %s28, 3
    %s30 = scalar_select %p29, 0, %s28
    %s31 = sadd.s32 1, %s22
    %s32 = scalar_select %p29, %s31, %s22
    %p33 = scmp.ge.s32.totalorder %s32, 1
    %s34 = scalar_select %p33, 0, %s32
    %s35 = ssub.s32 %s22, %s34
    %s36 = ssub.s32 %s23, %s30
    %s37 = sor.u32 %s35, %s36
    %p38 = scmp.eq.s32.totalorder %s37, 0
    %s40 = sadd.s32 %s39, 1
    %s41 = scalar_select %p38, %s39, %s40
    %p44 = pneg %p38
    %p45 = scmp.eq.s32.totalorder %s15, 2
    %p46 = por %p44, %p45
    %p47 = scmp.ne.s32.totalorder %s39, %s42
    %p48 = scmp.eq.s32.totalorder %s15, 0
    %p49 = por %p47, %p48
    %p50 = scmp.ne.s32.totalorder %s39, %s42
    %p51 = scmp.eq.s32.totalorder %s20, 2
    %p52 = por %p50, %p51
    %p53 = scmp.ne.s32.totalorder %s42, %s43
    %p54 = scmp.eq.s32.totalorder %s20, 0
    %p55 = por %p53, %p54
    %p56 = scmp.ne.s32.totalorder %s42, %s43
    %p57 = scmp.eq.s32.totalorder %s21, 2
    %p58 = por %p56, %p57
    %p60 = scmp.ne.s32.totalorder %s43, %s59
    %p61 = scmp.eq.s32.totalorder %s21, 0
    %p62 = por %p60, %p61
    %s63 = ssub.s32 %s23, %s30
    %p64 = scmp.eq.s32.totalorder %s63, 0
    %s66 = sadd.s32 %s65, 1
    %s67 = scalar_select %p64, %s65, %s66
    %p70 = pneg %p64
    %p71 = scmp.eq.s32.totalorder %s15, 2
    %p72 = por %p70, %p71
    %p73 = scmp.ne.s32.totalorder %s65, %s68
    %p74 = scmp.eq.s32.totalorder %s15, 0
    %p75 = por %p73, %p74
    %p76 = scmp.ne.s32.totalorder %s65, %s68
    %p77 = scmp.eq.s32.totalorder %s20, 2
    %p78 = por %p76, %p77
    %p79 = scmp.ne.s32.totalorder %s68, %s69
    %p80 = scmp.eq.s32.totalorder %s20, 0
    %p81 = por %p79, %p80
    %p82 = scmp.ne.s32.totalorder %s68, %s69
    %p83 = scmp.eq.s32.totalorder %s21, 2
    %p84 = por %p82, %p83
    %p86 = scmp.ne.s32.totalorder %s69, %s85
    %p87 = scmp.eq.s32.totalorder %s21, 0
    %p88 = por %p86, %p87
    %s90 = sadd.s32 %s89, 1
    %p93 = scmp.eq.s32.totalorder %s15, 2
    %p94 = scmp.ne.s32.totalorder %s89, %s91
    %p95 = scmp.eq.s32.totalorder %s15, 0
    %p96 = por %p94, %p95
    %p97 = scmp.ne.s32.totalorder %s89, %s91
    %p98 = scmp.eq.s32.totalorder %s20, 2
    %p99 = por %p97, %p98
    %p100 = scmp.ne.s32.totalorder %s91, %s92
    %p101 = scmp.eq.s32.totalorder %s20, 0
    %p102 = por %p100, %p101
    %p103 = scmp.ne.s32.totalorder %s91, %s92
    %p104 = scmp.eq.s32.totalorder %s21, 2
    %p105 = por %p103, %p104
    %p107 = scmp.ne.s32.totalorder %s92, %s106
    %p108 = scmp.eq.s32.totalorder %s21, 0
    %p109 = por %p107, %p108
    %s111 = sadd.s32 %s110, 1
    %p114 = scmp.eq.s32.totalorder %s15, 2
    %p115 = scmp.ne.s32.totalorder %s110, %s112
    %p116 = scmp.eq.s32.totalorder %s15, 0
    %p117 = por %p115, %p116
    %p118 = scmp.ne.s32.totalorder %s110, %s112
    %p119 = scmp.eq.s32.totalorder %s20, 2
    %p120 = por %p118, %p119
    %p121 = scmp.ne.s32.totalorder %s112, %s113
    %p122 = scmp.eq.s32.totalorder %s20, 0
    %p123 = por %p121, %p122
    %p124 = scmp.ne.s32.totalorder %s112, %s113
    %p125 = scmp.eq.s32.totalorder %s21, 2
    %p126 = por %p124, %p125
    %p128 = scmp.ne.s32.totalorder %s113, %s127
    %p129 = scmp.eq.s32.totalorder %s21, 0
    %p130 = por %p128, %p129
    %s132 = sadd.s32 %s131, 1
    %p135 = scmp.eq.s32.totalorder %s15, 2
    %p136 = scmp.ne.s32.totalorder %s131, %s133
    %p137 = scmp.eq.s32.totalorder %s15, 0
    %p138 = por %p136, %p137
    %p139 = scmp.ne.s32.totalorder %s131, %s133
    %p140 = scmp.eq.s32.totalorder %s20, 2
    %p141 = por %p139, %p140
    %p142 = scmp.ne.s32.totalorder %s133, %s134
    %p143 = scmp.eq.s32.totalorder %s20, 0
    %p144 = por %p142, %p143
    %p145 = scmp.ne.s32.totalorder %s133, %s134
    %p146 = scmp.eq.s32.totalorder %s21, 2
    %p147 = por %p145, %p146
    %p149 = scmp.ne.s32.totalorder %s134, %s148
    %p150 = scmp.eq.s32.totalorder %s21, 0
    %p151 = por %p149, %p150
    %s153 = sadd.s32 %s152, 1
    %p156 = scmp.eq.s32.totalorder %s15, 2
    %p157 = scmp.ne.s32.totalorder %s152, %s154
    %p158 = scmp.eq.s32.totalorder %s15, 0
    %p159 = por %p157, %p158
    %p160 = scmp.ne.s32.totalorder %s152, %s154
    %p161 = scmp.eq.s32.totalorder %s20, 2
    %p162 = por %p160, %p161
    %p163 = scmp.ne.s32.totalorder %s154, %s155
    %p164 = scmp.eq.s32.totalorder %s20, 0
    %p165 = por %p163, %p164
    %p166 = scmp.ne.s32.totalorder %s154, %s155
    %p167 = scmp.eq.s32.totalorder %s21, 2
    %p168 = por %p166, %p167
    %p170 = scmp.ne.s32.totalorder %s155, %s169
    %p171 = scmp.eq.s32.totalorder %s21, 0
    %p172 = por %p170, %p171
    %s174 = sadd.s32 %s173, 1
    %p177 = scmp.eq.s32.totalorder %s15, 2
    %p178 = scmp.ne.s32.totalorder %s173, %s175
    %p179 = scmp.eq.s32.totalorder %s15, 0
    %p180 = por %p178, %p179
    %p181 = scmp.ne.s32.totalorder %s173, %s175
    %p182 = scmp.eq.s32.totalorder %s20, 2
    %p183 = por %p181, %p182
    %p184 = scmp.ne.s32.totalorder %s175, %s176
    %p185 = scmp.eq.s32.totalorder %s20, 0
    %p186 = por %p184, %p185
    %p187 = scmp.ne.s32.totalorder %s175, %s176
    %p188 = scmp.eq.s32.totalorder %s21, 2
    %p189 = por %p187, %p188
    %p191 = scmp.ne.s32.totalorder %s176, %s190
    %p192 = scmp.eq.s32.totalorder %s21, 0
    %p193 = por %p191, %p192
    %s194 = ssub.s32 %s22, %s34
    %p195 = scmp.eq.s32.totalorder %s194, 0
    %s197 = sadd.s32 %s196, 1
    %s198 = scalar_select %p195, %s196, %s197
    %p201 = pneg %p195
    %p202 = scmp.eq.s32.totalorder %s15, 2
    %p203 = por %p201, %p202
    %p204 = scmp.ne.s32.totalorder %s196, %s199
    %p205 = scmp.eq.s32.totalorder %s15, 0
    %p206 = por %p204, %p205
    %p207 = scmp.ne.s32.totalorder %s196, %s199
    %p208 = scmp.eq.s32.totalorder %s20, 2
    %p209 = por %p207, %p208
    %p210 = scmp.ne.s32.totalorder %s199, %s200
    %p211 = scmp.eq.s32.totalorder %s20, 0
    %p212 = por %p210, %p211
    %p213 = scmp.ne.s32.totalorder %s199, %s200
    %p214 = scmp.eq.s32.totalorder %s21, 2
    %p215 = por %p213, %p214
    %p217 = scmp.ne.s32.totalorder %s200, %s216
    %p218 = scmp.eq.s32.totalorder %s21, 0
    %p219 = por %p217, %p218
    %s220 = ssub.s32 %s22, %s34
    %p221 = scmp.eq.s32.totalorder %s220, 0
    %s223 = sadd.s32 %s222, 1
    %s224 = scalar_select %p221, %s222, %s223
    %p227 = pneg %p221
    %p228 = scmp.eq.s32.totalorder %s15, 2
    %p229 = por %p227, %p228
    %p230 = scmp.ne.s32.totalorder %s222, %s225
    %p231 = scmp.eq.s32.totalorder %s15, 0
    %p232 = por %p230, %p231
    %p233 = scmp.ne.s32.totalorder %s222, %s225
    %p234 = scmp.eq.s32.totalorder %s20, 2
    %p235 = por %p233, %p234
    %p236 = scmp.ne.s32.totalorder %s225, %s226
    %p237 = scmp.eq.s32.totalorder %s20, 0
    %p238 = por %p236, %p237
    %p239 = scmp.ne.s32.totalorder %s225, %s226
    %p240 = scmp.eq.s32.totalorder %s21, 2
    %p241 = por %p239, %p240
    %p243 = scmp.ne.s32.totalorder %s226, %s242
    %p244 = scmp.eq.s32.totalorder %s21, 0
    %p245 = por %p243, %p244
    %p246 = scmp.le.s32.totalorder 1, %s15
    %p247 = scmp.lt.s32.totalorder %s15, 4
    %p248 = pnand %p246, %p247
    %p249 = pneg %p248
    // Predicated region
    $region9: #{_lambda_.9} parent=5 // pred_check
      _
    $region10: #{_lambda_.9} parent=5 // pred_check_branch
      %251 = sbr.rel (%p248) target = $region12
    $region11: #{_lambda_.9} parent=5 // pred_region
      %s252 = ssub.s32 %s15, 1
      // Predicated region
      $region13: #{_lambda_.9} parent=11 // pred_check
        %p253 = pneg %p102
      $region14: #{_lambda_.9} parent=11 // pred_check_branch
        %255 = sbr.rel (%p253) target = $region16
      $region15: #{_lambda_.9} parent=11 // pred_region
        _
      $region16: #{_lambda_.9} parent=11 // pred_fallthru
        _
      // Predicated region
      $region17: #{_lambda_.9} parent=11 // pred_check
        %p256 = pneg %p123
      $region18: #{_lambda_.9} parent=11 // pred_check_branch
        %258 = sbr.rel (%p256) target = $region20
      $region19: #{_lambda_.9} parent=11 // pred_region
        _
      $region20: #{_lambda_.9} parent=11 // pred_fallthru
        _
      // Predicated region
      $region21: #{_lambda_.9} parent=11 // pred_check
        %p259 = pneg %p144
      $region22: #{_lambda_.9} parent=11 // pred_check_branch
        %261 = sbr.rel (%p259) target = $region24
      $region23: #{_lambda_.9} parent=11 // pred_region
        _
      $region24: #{_lambda_.9} parent=11 // pred_fallthru
        _
      // Predicated region
      $region25: #{_lambda_.9} parent=11 // pred_check
        %p262 = pneg %p165
      $region26: #{_lambda_.9} parent=11 // pred_check_branch
        %264 = sbr.rel (%p262) target = $region28
      $region27: #{_lambda_.9} parent=11 // pred_region
        _
      $region28: #{_lambda_.9} parent=11 // pred_fallthru
        _
      // Predicated region
      $region29: #{_lambda_.9} parent=11 // pred_check
        %p265 = pneg %p186
      $region30: #{_lambda_.9} parent=11 // pred_check_branch
        %267 = sbr.rel (%p265) target = $region32
      $region31: #{_lambda_.9} parent=11 // pred_region
        _
      $region32: #{_lambda_.9} parent=11 // pred_fallthru
        _
    $region12: #{_lambda_.9} parent=5 // pred_fallthru
      _
    %p268 = scmp.lt.s32.totalorder %s15, 3
    // Predicated region
    $region33: #{_lambda_.9} parent=5 // pred_check
      %p269 = pneg %p268
    $region34: #{_lambda_.9} parent=5 // pred_check_branch
      %271 = sbr.rel (%p269) target = $region36
    $region35: #{_lambda_.9} parent=5 // pred_region
      // Predicated region
      $region37: #{_lambda_.9} parent=35 // pred_check
        %p272 = pneg %p49
      $region38: #{_lambda_.9} parent=35 // pred_check_branch
        %274 = sbr.rel (%p272) target = $region40
      $region39: #{_lambda_.9} parent=35 // pred_region
        %p275 = scmp.lt.s32.totalorder %s22, 0
        %s276 = scalar_select %p275, %s22, 0
        %p277 = scmp.lt.s32.totalorder %s23, 2
        %s278 = scalar_select %p277, %s23, 2
        %s279 = smul.addr %s276, 3
        %s280 = sadd.s32 %s278, %s279
        %s281 = smul.addr %s280, 4
        %s282 = scalar_lea.vmem %s0, %s281
      $region40: #{_lambda_.9} parent=35 // pred_fallthru
        _
      // Predicated region
      $region41: #{_lambda_.9} parent=35 // pred_check
        %p283 = pneg %p75
      $region42: #{_lambda_.9} parent=35 // pred_check_branch
        %285 = sbr.rel (%p283) target = $region44
      $region43: #{_lambda_.9} parent=35 // pred_region
        %s286 = smul.u32 16, %s23
        %p287 = scmp.lt.s32.totalorder %s286, 47
        %s288 = scalar_select %p287, %s286, 47
        %s289 = smul.addr %s288, 2
        %s290 = smul.addr %s289, 4
        %s291 = scalar_lea.vmem %s1, %s290
        %s292 = smul.u32 16, %s23
      $region44: #{_lambda_.9} parent=35 // pred_fallthru
        _
    $region36: #{_lambda_.9} parent=5 // pred_fallthru
      _
    %p293 = scmp.le.s32.totalorder 1, %s15
    %p294 = scmp.lt.s32.totalorder %s15, 4
    %p295 = pnand %p293, %p294
    %p296 = pneg %p295
    // Predicated region
    $region45: #{_lambda_.9} parent=5 // pred_check
      _
    $region46: #{_lambda_.9} parent=5 // pred_check_branch
      %298 = sbr.rel (%p295) target = $region48
    $region47: #{_lambda_.9} parent=5 // pred_region
      %s299 = ssub.s32 %s15, 1
      %p300 = scmp.lt.s32.totalorder %s24, 0
      %s301 = scalar_select %p300, %s24, 0
      %p302 = scmp.lt.s32.totalorder %s25, 2
      %s303 = scalar_select %p302, %s25, 2
      %s304 = smul.addr %s301, 3
      %s305 = sadd.s32 %s303, %s304
      %s306 = smul.addr %s305, 4
      %s307 = scalar_lea.vmem %s0, %s306
      %p308 = pneg %p55
      %p309 = pneg %p52
      %s310 = smul.u32 16, %s25
      %p311 = scmp.lt.s32.totalorder %s310, 47
      %s312 = scalar_select %p311, %s310, 47
      %s313 = smul.addr %s312, 2
      %s314 = smul.addr %s313, 4
      %s315 = scalar_lea.vmem %s1, %s314
      %p316 = pneg %p81
      %p317 = pneg %p78
      %p318 = pneg %p102
      %p319 = pneg %p99
      %p320 = pneg %p123
      %p321 = pneg %p120
      %p322 = pneg %p144
      %p323 = pneg %p141
      %p324 = pneg %p165
      %p325 = pneg %p162
      %p326 = pneg %p186
      %p327 = pneg %p183
      %p328 = pneg %p212
      %p329 = pneg %p209
      %p330 = scmp.lt.s32.totalorder %s24, 0
      %s331 = scalar_select %p330, %s24, 0
      %s332 = smul.addr %s331, 8
      %s333 = scalar_lea.vmem %s7, %s332
      %p334 = pneg %p238
      %p335 = pneg %p235
      %p336 = scmp.lt.s32.totalorder %s24, 0
      %s337 = scalar_select %p336, %s24, 0
      %s338 = smul.addr %s337, 8
      %s339 = scalar_lea.vmem %s8, %s338
      %p340 = scmp.lt.s32.totalorder %s24, 0
      %s341 = scalar_select %p340, %s24, 0
      %p342 = scmp.lt.s32.totalorder %s25, 2
      %s343 = scalar_select %p342, %s25, 2
      %s344 = smul.addr %s341, 3
      %s345 = sadd.s32 %s343, %s344
      %s346 = smul.addr %s345, 4
      %s347 = scalar_lea.vmem %s0, %s346
      %s348 = smul.u32 16, %s25
      %p349 = scmp.lt.s32.totalorder %s348, 47
      %s350 = scalar_select %p349, %s348, 47
      %s351 = smul.addr %s350, 2
      %s352 = smul.addr %s351, 4
      %s353 = scalar_lea.vmem %s1, %s352
      %s354 = smul.u32 16, %s25
      %p355 = scmp.lt.s32.totalorder %s24, 0
      %s356 = scalar_select %p355, %s24, 0
      %s357 = smul.addr %s356, 8
      %s358 = scalar_lea.vmem %s7, %s357
      %p359 = scmp.lt.s32.totalorder %s24, 0
      %s360 = scalar_select %p359, %s24, 0
      %s361 = smul.addr %s360, 8
      %s362 = scalar_lea.vmem %s8, %s361
      %p364 = scmp.eq.s32.totalorder %s25, 0
      // Predicated region
      $region49: #{_lambda_.9} parent=47 // pred_check
        %p365 = pneg %p364
      $region50: #{_lambda_.9} parent=47 // pred_check_branch
        %367 = sbr.rel (%p365) target = $region52
      $region51: #{_lambda_.9} parent=47 // pred_region
        %368 = vst [vmem:[#allocation2] sm:$0xff] 0.0
        %369 = vst [vmem:[#allocation2 + $0x8] sm:$0xff] 0.0
      $region52: #{_lambda_.9} parent=47 // pred_fallthru
        _
      %v370 = vld [vmem:[#allocation2] sm:$0xff]
      %v371 = vld [vmem:[#allocation2 + $0x8] sm:$0xff]
      %v372 = vld [vmem:[%s347] sm:$0xf]
      %v373 = vld [vmem:[%s353] sm:$0xff]
      %v374 = vld [vmem:[%s353 + $0x8] sm:$0xff]
      %v375 = vld [vmem:[%s353 + $0x10] sm:$0xff]
      %v376 = vld [vmem:[%s353 + $0x18] sm:$0xff]
      %v377 = vld [vmem:[%s353 + $0x20] sm:$0xff]
      %v378 = vld [vmem:[%s353 + $0x28] sm:$0xff]
      %v379 = vld [vmem:[%s353 + $0x30] sm:$0xff]
      %v380 = vld [vmem:[%s353 + $0x38] sm:$0xff]
      %v381 = vld [vmem:[%s353 + $0x40] sm:$0xff]
      %v382 = vld [vmem:[%s353 + $0x48] sm:$0xff]
      %v383 = vld [vmem:[%s353 + $0x50] sm:$0xff]
      %v384 = vld [vmem:[%s353 + $0x58] sm:$0xff]
      %v385 = vld [vmem:[%s353 + $0x60] sm:$0xff]
      %v386 = vld [vmem:[%s353 + $0x68] sm:$0xff]
      %v387 = vld [vmem:[%s353 + $0x70] sm:$0xff]
      %v388 = vld [vmem:[%s353 + $0x78] sm:$0xff]
      %v405 = vunpack.c.l.b16 %v373
      %v406 = vunpack.c.h.b16 %v373
      %v407 = vunpack.c.l.b16 %v374
      %v408 = vunpack.c.h.b16 %v374
      %v409 = vunpack.c.l.b16 %v375
      %v410 = vunpack.c.h.b16 %v375
      %v411 = vunpack.c.l.b16 %v376
      %v412 = vunpack.c.h.b16 %v376
      %v413 = vunpack.c.l.b16 %v377
      %v414 = vunpack.c.h.b16 %v377
      %v415 = vunpack.c.l.b16 %v378
      %v416 = vunpack.c.h.b16 %v378
      %v417 = vunpack.c.l.b16 %v379
      %v418 = vunpack.c.h.b16 %v379
      %v419 = vunpack.c.l.b16 %v380
      %v420 = vunpack.c.h.b16 %v380
      %v421 = vunpack.c.l.b16 %v381
      %v422 = vunpack.c.h.b16 %v381
      %v423 = vunpack.c.l.b16 %v382
      %v424 = vunpack.c.h.b16 %v382
      %v425 = vunpack.c.l.b16 %v383
      %v426 = vunpack.c.h.b16 %v383
      %v427 = vunpack.c.l.b16 %v384
      %v428 = vunpack.c.h.b16 %v384
      %v429 = vunpack.c.l.b16 %v385
      %v430 = vunpack.c.h.b16 %v385
      %v431 = vunpack.c.l.b16 %v386
      %v432 = vunpack.c.h.b16 %v386
      %v433 = vunpack.c.l.b16 %v387
      %v434 = vunpack.c.h.b16 %v387
      %v435 = vunpack.c.l.b16 %v388
      %v436 = vunpack.c.h.b16 %v388
      %v437 = vpack.c.b16 %v407, %v405
      %v438 = vpack.c.b16 %v408, %v406
      %v439 = vpack.c.b16 %v411, %v409
      %v440 = vpack.c.b16 %v412, %v410
      %v441 = vpack.c.b16 %v415, %v413
      %v442 = vpack.c.b16 %v416, %v414
      %v443 = vpack.c.b16 %v419, %v417
      %v444 = vpack.c.b16 %v420, %v418
      %v445 = vpack.c.b16 %v423, %v421
      %v446 = vpack.c.b16 %v424, %v422
      %v447 = vpack.c.b16 %v427, %v425
      %v448 = vpack.c.b16 %v428, %v426
      %v449 = vpack.c.b16 %v431, %v429
      %v450 = vpack.c.b16 %v432, %v430
      %v451 = vpack.c.b16 %v435, %v433
      %v452 = vpack.c.b16 %v436, %v434
      %469 = vmatprep.subr.bf16.mxu0 %v452
      %470 = vmatpush1.bf16.msra.mxu0 %v451
      %471 = vmatprep.subr.bf16.mxu0 %v450
      %472 = vmatpush1.bf16.msra.mxu0 %v449
      %473 = vmatprep.subr.bf16.mxu0 %v448
      %474 = vmatpush1.bf16.msra.mxu0 %v447
      %475 = vmatprep.subr.bf16.mxu0 %v446
      %476 = vmatpush1.bf16.msra.mxu0 %v445
      %477 = vmatprep.subr.bf16.mxu0 %v444
      %478 = vmatpush1.bf16.msra.mxu0 %v443
      %479 = vmatprep.subr.bf16.mxu0 %v442
      %480 = vmatpush1.bf16.msra.mxu0 %v441
      %481 = vmatprep.subr.bf16.mxu0 %v440
      %482 = vmatpush1.bf16.msra.mxu0 %v439
      %483 = vmatprep.subr.bf16.mxu0 %v438
      %484 = vmatpush1.bf16.msra.mxu0 %v437
      %485 = vmatprep.subr.bf16.mxu0 0
      %486 = vmatpush2.bf16.msra.mxu0 0
      %487 = vmatprep.subr.bf16.mxu0 0
      %488 = vmatpush2.bf16.msra.mxu0 0
      %489 = vmatprep.subr.bf16.mxu0 0
      %490 = vmatpush2.bf16.msra.mxu0 0
      %491 = vmatprep.subr.bf16.mxu0 0
      %492 = vmatpush2.bf16.msra.mxu0 0
      %493 = vmatprep.subr.bf16.mxu0 0
      %494 = vmatpush2.bf16.msra.mxu0 0
      %495 = vmatprep.subr.bf16.mxu0 0
      %496 = vmatpush2.bf16.msra.mxu0 0
      %497 = vmatprep.subr.bf16.mxu0 0
      %498 = vmatpush2.bf16.msra.mxu0 0
      %499 = vmatprep.subr.bf16.mxu0 0
      %500 = vmatpush2.bf16.msra.mxu0 0
      %501 = vmatprep.mubr.bf16.mxu0 0
      %502 = vmatmul.mubr.bf16.gmra.mxu0 %v372
      %v503 = vpop.f32.mrf.mxu0
      %v504 = vadd.f32 0.0, %v503
      %v505 = vpop.f32.mrf.mxu0
      %v506 = vadd.f32 0.0, %v505
      %v507 = vpop.f32.mrf.mxu0
      %v508 = vpop.f32.mrf.mxu0
      %509 = vdwg.mxu0
      %v510 = vadd.f32 %v370, %v504
      %v511 = vadd.f32 %v371, %v506
      %512 = vst [vmem:[#allocation2] sm:$0xff] %v510
      %513 = vst [vmem:[#allocation2 + $0x8] sm:$0xff] %v511
      %p514 = scmp.eq.s32.totalorder %s25, 2
      // Predicated region
      $region53: #{_lambda_.9} parent=47 // pred_check
        %p515 = pneg %p514
      $region54: #{_lambda_.9} parent=47 // pred_check_branch
        %517 = sbr.rel (%p515) target = $region56
      $region55: #{_lambda_.9} parent=47 // pred_region
        %v518 = vld [vmem:[#allocation2] sm:$0xff]
        %v519 = vld [vmem:[#allocation2 + $0x8] sm:$0xff]
        %v520 = vld [vmem:[%s2] sm:$0x3]
        %v522 = vlaneseq
        %v523 = vshrl.u32 %v522, 7
        %v524 = vsub.s32 0, %v523
        %v525 = vrot.slane %v520, %v524
        %v526 = vlaneseq
        %v527 = vshrl.u32 %v526, 7
        %v528 = vsub.s32 1, %v527
        %v529 = vrot.slane %v520, %v528
        %v532 = vadd.f32 %v518, %v525
        %v533 = vadd.f32 %v519, %v529
        %v534 = vmax.f32 %v532, 0.0
        %v535 = vmax.f32 %v533, 0.0
        %v536 = vpack.c.bf16 %v534, %v534
        %v537 = vpack.c.bf16 %v535, %v535
        %v538 = vld [vmem:[%s3] sm:$0xf]
        %v539 = vld [vmem:[%s3 + $0x4] sm:$0xf]
        %v540 = vld [vmem:[%s3 + $0x8] sm:$0xf]
        %v541 = vld [vmem:[%s3 + $0xc] sm:$0xf]
        %v542 = vld [vmem:[%s3 + $0x10] sm:$0xf]
        %v543 = vld [vmem:[%s3 + $0x14] sm:$0xf]
        %v544 = vld [vmem:[%s3 + $0x18] sm:$0xf]
        %v545 = vld [vmem:[%s3 + $0x1c] sm:$0xf]
        %v546 = vld [vmem:[%s3 + $0x20] sm:$0xf]
        %v547 = vld [vmem:[%s3 + $0x24] sm:$0xf]
        %v548 = vld [vmem:[%s3 + $0x28] sm:$0xf]
        %v549 = vld [vmem:[%s3 + $0x2c] sm:$0xf]
        %v550 = vld [vmem:[%s3 + $0x30] sm:$0xf]
        %v551 = vld [vmem:[%s3 + $0x34] sm:$0xf]
        %v552 = vld [vmem:[%s3 + $0x38] sm:$0xf]
        %v553 = vld [vmem:[%s3 + $0x3c] sm:$0xf]
        %v554 = vld [vmem:[%s3 + $0x40] sm:$0xf]
        %v555 = vld [vmem:[%s3 + $0x44] sm:$0xf]
        %v556 = vld [vmem:[%s3 + $0x48] sm:$0xf]
        %v557 = vld [vmem:[%s3 + $0x4c] sm:$0xf]
        %v558 = vld [vmem:[%s3 + $0x50] sm:$0xf]
        %v559 = vld [vmem:[%s3 + $0x54] sm:$0xf]
        %v560 = vld [vmem:[%s3 + $0x58] sm:$0xf]
        %v561 = vld [vmem:[%s3 + $0x5c] sm:$0xf]
        %v562 = vld [vmem:[%s3 + $0x60] sm:$0xf]
        %v563 = vld [vmem:[%s3 + $0x64] sm:$0xf]
        %v564 = vld [vmem:[%s3 + $0x68] sm:$0xf]
        %v565 = vld [vmem:[%s3 + $0x6c] sm:$0xf]
        %v566 = vld [vmem:[%s3 + $0x70] sm:$0xf]
        %v567 = vld [vmem:[%s3 + $0x74] sm:$0xf]
        %v568 = vld [vmem:[%s3 + $0x78] sm:$0xf]
        %v569 = vld [vmem:[%s3 + $0x7c] sm:$0xf]
        %v570 = vld [vmem:[%s4] sm:$0x1]
        %v572 = vlaneseq
        %v573 = vshrl.u32 %v572, 7
        %v574 = vsub.s32 0, %v573
        %v575 = vrot.slane %v570, %v574
        %v609 = vunpack.c.l.b16 %v538
        %v610 = vunpack.c.l.b16 %v539
        %v611 = vunpack.c.l.b16 %v540
        %v612 = vunpack.c.l.b16 %v541
        %v613 = vunpack.c.l.b16 %v542
        %v614 = vunpack.c.l.b16 %v543
        %v615 = vunpack.c.l.b16 %v544
        %v616 = vunpack.c.l.b16 %v545
        %v617 = vunpack.c.l.b16 %v546
        %v618 = vunpack.c.l.b16 %v547
        %v619 = vunpack.c.l.b16 %v548
        %v620 = vunpack.c.l.b16 %v549
        %v621 = vunpack.c.l.b16 %v550
        %v622 = vunpack.c.l.b16 %v551
        %v623 = vunpack.c.l.b16 %v552
        %v624 = vunpack.c.l.b16 %v553
        %v625 = vunpack.c.l.b16 %v554
        %v626 = vunpack.c.l.b16 %v555
        %v627 = vunpack.c.l.b16 %v556
        %v628 = vunpack.c.l.b16 %v557
        %v629 = vunpack.c.l.b16 %v558
        %v630 = vunpack.c.l.b16 %v559
        %v631 = vunpack.c.l.b16 %v560
        %v632 = vunpack.c.l.b16 %v561
        %v633 = vunpack.c.l.b16 %v562
        %v634 = vunpack.c.l.b16 %v563
        %v635 = vunpack.c.l.b16 %v564
        %v636 = vunpack.c.l.b16 %v565
        %v637 = vunpack.c.l.b16 %v566
        %v638 = vunpack.c.l.b16 %v567
        %v639 = vunpack.c.l.b16 %v568
        %v640 = vunpack.c.l.b16 %v569
        %v641 = vpack.c.b16 %v610, %v609
        %v642 = vpack.c.b16 %v612, %v611
        %v643 = vpack.c.b16 %v614, %v613
        %v644 = vpack.c.b16 %v616, %v615
        %v645 = vpack.c.b16 %v618, %v617
        %v646 = vpack.c.b16 %v620, %v619
        %v647 = vpack.c.b16 %v622, %v621
        %v648 = vpack.c.b16 %v624, %v623
        %v649 = vpack.c.b16 %v626, %v625
        %v650 = vpack.c.b16 %v628, %v627
        %v651 = vpack.c.b16 %v630, %v629
        %v652 = vpack.c.b16 %v632, %v631
        %v653 = vpack.c.b16 %v634, %v633
        %v654 = vpack.c.b16 %v636, %v635
        %v655 = vpack.c.b16 %v638, %v637
        %v656 = vpack.c.b16 %v640, %v639
        %673 = vmatprep.subr.bf16.mxu0 0
        %674 = vmatpush1.bf16.msra.mxu0 %v648
        %675 = vmatprep.subr.bf16.mxu0 0
        %676 = vmatpush1.bf16.msra.mxu0 %v647
        %677 = vmatprep.subr.bf16.mxu0 0
        %678 = vmatpush1.bf16.msra.mxu0 %v646
        %679 = vmatprep.subr.bf16.mxu0 0
        %680 = vmatpush1.bf16.msra.mxu0 %v645
        %681 = vmatprep.subr.bf16.mxu0 0
        %682 = vmatpush1.bf16.msra.mxu0 %v644
        %683 = vmatprep.subr.bf16.mxu0 0
        %684 = vmatpush1.bf16.msra.mxu0 %v643
        %685 = vmatprep.subr.bf16.mxu0 0
        %686 = vmatpush1.bf16.msra.mxu0 %v642
        %687 = vmatprep.subr.bf16.mxu0 0
        %688 = vmatpush1.bf16.msra.mxu0 %v641
        %689 = vmatprep.subr.bf16.mxu0 0
        %690 = vmatpush2.bf16.msra.mxu0 %v656
        %691 = vmatprep.subr.bf16.mxu0 0
        %692 = vmatpush2.bf16.msra.mxu0 %v655
        %693 = vmatprep.subr.bf16.mxu0 0
        %694 = vmatpush2.bf16.msra.mxu0 %v654
        %695 = vmatprep.subr.bf16.mxu0 0
        %696 = vmatpush2.bf16.msra.mxu0 %v653
        %697 = vmatprep.subr.bf16.mxu0 0
        %698 = vmatpush2.bf16.msra.mxu0 %v652
        %699 = vmatprep.subr.bf16.mxu0 0
        %700 = vmatpush2.bf16.msra.mxu0 %v651
        %701 = vmatprep.subr.bf16.mxu0 0
        %702 = vmatpush2.bf16.msra.mxu0 %v650
        %703 = vmatprep.subr.bf16.mxu0 0
        %704 = vmatpush2.bf16.msra.mxu0 %v649
        %705 = vmatprep.mubr.bf16.mxu0 %v537
        %706 = vmatmul.mubr.bf16.gmra.mxu0 %v536
        %v707 = vpop.f32.mrf.mxu0
        %v708 = vadd.f32 %v575, %v707
        %v709 = vpop.f32.mrf.mxu0
        %v710 = vpop.f32.mrf.mxu0
        %v711 = vpop.f32.mrf.mxu0
        %712 = vdwg.mxu0
        %v713 = vmax.f32 %v708, 0.0
        %v714 = vpack.c.bf16 %v713, %v713
        %v715 = vld [vmem:[%s5] sm:$0xf]
        %v716 = vld [vmem:[%s5 + $0x4] sm:$0xf]
        %v717 = vld [vmem:[%s5 + $0x8] sm:$0xf]
        %v718 = vld [vmem:[%s5 + $0xc] sm:$0xf]
        %v719 = vld [vmem:[%s5 + $0x10] sm:$0xf]
        %v720 = vld [vmem:[%s5 + $0x14] sm:$0xf]
        %v721 = vld [vmem:[%s5 + $0x18] sm:$0xf]
        %v722 = vld [vmem:[%s5 + $0x1c] sm:$0xf]
        %v723 = vld [vmem:[%s5 + $0x20] sm:$0xf]
        %v724 = vld [vmem:[%s5 + $0x24] sm:$0xf]
        %v725 = vld [vmem:[%s5 + $0x28] sm:$0xf]
        %v726 = vld [vmem:[%s5 + $0x2c] sm:$0xf]
        %v727 = vld [vmem:[%s5 + $0x30] sm:$0xf]
        %v728 = vld [vmem:[%s5 + $0x34] sm:$0xf]
        %v729 = vld [vmem:[%s5 + $0x38] sm:$0xf]
        %v730 = vld [vmem:[%s5 + $0x3c] sm:$0xf]
        %v731 = vld [vmem:[%s6] sm:$0x1]
        %v733 = vlaneseq
        %v734 = vshrl.u32 %v733, 7
        %v735 = vsub.s32 0, %v734
        %v736 = vrot.slane %v731, %v735
        %v754 = vunpack.c.l.b16 %v715
        %v755 = vunpack.c.l.b16 %v716
        %v756 = vunpack.c.l.b16 %v717
        %v757 = vunpack.c.l.b16 %v718
        %v758 = vunpack.c.l.b16 %v719
        %v759 = vunpack.c.l.b16 %v720
        %v760 = vunpack.c.l.b16 %v721
        %v761 = vunpack.c.l.b16 %v722
        %v762 = vunpack.c.l.b16 %v723
        %v763 = vunpack.c.l.b16 %v724
        %v764 = vunpack.c.l.b16 %v725
        %v765 = vunpack.c.l.b16 %v726
        %v766 = vunpack.c.l.b16 %v727
        %v767 = vunpack.c.l.b16 %v728
        %v768 = vunpack.c.l.b16 %v729
        %v769 = vunpack.c.l.b16 %v730
        %v770 = vpack.c.b16 %v755, %v754
        %v771 = vpack.c.b16 %v757, %v756
        %v772 = vpack.c.b16 %v759, %v758
        %v773 = vpack.c.b16 %v761, %v760
        %v774 = vpack.c.b16 %v763, %v762
        %v775 = vpack.c.b16 %v765, %v764
        %v776 = vpack.c.b16 %v767, %v766
        %v777 = vpack.c.b16 %v769, %v768
        %786 = vmatprep.subr.bf16.mxu0 0
        %787 = vmatpush1.bf16.msra.mxu0 %v777
        %788 = vmatprep.subr.bf16.mxu0 0
        %789 = vmatpush1.bf16.msra.mxu0 %v776
        %790 = vmatprep.subr.bf16.mxu0 0
        %791 = vmatpush1.bf16.msra.mxu0 %v775
        %792 = vmatprep.subr.bf16.mxu0 0
        %793 = vmatpush1.bf16.msra.mxu0 %v774
        %794 = vmatprep.subr.bf16.mxu0 0
        %795 = vmatpush1.bf16.msra.mxu0 %v773
        %796 = vmatprep.subr.bf16.mxu0 0
        %797 = vmatpush1.bf16.msra.mxu0 %v772
        %798 = vmatprep.subr.bf16.mxu0 0
        %799 = vmatpush1.bf16.msra.mxu0 %v771
        %800 = vmatprep.subr.bf16.mxu0 0
        %801 = vmatpush1.bf16.msra.mxu0 %v770
        %802 = vmatprep.subr.bf16.mxu0 0
        %803 = vmatpush2.bf16.msra.mxu0 0
        %804 = vmatprep.subr.bf16.mxu0 0
        %805 = vmatpush2.bf16.msra.mxu0 0
        %806 = vmatprep.subr.bf16.mxu0 0
        %807 = vmatpush2.bf16.msra.mxu0 0
        %808 = vmatprep.subr.bf16.mxu0 0
        %809 = vmatpush2.bf16.msra.mxu0 0
        %810 = vmatprep.subr.bf16.mxu0 0
        %811 = vmatpush2.bf16.msra.mxu0 0
        %812 = vmatprep.subr.bf16.mxu0 0
        %813 = vmatpush2.bf16.msra.mxu0 0
        %814 = vmatprep.subr.bf16.mxu0 0
        %815 = vmatpush2.bf16.msra.mxu0 0
        %816 = vmatprep.subr.bf16.mxu0 0
        %817 = vmatpush2.bf16.msra.mxu0 0
        %818 = vmatprep.mubr.bf16.mxu0 0
        %819 = vmatmul.mubr.bf16.gmra.mxu0 %v714
        %v820 = vpop.f32.mrf.mxu0
        %v821 = vadd.f32 %v736, %v820
        %v822 = vpop.f32.mrf.mxu0
        %v823 = vpop.f32.mrf.mxu0
        %v824 = vpop.f32.mrf.mxu0
        %825 = vdwg.mxu0
        %v826 = vmul.f32 %v821, 2.0
        %v827 = vadd.f32 %v826, 1.0
        %v828 = vmul.f32 %v821, %v821
        %830 = vrot.lane.b32.xlu0 %v828, 16
        %v831 = vpop.permute.xlu0 %830
        %v833 = vsub.f32 %v827, %v831
        %v834 = vmul.f32 %v826, 1.442695
        %v835 = vpow.pop %v834
        %v836 = vsub.f32 %v833, %v835
        %838 = vrot.lane.b32.xlu0 %v836, 112
        %v839 = vpop.permute.xlu0 %838
        %vm841 = vcmask 130048
        %v842 = vsel %vm841, %v839, 0.0
        %843 = vadd.xlane.f32.xlu0 %v842
        %v844 = vpop.xlane.xlu0 %843
        %v845 = vmul.f32 %v844, -0.5
        %vm846 = vcmask 7168
        %847 = vst.msk [vmem:[%s362] sm:$0xff] %vm846, %v845
        %v848 = vsel %vm841, %v821, -inf
        %849 = vmax.xlane.f32.xlu0 %v848
        %v850 = vpop.xlane.xlu0 %849
        %v851 = vsub.f32 %v821, %v850
        %v852 = vmul.f32 %v851, 1.442695
        %v853 = vpow.pop %v852
        %v854 = vsel %vm841, %v853, 0.0
        %855 = vadd.xlane.f32.xlu0 %v854
        %v856 = vpop.xlane.xlu0 %855
        %v857 = vrcp.pop %v856
        %v858 = vmul.f32 %v853, %v857
        %859 = vst.msk [vmem:[%s358] sm:$0xff] %vm841, %v858
      $region56: #{_lambda_.9} parent=47 // pred_fallthru
        _
      %p860 = scmp.lt.s32.totalorder %s24, 0
      %s861 = scalar_select %p860, %s24, 0
      %s862 = smul.addr %s861, 8
      %s863 = scalar_lea.vmem %s7, %s862
      %p864 = scmp.lt.s32.totalorder %s24, 0
      %s865 = scalar_select %p864, %s24, 0
      %s866 = smul.addr %s865, 8
      %s867 = scalar_lea.vmem %s8, %s866
      // Predicated region
      $region57: #{_lambda_.9} parent=47 // pred_check
        %p868 = pneg %p209
      $region58: #{_lambda_.9} parent=47 // pred_check_branch
        %870 = sbr.rel (%p868) target = $region60
      $region59: #{_lambda_.9} parent=47 // pred_region
        _
      $region60: #{_lambda_.9} parent=47 // pred_fallthru
        _
      // Predicated region
      $region61: #{_lambda_.9} parent=47 // pred_check
        %p871 = pneg %p235
      $region62: #{_lambda_.9} parent=47 // pred_check_branch
        %873 = sbr.rel (%p871) target = $region64
      $region63: #{_lambda_.9} parent=47 // pred_region
        _
      $region64: #{_lambda_.9} parent=47 // pred_fallthru
        _
      // Predicated region
      $region65: #{_lambda_.9} parent=47 // pred_check
        %p874 = pneg %p209
      $region66: #{_lambda_.9} parent=47 // pred_check_branch
        %876 = sbr.rel (%p874) target = $region68
      $region67: #{_lambda_.9} parent=47 // pred_region
        %p877 = scmp.lt.s32.totalorder %s24, 0
        %s878 = scalar_select %p877, %s24, 0
        %s879 = smul.addr %s878, 8
        %s880 = scalar_lea.vmem %s7, %s879
      $region68: #{_lambda_.9} parent=47 // pred_fallthru
        _
      // Predicated region
      $region69: #{_lambda_.9} parent=47 // pred_check
        %p881 = pneg %p235
      $region70: #{_lambda_.9} parent=47 // pred_check_branch
        %883 = sbr.rel (%p881) target = $region72
      $region71: #{_lambda_.9} parent=47 // pred_region
        %p884 = scmp.lt.s32.totalorder %s24, 0
        %s885 = scalar_select %p884, %s24, 0
        %s886 = smul.addr %s885, 8
        %s887 = scalar_lea.vmem %s8, %s886
      $region72: #{_lambda_.9} parent=47 // pred_fallthru
        _
    $region48: #{_lambda_.9} parent=5 // pred_fallthru
      _
    %p888 = scmp.le.s32.totalorder 2, %s15
    // Predicated region
    $region73: #{_lambda_.9} parent=5 // pred_check
      %p889 = pneg %p888
    $region74: #{_lambda_.9} parent=5 // pred_check_branch
      %891 = sbr.rel (%p889) target = $region76
    $region75: #{_lambda_.9} parent=5 // pred_region
      %s892 = ssub.s32 %s15, 2
    $region76: #{_lambda_.9} parent=5 // pred_fallthru
      _
  $region6: #{_lambda_.9} parent=0 // loop_footer
    %s19 = sadd.s32 1, %s15
  $region7: #{_lambda_.9} parent=0 // loop_footer_branch
    %14 = sbr.rel target = $region3
  $region8: #{_lambda_.9} parent=0 // loop_exit
    _

// kernel: _lambda_.15
$region0: #{_lambda_.15}
  #allocation0 [shape = 'u32[]', space=smem, size = 0x4, offset = 0x4, fixed_abs, tag = 'smem constant byte address 0x4 - core index']
  #allocation1 [shape = 'u32[144,128]{1,0:T(1,128)}', space=vmem, size = 0x12000, scoped, tag = 'internal scratch']
  %s0 = inlined_call_operand.vmem [shape: f32[8,16], index: 0, kind: input, shape index: {}]
  %s1 = inlined_call_operand.vmem [shape: bf16[16,384], index: 1, kind: input, shape index: {}]
  %s2 = inlined_call_operand.vmem [shape: bf16[8,384], index: 2, kind: input, shape index: {}]
  %s3 = inlined_call_operand.vmem [shape: f32[8,1], index: 3, kind: output, shape index: {}]
  %s4 = sld [smem:[#allocation0]]
  $region90: #{_lambda_.15} parent=0
    _
  %s6 = ssub.s32 1, %s4
  %s7 = scalar_select 0, %s6, %s4
  $region1: #{_lambda_.15} parent=0
    #allocation2 [shape = 'u8[8192]{0}', space=vmem, size = 0x2000, scoped, tag = 'input window, operand 1']
    loop: start=0, step=1, limit=5
    $region2: #{_lambda_.15} parent=1 // loop_pre_header
      _
    $region3: #{_lambda_.15} parent=1 // loop_header
      %s9 = sphi 0, %s13
      %p10 = scmp.ge.s32.totalorder %s9, 5
      %s16 = sphi 0, %s28
      %s17 = sphi 0, %s24
      %s18 = sphi 0, %s16
      %s19 = sphi 0, %s17
      %s20 = sphi 0, %s18
      %s21 = sphi 0, %s19
      %s31 = sphi 0, %s33
      %s34 = sphi 0, %s31
      %s35 = sphi 0, %s34
      %s51 = sphi 0, %s35
      %s57 = sphi 0, %s59
      %s60 = sphi 0, %s57
      %s61 = sphi 0, %s60
      %s77 = sphi 0, %s61
      %s85 = sphi 0, %s87
      %s88 = sphi 0, %s85
      %s89 = sphi 0, %s88
      %s105 = sphi 0, %s89
      %s111 = sphi 0, %s113
      %s114 = sphi 0, %s111
      %s115 = sphi 0, %s114
      %s131 = sphi 0, %s115
    $region4: #{_lambda_.15} parent=1 // loop_header_branch
      %12 = sbr.rel (%p10) target = $region8
    $region5: #{_lambda_.15} parent=1 // loop_body
      %s14 = ssub.s32 %s9, 1
      %s15 = ssub.s32 %s9, 2
      %s22 = sadd.s32 1, %s17
      %p23 = scmp.ge.s32.totalorder %s22, 3
      %s24 = scalar_select %p23, 0, %s22
      %s25 = sadd.s32 1, %s16
      %s26 = scalar_select %p23, %s25, %s16
      %p27 = scmp.ge.s32.totalorder %s26, 1
      %s28 = scalar_select %p27, 0, %s26
      %s29 = ssub.s32 %s16, %s28
      %p30 = scmp.eq.s32.totalorder %s29, 0
      %s32 = sadd.s32 %s31, 1
      %s33 = scalar_select %p30, %s31, %s32
      %p36 = pneg %p30
      %p37 = scmp.eq.s32.totalorder %s9, 2
      %p38 = por %p36, %p37
      %p39 = scmp.ne.s32.totalorder %s31, %s34
      %p40 = scmp.eq.s32.totalorder %s9, 0
      %p41 = por %p39, %p40
      %p42 = scmp.ne.s32.totalorder %s31, %s34
      %p43 = scmp.eq.s32.totalorder %s14, 2
      %p44 = por %p42, %p43
      %p45 = scmp.ne.s32.totalorder %s34, %s35
      %p46 = scmp.eq.s32.totalorder %s14, 0
      %p47 = por %p45, %p46
      %p48 = scmp.ne.s32.totalorder %s34, %s35
      %p49 = scmp.eq.s32.totalorder %s15, 2
      %p50 = por %p48, %p49
      %p52 = scmp.ne.s32.totalorder %s35, %s51
      %p53 = scmp.eq.s32.totalorder %s15, 0
      %p54 = por %p52, %p53
      %s55 = ssub.s32 %s17, %s24
      %p56 = scmp.eq.s32.totalorder %s55, 0
      %s58 = sadd.s32 %s57, 1
      %s59 = scalar_select %p56, %s57, %s58
      %p62 = pneg %p56
      %p63 = scmp.eq.s32.totalorder %s9, 2
      %p64 = por %p62, %p63
      %p65 = scmp.ne.s32.totalorder %s57, %s60
      %p66 = scmp.eq.s32.totalorder %s9, 0
      %p67 = por %p65, %p66
      %p68 = scmp.ne.s32.totalorder %s57, %s60
      %p69 = scmp.eq.s32.totalorder %s14, 2
      %p70 = por %p68, %p69
      %p71 = scmp.ne.s32.totalorder %s60, %s61
      %p72 = scmp.eq.s32.totalorder %s14, 0
      %p73 = por %p71, %p72
      %p74 = scmp.ne.s32.totalorder %s60, %s61
      %p75 = scmp.eq.s32.totalorder %s15, 2
      %p76 = por %p74, %p75
      %p78 = scmp.ne.s32.totalorder %s61, %s77
      %p79 = scmp.eq.s32.totalorder %s15, 0
      %p80 = por %p78, %p79
      %s81 = ssub.s32 %s16, %s28
      %s82 = ssub.s32 %s17, %s24
      %s83 = sor.u32 %s81, %s82
      %p84 = scmp.eq.s32.totalorder %s83, 0
      %s86 = sadd.s32 %s85, 1
      %s87 = scalar_select %p84, %s85, %s86
      %p90 = pneg %p84
      %p91 = scmp.eq.s32.totalorder %s9, 2
      %p92 = por %p90, %p91
      %p93 = scmp.ne.s32.totalorder %s85, %s88
      %p94 = scmp.eq.s32.totalorder %s9, 0
      %p95 = por %p93, %p94
      %p96 = scmp.ne.s32.totalorder %s85, %s88
      %p97 = scmp.eq.s32.totalorder %s14, 2
      %p98 = por %p96, %p97
      %p99 = scmp.ne.s32.totalorder %s88, %s89
      %p100 = scmp.eq.s32.totalorder %s14, 0
      %p101 = por %p99, %p100
      %p102 = scmp.ne.s32.totalorder %s88, %s89
      %p103 = scmp.eq.s32.totalorder %s15, 2
      %p104 = por %p102, %p103
      %p106 = scmp.ne.s32.totalorder %s89, %s105
      %p107 = scmp.eq.s32.totalorder %s15, 0
      %p108 = por %p106, %p107
      %s109 = ssub.s32 %s16, %s28
      %p110 = scmp.eq.s32.totalorder %s109, 0
      %s112 = sadd.s32 %s111, 1
      %s113 = scalar_select %p110, %s111, %s112
      %p116 = pneg %p110
      %p117 = scmp.eq.s32.totalorder %s9, 2
      %p118 = por %p116, %p117
      %p119 = scmp.ne.s32.totalorder %s111, %s114
      %p120 = scmp.eq.s32.totalorder %s9, 0
      %p121 = por %p119, %p120
      %p122 = scmp.ne.s32.totalorder %s111, %s114
      %p123 = scmp.eq.s32.totalorder %s14, 2
      %p124 = por %p122, %p123
      %p125 = scmp.ne.s32.totalorder %s114, %s115
      %p126 = scmp.eq.s32.totalorder %s14, 0
      %p127 = por %p125, %p126
      %p128 = scmp.ne.s32.totalorder %s114, %s115
      %p129 = scmp.eq.s32.totalorder %s15, 2
      %p130 = por %p128, %p129
      %p132 = scmp.ne.s32.totalorder %s115, %s131
      %p133 = scmp.eq.s32.totalorder %s15, 0
      %p134 = por %p132, %p133
      %p135 = scmp.le.s32.totalorder 1, %s9
      %p136 = scmp.lt.s32.totalorder %s9, 4
      %p137 = pnand %p135, %p136
      %p138 = pneg %p137
      // Predicated region
      $region9: #{_lambda_.15} parent=5 // pred_check
        _
      $region10: #{_lambda_.15} parent=5 // pred_check_branch
        %140 = sbr.rel (%p137) target = $region12
      $region11: #{_lambda_.15} parent=5 // pred_region
        %s141 = ssub.s32 %s9, 1
        // Predicated region
        $region13: #{_lambda_.15} parent=11 // pred_check
          %p142 = pneg %p47
        $region14: #{_lambda_.15} parent=11 // pred_check_branch
          %144 = sbr.rel (%p142) target = $region16
        $region15: #{_lambda_.15} parent=11 // pred_region
          %p145 = scmp.lt.s32.totalorder %s18, 0
          %s146 = scalar_select %p145, %s18, 0
          %s147 = smul.addr %s146, 8
          %s148 = scalar_lea.vmem %s0, %s147
        $region16: #{_lambda_.15} parent=11 // pred_fallthru
          _
      $region12: #{_lambda_.15} parent=5 // pred_fallthru
        _
      %p149 = scmp.lt.s32.totalorder %s9, 3
      // Predicated region
      $region17: #{_lambda_.15} parent=5 // pred_check
        %p150 = pneg %p149
      $region18: #{_lambda_.15} parent=5 // pred_check_branch
        %152 = sbr.rel (%p150) target = $region20
      $region19: #{_lambda_.15} parent=5 // pred_region
        // Predicated region
        $region21: #{_lambda_.15} parent=19 // pred_check
          %p153 = pneg %p67
        $region22: #{_lambda_.15} parent=19 // pred_check_branch
          %155 = sbr.rel (%p153) target = $region24
        $region23: #{_lambda_.15} parent=19 // pred_region
          %s156 = sand.u32 %s57, 1
          %s157 = sand.u32 %s57, 1
          %s158 = smul.addr %s157, 8
          %s159 = scalar_lea.vmem [#allocation2], %s158
          %s160 = smul.addr %s17, 4
          %s161 = scalar_lea.vmem %s1, %s160
          // Predicated region
          $region25: #{_lambda_.15} parent=23 // pred_check
            _
          $region26: #{_lambda_.15} parent=23 // pred_check_branch
            %163 = sbr.rel (0) target = $region28
          $region27: #{_lambda_.15} parent=23 // pred_region
            // Predicated region
            $region29: #{_lambda_.15} parent=27 // pred_check
              _
            $region30: #{_lambda_.15} parent=27 // pred_check_branch
              %165 = sbr.rel target = $region32
            $region31: #{_lambda_.15} parent=27 // pred_region
              // Predicated region
              $region44: #{_lambda_.15} parent=31 // pred_check
                _
              $region45: #{_lambda_.15} parent=31 // pred_check_branch
                %183 = sbr.rel (0) target = $region47
              $region46: #{_lambda_.15} parent=31 // pred_region
                loop: start=0, step=1, limit=1
                $region48: #{_lambda_.15} parent=46 // loop_pre_header
                  _
                $region49: #{_lambda_.15} parent=46 // loop_header
                  %s185 = sphi 0, %s189
                  %p186 = scmp.ge.s32.totalorder %s185, 1
                  %s190 = sphi %s161, %s161
                  %s191 = sphi %s159, %s159
                $region50: #{_lambda_.15} parent=46 // loop_header_branch
                  %188 = sbr.rel (%p186) target = $region54
                $region51: #{_lambda_.15} parent=46 // loop_body
                  _
                $region52: #{_lambda_.15} parent=46 // loop_footer
                  %s189 = sadd.s32 1, %s185
                $region53: #{_lambda_.15} parent=46 // loop_footer_branch
                  %184 = sbr.rel target = $region49
                $region54: #{_lambda_.15} parent=46 // loop_exit
                  _
                %s193 = ssub.s32 16, 1
                loop: start=0, step=1, limit=1
                $region55: #{_lambda_.15} parent=46 // loop_pre_header
                  _
                $region56: #{_lambda_.15} parent=46 // loop_header
                  %s195 = sphi 0, %s199
                  %p196 = scmp.ge.s32.totalorder %s195, 1
                  %s200 = sphi %s161, %s161
                  %s201 = sphi %s159, %s159
                $region57: #{_lambda_.15} parent=46 // loop_header_branch
                  %198 = sbr.rel (%p196) target = $region61
                $region58: #{_lambda_.15} parent=46 // loop_body
                  %v202 = vld [vmem:[%s200] sm:%s193]
                  %203 = vst [vmem:[%s201] sm:%s193] %v202
                  %v204 = vld [vmem:[%s200 + $0xc] sm:%s193]
                  %205 = vst [vmem:[%s201 + $0x4] sm:%s193] %v204
                $region59: #{_lambda_.15} parent=46 // loop_footer
                  %s199 = sadd.s32 1, %s195
                $region60: #{_lambda_.15} parent=46 // loop_footer_branch
                  %194 = sbr.rel target = $region56
                $region61: #{_lambda_.15} parent=46 // loop_exit
                  _
              $region47: #{_lambda_.15} parent=31 // pred_fallthru
                _
            $region32: #{_lambda_.15} parent=27 // pred_fallthru
              _
            // Predicated region
            $region33: #{_lambda_.15} parent=27 // pred_check
              _
            $region34: #{_lambda_.15} parent=27 // pred_check_branch
              %167 = sbr.rel (0) target = $region36
            $region35: #{_lambda_.15} parent=27 // pred_region
              %s169 = ssub.s32 16, 1
              loop: start=0, step=1, limit=1
              $region37: #{_lambda_.15} parent=35 // loop_pre_header
                _
              $region38: #{_lambda_.15} parent=35 // loop_header
                %s171 = sphi 0, %s175
                %p172 = scmp.ge.s32.totalorder %s171, 1
                %s176 = sphi %s161, %s161
                %s177 = sphi %s159, %s159
              $region39: #{_lambda_.15} parent=35 // loop_header_branch
                %174 = sbr.rel (%p172) target = $region43
              $region40: #{_lambda_.15} parent=35 // loop_body
                %v178 = vld [vmem:[%s176] sm:%s169]
                %179 = vst [vmem:[%s177] sm:%s169] %v178
                %v180 = vld [vmem:[%s176 + $0xc] sm:%s169]
                %181 = vst [vmem:[%s177 + $0x4] sm:%s169] %v180
              $region41: #{_lambda_.15} parent=35 // loop_footer
                %s175 = sadd.s32 1, %s171
              $region42: #{_lambda_.15} parent=35 // loop_footer_branch
                %170 = sbr.rel target = $region38
              $region43: #{_lambda_.15} parent=35 // loop_exit
                _
            $region36: #{_lambda_.15} parent=27 // pred_fallthru
              _
          $region28: #{_lambda_.15} parent=23 // pred_fallthru
            _
          %206 = vnop
        $region24: #{_lambda_.15} parent=19 // pred_fallthru
          _
        // Predicated region
        $region62: #{_lambda_.15} parent=19 // pred_check
          %p207 = pneg %p95
        $region63: #{_lambda_.15} parent=19 // pred_check_branch
          %209 = sbr.rel (%p207) target = $region65
        $region64: #{_lambda_.15} parent=19 // pred_region
          %p210 = scmp.lt.s32.totalorder %s16, 0
          %s211 = scalar_select %p210, %s16, 0
          %p212 = scmp.lt.s32.totalorder %s17, 2
          %s213 = scalar_select %p212, %s17, 2
          %s214 = smul.addr %s211, 3
          %s215 = sadd.s32 %s213, %s214
          %s216 = smul.addr %s215, 4
          %s217 = scalar_lea.vmem %s2, %s216
        $region65: #{_lambda_.15} parent=19 // pred_fallthru
          _
      $region20: #{_lambda_.15} parent=5 // pred_fallthru
        _
      %p218 = scmp.le.s32.totalorder 1, %s9
      %p219 = scmp.lt.s32.totalorder %s9, 4
      %p220 = pnand %p218, %p219
      %p221 = pneg %p220
      // Predicated region
      $region66: #{_lambda_.15} parent=5 // pred_check
        _
      $region67: #{_lambda_.15} parent=5 // pred_check_branch
        %223 = sbr.rel (%p220) target = $region69
      $region68: #{_lambda_.15} parent=5 // pred_region
        %s224 = ssub.s32 %s9, 1
        %s225 = sand.u32 %s60, 1
        %s226 = sand.u32 %s60, 1
        %s227 = smul.addr %s226, 8
        %s228 = scalar_lea.vmem [#allocation2], %s227
        // Predicated region
        $region70: #{_lambda_.15} parent=68 // pred_check
          %p229 = pneg %p73
        $region71: #{_lambda_.15} parent=68 // pred_check_branch
          %231 = sbr.rel (%p229) target = $region73
        $region72: #{_lambda_.15} parent=68 // pred_region
          _
        $region73: #{_lambda_.15} parent=68 // pred_fallthru
          _
        %p232 = scmp.lt.s32.totalorder %s18, 0
        %s233 = scalar_select %p232, %s18, 0
        %s234 = smul.addr %s233, 8
        %s235 = scalar_lea.vmem %s0, %s234
        %p236 = pneg %p47
        %p237 = pneg %p44
        %s238 = sand.u32 %s60, 1
        %s239 = sand.u32 %s60, 1
        %s240 = smul.addr %s239, 8
        %s241 = scalar_lea.vmem [#allocation2], %s240
        %p242 = pneg %p73
        %p243 = pneg %p70
        %p244 = scmp.lt.s32.totalorder %s18, 0
        %s245 = scalar_select %p244, %s18, 0
        %p246 = scmp.lt.s32.totalorder %s19, 2
        %s247 = scalar_select %p246, %s19, 2
        %s248 = smul.addr %s245, 3
        %s249 = sadd.s32 %s247, %s248
        %s250 = smul.addr %s249, 4
        %s251 = scalar_lea.vmem %s2, %s250
        %p252 = pneg %p101
        %p253 = pneg %p98
        %p254 = pneg %p127
        %p255 = pneg %p124
        %p256 = scmp.lt.s32.totalorder %s18, 0
        %s257 = scalar_select %p256, %s18, 0
        %s258 = smul.addr %s257, 8
        %s259 = scalar_lea.vmem %s3, %s258
        %p260 = scmp.lt.s32.totalorder %s18, 0
        %s261 = scalar_select %p260, %s18, 0
        %s262 = smul.addr %s261, 8
        %s263 = scalar_lea.vmem %s0, %s262
        %p264 = scmp.lt.s32.totalorder %s18, 0
        %s265 = scalar_select %p264, %s18, 0
        %p266 = scmp.lt.s32.totalorder %s19, 2
        %s267 = scalar_select %p266, %s19, 2
        %s268 = smul.addr %s265, 3
        %s269 = sadd.s32 %s267, %s268
        %s270 = smul.addr %s269, 4
        %s271 = scalar_lea.vmem %s2, %s270
        %p272 = scmp.lt.s32.totalorder %s18, 0
        %s273 = scalar_select %p272, %s18, 0
        %s274 = smul.addr %s273, 8
        %s275 = scalar_lea.vmem %s3, %s274
        %p276 = scmp.eq.s32.totalorder %s19, 0
        // Predicated region
        $region74: #{_lambda_.15} parent=68 // pred_check
          %p277 = pneg %p276
        $region75: #{_lambda_.15} parent=68 // pred_check_branch
          %279 = sbr.rel (%p277) target = $region77
        $region76: #{_lambda_.15} parent=68 // pred_region
          %vm280 = vcmask 7168
          %281 = vst.msk [vmem:[%s275] sm:$0xff] %vm280, 0.0
        $region77: #{_lambda_.15} parent=68 // pred_fallthru
          _
        %v282 = vld [vmem:[%s263] sm:$0xff]
        %v283 = vld [vmem:[%s228] sm:$0xf]
        %v284 = vld [vmem:[%s228 + $0x4] sm:$0xf]
        %v285 = vunpack.c.l.bf16 %v283
        %v286 = vunpack.c.l.bf16 %v284
        %vm287 = vcmask 130048
        %v289 = vsel %vm287, %v282, 0
        %291 = vmatprep.subr.mxu0 0.0
        %292 = vmatpush1.msra.mxu0 0.0
        %293 = vmatprep.subr.mxu0 0.0
        %294 = vmatpush1.msra.mxu0 0.0
        %295 = vmatprep.subr.mxu0 0.0
        %296 = vmatpush1.msra.mxu0 0.0
        %297 = vmatprep.subr.mxu0 0.0
        %298 = vmatpush1.msra.mxu0 0.0
        %299 = vmatprep.subr.mxu0 0.0
        %300 = vmatpush1.msra.mxu0 0.0
        %301 = vmatprep.subr.mxu0 0.0
        %302 = vmatpush1.msra.mxu0 0.0
        %303 = vmatprep.subr.mxu0 0.0
        %304 = vmatpush1.msra.mxu0 0.0
        %305 = vmatprep.subr.mxu0 0.0
        %306 = vmatpush1.msra.mxu0 0.0
        %307 = vmatprep.subr.mxu0 0.0
        %308 = vmatpush1.msra.mxu0 0.0
        %309 = vmatprep.subr.mxu0 0.0
        %310 = vmatpush1.msra.mxu0 0.0
        %311 = vmatprep.subr.mxu0 0.0
        %312 = vmatpush1.msra.mxu0 0.0
        %313 = vmatprep.subr.mxu0 0.0
        %314 = vmatpush1.msra.mxu0 0.0
        %315 = vmatprep.subr.mxu0 0.0
        %316 = vmatpush1.msra.mxu0 0.0
        %317 = vmatprep.subr.mxu0 0.0
        %318 = vmatpush1.msra.mxu0 0.0
        %319 = vmatprep.subr.mxu0 0.0
        %320 = vmatpush1.msra.mxu0 %v286
        %321 = vmatprep.subr.mxu0 0.0
        %322 = vmatpush1.msra.mxu0 %v285
        %323 = vmatprep.subr.mxu0 0.0
        %324 = vmatpush2.msra.mxu0 0.0
        %325 = vmatprep.subr.mxu0 0.0
        %326 = vmatpush2.msra.mxu0 0.0
        %327 = vmatprep.subr.mxu0 0.0
        %328 = vmatpush2.msra.mxu0 0.0
        %329 = vmatprep.subr.mxu0 0.0
        %330 = vmatpush2.msra.mxu0 0.0
        %331 = vmatprep.subr.mxu0 0.0
        %332 = vmatpush2.msra.mxu0 0.0
        %333 = vmatprep.subr.mxu0 0.0
        %334 = vmatpush2.msra.mxu0 0.0
        %335 = vmatprep.subr.mxu0 0.0
        %336 = vmatpush2.msra.mxu0 0.0
        %337 = vmatprep.subr.mxu0 0.0
        %338 = vmatpush2.msra.mxu0 0.0
        %339 = vmatprep.subr.mxu0 0.0
        %340 = vmatpush2.msra.mxu0 0.0
        %341 = vmatprep.subr.mxu0 0.0
        %342 = vmatpush2.msra.mxu0 0.0
        %343 = vmatprep.subr.mxu0 0.0
        %344 = vmatpush2.msra.mxu0 0.0
        %345 = vmatprep.subr.mxu0 0.0
        %346 = vmatpush2.msra.mxu0 0.0
        %347 = vmatprep.subr.mxu0 0.0
        %348 = vmatpush2.msra.mxu0 0.0
        %349 = vmatprep.subr.mxu0 0.0
        %350 = vmatpush2.msra.mxu0 0.0
        %351 = vmatprep.subr.mxu0 0.0
        %352 = vmatpush2.msra.mxu0 0.0
        %353 = vmatprep.subr.mxu0 0.0
        %354 = vmatpush2.msra.mxu0 0.0
        %355 = vmatprep.mubr.f32.mxu0 0.0
        %356 = vmatmul.mubr.f32.gmra.mxu0 %v289
        %v357 = vpop.f32.mrf.mxu0
        %v358 = vadd.f32 0.0, %v357
        %v359 = vpop.f32.mrf.mxu0
        %360 = vdwg.mxu0
        %v361 = vld [vmem:[%s275] sm:$0xff]
        %v362 = vld [vmem:[%s271] sm:$0xf]
        %v363 = vunpack.c.l.bf16 %v362
        %v364 = vmax.f32 %v358, 1e-30
        %v365 = vlog2.pop %v364
        %v366 = vmul.f32 %v365, 0.6931472
        %v367 = vmul.f32 %v363, %v366
        %368 = vadd.xlane.f32.xlu0 %v367
        %v369 = vpop.xlane.xlu0 %368
        %v370 = vsub.f32 %v361, %v369
        %vm371 = vcmask 7168
        %372 = vst.msk [vmem:[%s275] sm:$0xff] %vm371, %v370
        %p373 = scmp.lt.s32.totalorder %s18, 0
        %s374 = scalar_select %p373, %s18, 0
        %s375 = smul.addr %s374, 8
        %s376 = scalar_lea.vmem %s3, %s375
        // Predicated region
        $region78: #{_lambda_.15} parent=68 // pred_check
          %p377 = pneg %p124
        $region79: #{_lambda_.15} parent=68 // pred_check_branch
          %379 = sbr.rel (%p377) target = $region81
        $region80: #{_lambda_.15} parent=68 // pred_region
          _
        $region81: #{_lambda_.15} parent=68 // pred_fallthru
          _
        // Predicated region
        $region82: #{_lambda_.15} parent=68 // pred_check
          %p380 = pneg %p124
        $region83: #{_lambda_.15} parent=68 // pred_check_branch
          %382 = sbr.rel (%p380) target = $region85
        $region84: #{_lambda_.15} parent=68 // pred_region
          %p383 = scmp.lt.s32.totalorder %s18, 0
          %s384 = scalar_select %p383, %s18, 0
          %s385 = smul.addr %s384, 8
          %s386 = scalar_lea.vmem %s3, %s385
        $region85: #{_lambda_.15} parent=68 // pred_fallthru
          _
      $region69: #{_lambda_.15} parent=5 // pred_fallthru
        _
      %p387 = scmp.le.s32.totalorder 2, %s9
      // Predicated region
      $region86: #{_lambda_.15} parent=5 // pred_check
        %p388 = pneg %p387
      $region87: #{_lambda_.15} parent=5 // pred_check_branch
        %390 = sbr.rel (%p388) target = $region89
      $region88: #{_lambda_.15} parent=5 // pred_region
        %s391 = ssub.s32 %s9, 2
      $region89: #{_lambda_.15} parent=5 // pred_fallthru
        _
    $region6: #{_lambda_.15} parent=1 // loop_footer
      %s13 = sadd.s32 1, %s9
    $region7: #{_lambda_.15} parent=1 // loop_footer_branch
      %8 = sbr.rel target = $region3
    $region8: #{_lambda_.15} parent=1 // loop_exit
      _

</llo_original>
